<compile_context>
chip_gen: v5e
topology: v5e:2x2
jax: 0.10.0
libtpu: 0.0.40
codegen_flags: <defaults>
</compile_context>

<pallas_src>
import functools

import jax
import jax.numpy as jnp
from jax import lax
from jax.experimental import pallas as pl
from jax.experimental.pallas import tpu as pltpu

F32 = jnp.float32
NEG_INF = -1e30
BN_EPS = 1e-5
LEAKY_SLOPE = 0.2


# ----------------------------------------------------------------------------
# small in-kernel helpers
# ----------------------------------------------------------------------------
def _dot(a, b):
    return jnp.dot(a, b, preferred_element_type=jnp.float32)


def _leaky_relu(x):
    # single vmax + vmul instead of compare + select
    return jnp.maximum(x, LEAKY_SLOPE * x)


def _bn_relu(x, g, b):
    # BatchNorm1d, training-mode (biased) batch statistics over the row axis.
    mean = jnp.mean(x, axis=0, keepdims=True)
    var = jnp.mean((x - mean) ** 2, axis=0, keepdims=True)
    return jnp.maximum((x - mean) * lax.rsqrt(var + BN_EPS) * g + b, 0.0)


# ----------------------------------------------------------------------------
# single fused kernel: trunk + both EGAT branches + decoder tails
# ----------------------------------------------------------------------------
def _fused_kernel(
    # graph data
    x2_ref, ea_ref, tgt_row_ref, both_col_ref,
    # trunk weights
    nw_ref, nb_ref, ew_ref, eb_ref,
    c1w1a_ref, c1w1b_ref, c1b1_ref, c1w2_ref, c1b2_ref, bn1g_ref, bn1b_ref,
    c2w1a_ref, c2w1b_ref, c2b1_ref, c2w2_ref, c2b2_ref, bn12g_ref, bn12b_ref,
    # per-branch (cls/reg) EGAT weights, stacked on a leading dim of size 2
    linxw_ref, linxb_ref, we_ref, watti_ref, wattj_ref, watte_ref,
    wlinx_ref, wline_ref, blin_ref, bng_ref, bnb_ref,
    # shared decoder tail
    embw_ref, embb_ref, decw_ref, decb_ref,
    # constant layout matrices for the per-head [E, H*C] message layout
    tile_ref, expand_ref,
    # packed output slab
    out_ref):
    N = x2_ref.shape[0]
    E = ea_ref.shape[0]
    slab_w = out_ref.shape[1]
    oc = decw_ref.shape[1]
    HC = tile_ref.shape[1]

    # ---- graph one-hots / masks rebuilt in-kernel from int32 indices --------
    # (no O(N*E) f32 / 128x lane-padded DMAs)
    node_iota_ne = lax.broadcasted_iota(jnp.int32, (N, E), 0)
    tgt_oh_t = (node_iota_ne == tgt_row_ref[...]).astype(F32)          # [N, E]
    deg = jnp.sum(tgt_oh_t, axis=1, keepdims=True)                     # [N, 1]

    node_iota_2e = lax.broadcasted_iota(jnp.int32, (2 * E, N), 1)
    gather_oh = (node_iota_2e == both_col_ref[...]).astype(F32)        # [2E, N]
    tgt_oh = gather_oh[:E]                                             # [E, N]

    # additive -inf scatter-max mask [N, E, 1], built ONCE and reused 6x.
    # (built per node row from the [E,1] int target column; for large N tile
    #  this / build from a 3-D iota instead of a static unroll)
    tgt_col = both_col_ref[...][:E]                                    # [E, 1] int32
    neg_mask3 = jnp.concatenate(
        [jnp.where(tgt_col == n, 0.0, NEG_INF)[None] for n in range(N)],
        axis=0)                                                        # [N, E, 1]

    def seg_max(msg):
        # msg: [E, F] -> [N, F] scatter-max by target node; empty segments -> 0
        mx = jnp.max(msg[None, :, :] + neg_mask3, axis=1)
        return jnp.where(deg > 0.5, mx, 0.0)

    def gather_both(xnode):
        # one MXU call gathers both endpoints: rows [0:E]=x_i(target), [E:2E]=x_j(source)
        both = _dot(gather_oh, xnode)                                  # [2E, F]
        return both[:E], both[E:]

    # ------------------------------- trunk ----------------------------------
    node_emb = jnp.maximum(_dot(x2_ref[...], nw_ref[...]) + nb_ref[...], 0.0)   # [N, 16]
    edge_emb = jnp.maximum(_dot(ea_ref[...], ew_ref[...]) + eb_ref[...], 0.0)   # [E, 64]

    def edgeconv(xnode, w1a, w1b, b1, w2, b2):
        # MLP(cat([x_i, x_j - x_i])) as split-weight partial dots
        xi, xj = gather_both(xnode)
        h = jnp.maximum(_dot(xi, w1a) + _dot(xj - xi, w1b) + b1, 0.0)
        return seg_max(_dot(h, w2) + b2)

    conv1 = _bn_relu(
        edgeconv(node_emb, c1w1a_ref[...], c1w1b_ref[...], c1b1_ref[...],
                 c1w2_ref[...], c1b2_ref[...]),
        bn1g_ref[...], bn1b_ref[...])                                   # [N, 64]
    xnode2 = _bn_relu(
        edgeconv(conv1, c2w1a_ref[...], c2w1b_ref[...], c2b1_ref[...],
                 c2w2_ref[...], c2b2_ref[...]),
        bn12g_ref[...], bn12b_ref[...])                                 # [N, 128]

    tile_m = tile_ref[...]          # [C, H*C]  replicate channels per head
    expand_m = expand_ref[...]      # [H, H*C]  broadcast head scalar over its C cols

    # ----------------------------- EGAT branches ----------------------------
    outs = []
    for b in range(2):              # b=0: cls (conv3), b=1: reg (conv4)
        e = _leaky_relu(_dot(edge_emb, we_ref[b]))                       # [E, 128]
        xlin = _dot(xnode2, linxw_ref[b]) + linxb_ref[b]                 # [N, C]
        xi, xj = gather_both(xlin)                                       # [E, C] x2

        # attention logits: cat([x_i, x_j, e]) @ Watt as split partial dots
        alpha = _leaky_relu(_dot(xi, watti_ref[b]) + _dot(xj, wattj_ref[b])
                            + _dot(e, watte_ref[b]))                    # [E, H]

        # segment softmax over edges grouped by target node (per head);
        # the segment sums run on the MXU via the one-hot matmuls.
        alpha = jnp.exp(alpha - _dot(tgt_oh, seg_max(alpha)))           # [E, H]
        denom = _dot(tgt_oh, _dot(tgt_oh_t, alpha)) + 1e-16             # [E, H]
        alpha = alpha / denom

        # per-edge message lin(cat([x_j, e])) scaled per head -> [E, H*C]
        lin_out = _dot(xj, wlinx_ref[b]) + _dot(e, wline_ref[b]) + blin_ref[b]
        msg = _dot(lin_out, tile_m) * _dot(alpha, expand_m)             # [E, H*C]

        conv = seg_max(msg) + _dot(xlin, tile_m)                        # max-agg + root add
        conv = _bn_relu(conv, bng_ref[b], bnb_ref[b])                   # [N, H*C]

        emb = jnp.maximum(_dot(conv, embw_ref[...]) + embb_ref[...], 0.0)     # [N, 64]
        dec = jax.nn.sigmoid(_dot(emb, decw_ref[...]) + decb_ref[...])        # [N, oc]
        outs.append((dec, conv))

    # ---------------- lane-dense packed output slab (one full-width store) --
    def place(x, off):
        # x [N, c] -> x placed at columns [off, off+c) of a [N, slab_w] slab
        c = x.shape[1]
        cols = lax.broadcasted_iota(jnp.int32, (c, slab_w), 1)
        rows = lax.broadcasted_iota(jnp.int32, (c, slab_w), 0)
        return _dot(x, (cols == rows + off).astype(F32))

    (cls_dec, cls_conv), (reg_dec, reg_conv) = outs
    out_ref[...] = (place(cls_dec, 0) + place(reg_dec, oc)
                    + place(cls_conv, 2 * oc) + place(reg_conv, 2 * oc + HC))


# ----------------------------------------------------------------------------
# BlockSpec helper (everything is a single full-array block)
# ----------------------------------------------------------------------------
def _full_spec(shape):
    nd = len(shape)
    return pl.BlockSpec(tuple(shape), lambda *_, nd=nd: (0,) * nd)


# ----------------------------------------------------------------------------
# deterministic parameter initialization (same shapes as the PyTorch module)
# ----------------------------------------------------------------------------
def _w(key, shape, scale=0.2):
    return (scale * jax.random.normal(key, shape, dtype=F32)).astype(F32)


def init_params(key, in_node, in_edge, out_channels, num_heads, out_conv):
    ks = iter(jax.random.split(key, 40))
    C = out_conv
    p = {}
    # MLPs
    p["mlp_node_w"] = _w(next(ks), (in_node, 16));      p["mlp_node_b"] = _w(next(ks), (1, 16))
    p["mlp_edge_w"] = _w(next(ks), (in_edge, 64));      p["mlp_edge_b"] = _w(next(ks), (1, 64))
    p["mlp_emb_w"] = _w(next(ks), (C * num_heads, 64)); p["mlp_emb_b"] = _w(next(ks), (1, 64))
    p["mlp_dec_w"] = _w(next(ks), (64, out_channels));  p["mlp_dec_b"] = _w(next(ks), (1, out_channels))
    # EdgeConv 1: 16 -> 64
    p["c1_w1"] = _w(next(ks), (32, 64));   p["c1_b1"] = _w(next(ks), (1, 64))
    p["c1_w2"] = _w(next(ks), (64, 64));   p["c1_b2"] = _w(next(ks), (1, 64))
    # EdgeConv 2: 64 -> 128
    p["c2_w1"] = _w(next(ks), (128, 128)); p["c2_b1"] = _w(next(ks), (1, 128))
    p["c2_w2"] = _w(next(ks), (128, 128)); p["c2_b2"] = _w(next(ks), (1, 128))
    # EGATConvs 3 & 4: in=128, out=C, edge_dim=64, edge_attr_emb_dim=128, heads=H
    for tag in ("c3", "c4"):
        p[f"{tag}_linx_w"] = _w(next(ks), (128, C)); p[f"{tag}_linx_b"] = _w(next(ks), (1, C))
        p[f"{tag}_we"] = _w(next(ks), (64, 128))                         # no bias
        p[f"{tag}_watt"] = _w(next(ks), (2 * C + 128, num_heads))        # no bias
        p[f"{tag}_wlin"] = _w(next(ks), (C + 128, C)); p[f"{tag}_blin"] = _w(next(ks), (1, C))
    # BatchNorms (affine defaults: gamma=1, beta=0)
    p["bn1_g"] = jnp.ones((1, 64), F32);             p["bn1_b"] = jnp.zeros((1, 64), F32)
    p["bn12_g"] = jnp.ones((1, 128), F32);           p["bn12_b"] = jnp.zeros((1, 128), F32)
    p["bn2_g"] = jnp.ones((1, C * num_heads), F32);  p["bn2_b"] = jnp.zeros((1, C * num_heads), F32)
    p["bn22_g"] = jnp.ones((1, C * num_heads), F32); p["bn22_b"] = jnp.zeros((1, C * num_heads), F32)
    return p


# ----------------------------------------------------------------------------
# full forward pass (one pallas_call)
# ----------------------------------------------------------------------------
@functools.partial(jax.jit, static_argnames=("num_heads",))
def traffic_representation_net(params, x, edge_index, edge_attr, *, num_heads):
    p = params
    N = x.shape[0]
    E = edge_index.shape[1]
    C = p["c3_linx_w"].shape[1]
    HC = num_heads * C
    oc = p["mlp_dec_w"].shape[1]
    slab_w = max(128, ((2 * oc + 2 * HC + 127) // 128) * 128)

    # tiny int32 index inputs; one-hots/masks are rebuilt in-kernel
    src = edge_index[0].astype(jnp.int32)      # x_j source nodes
    tgt = edge_index[1].astype(jnp.int32)      # x_i target nodes (aggregation index)
    tgt_row = tgt[None, :]                                    # [1, E]
    both_col = jnp.concatenate([tgt, src])[:, None]           # [2E, 1] (tgt rows, then src)

    # input slicing / scaling (matches the PyTorch forward)
    x2 = x[:, :2] * 0.01
    ea = jnp.stack([edge_attr[:, 5] * 0.01, edge_attr[:, 6], edge_attr[:, 7]], axis=1)

    # split EdgeConv W1 row-wise (cat([xi, xj-xi]) -> partial dots)
    c1_w1a, c1_w1b = p["c1_w1"][:16], p["c1_w1"][16:]
    c2_w1a, c2_w1b = p["c2_w1"][:64], p["c2_w1"][64:]

    def stack(name):
        return jnp.stack([p[f"c3_{name}"], p[f"c4_{name}"]], axis=0)

    watt = stack("watt")
    wlin = stack("wlin")

    # constant layout matrices: tile C-dim across heads / expand head scalars
    tile_m = jnp.tile(jnp.eye(C, dtype=F32), (1, num_heads))            # [C, H*C]
    expand_m = jnp.repeat(jnp.eye(num_heads, dtype=F32), C, axis=1)     # [H, H*C]

    args = (
        x2, ea, tgt_row, both_col,
        p["mlp_node_w"], p["mlp_node_b"], p["mlp_edge_w"], p["mlp_edge_b"],
        c1_w1a, c1_w1b, p["c1_b1"], p["c1_w2"], p["c1_b2"], p["bn1_g"], p["bn1_b"],
        c2_w1a, c2_w1b, p["c2_b1"], p["c2_w2"], p["c2_b2"], p["bn12_g"], p["bn12_b"],
        stack("linx_w"), stack("linx_b"), stack("we"),
        watt[:, :C], watt[:, C:2 * C], watt[:, 2 * C:],
        wlin[:, :C], wlin[:, C:], stack("blin"),
        jnp.stack([p["bn2_g"], p["bn22_g"]], axis=0),
        jnp.stack([p["bn2_b"], p["bn22_b"]], axis=0),
        p["mlp_emb_w"], p["mlp_emb_b"], p["mlp_dec_w"], p["mlp_dec_b"],
        tile_m, expand_m,
    )

    # NOTE: on v7x the two EGAT branches could instead be a grid=(2,) axis with
    # pltpu.CORE_PARALLEL to use both TensorCores; on v5e/v6e (single TC) the
    # fully-fused single invocation below is the faster structure.
    slab = pl.pallas_call(
        _fused_kernel,
        grid=(1,),
        in_specs=[_full_spec(a.shape) for a in args],
        out_specs=_full_spec((N, slab_w)),
        out_shape=jax.ShapeDtypeStruct((N, slab_w), F32),
        compiler_params=pltpu.CompilerParams(dimension_semantics=("arbitrary",)),
    )(*args)

    cls_out = slab[:, :oc]
    reg_out = slab[:, oc:2 * oc]
    conv_cls_out = slab[:, 2 * oc:2 * oc + HC]
    conv_reg_out = slab[:, 2 * oc + HC:2 * oc + 2 * HC]
    return cls_out, reg_out, conv_cls_out, conv_reg_out


# ----------------------------------------------------------------------------
# driver
# ----------------------------------------------------------------------------
if __name__ == "__main__":
    IN_NODE, IN_EDGE = 2, 3          # forward slices x -> 2 cols, edge_attr -> 3 cols
    OUT_CHANNELS, NUM_HEADS, OUT_CONV = 4, 3, 16
    N_NODES = 8

    key = jax.random.PRNGKey(0)
    k_x, k_e, k_p = jax.random.split(key, 3)

    # ring graph: every node has 2 incoming and 2 outgoing edges
    src, tgt = [], []
    for i in range(N_NODES):
        src += [i, i]
        tgt += [(i + 1) % N_NODES, (i - 1) % N_NODES]
    edge_index = jnp.array([src, tgt], dtype=jnp.int32)        # [2, E], E = 16
    n_edges = edge_index.shape[1]

    x = jax.random.normal(k_x, (N_NODES, 4), dtype=F32)          # node features
    edge_attr = jax.random.normal(k_e, (n_edges, 8), dtype=F32)  # edge features

    params = init_params(k_p, IN_NODE, IN_EDGE, OUT_CHANNELS, NUM_HEADS, OUT_CONV)

    cls_out, reg_out, conv_cls_out, conv_reg_out = traffic_representation_net(
        params, x, edge_index, edge_attr, num_heads=NUM_HEADS)

    jax.block_until_ready((cls_out, reg_out, conv_cls_out, conv_reg_out))
    assert cls_out.shape == (N_NODES, OUT_CHANNELS)
    assert reg_out.shape == (N_NODES, OUT_CHANNELS)
    assert conv_cls_out.shape == (N_NODES, NUM_HEADS * OUT_CONV)
    assert conv_reg_out.shape == (N_NODES, NUM_HEADS * OUT_CONV)
    print("KERNEL_OK")
</pallas_src>

<mosaic_0001>
module attributes {stable_mosaic.version = 11 : i64} {
  func.func @_fused_kernel(%arg0: i32, %arg1: memref<8x2xf32, #tpu.memory_space<vmem>>, %arg2: memref<16x3xf32, #tpu.memory_space<vmem>>, %arg3: memref<1x16xi32, #tpu.memory_space<vmem>>, %arg4: memref<32x1xi32, #tpu.memory_space<vmem>>, %arg5: memref<2x16xf32, #tpu.memory_space<vmem>>, %arg6: memref<1x16xf32, #tpu.memory_space<vmem>>, %arg7: memref<3x64xf32, #tpu.memory_space<vmem>>, %arg8: memref<1x64xf32, #tpu.memory_space<vmem>>, %arg9: memref<16x64xf32, #tpu.memory_space<vmem>>, %arg10: memref<16x64xf32, #tpu.memory_space<vmem>>, %arg11: memref<1x64xf32, #tpu.memory_space<vmem>>, %arg12: memref<64x64xf32, #tpu.memory_space<vmem>>, %arg13: memref<1x64xf32, #tpu.memory_space<vmem>>, %arg14: memref<1x64xf32, #tpu.memory_space<vmem>>, %arg15: memref<1x64xf32, #tpu.memory_space<vmem>>, %arg16: memref<64x128xf32, #tpu.memory_space<vmem>>, %arg17: memref<64x128xf32, #tpu.memory_space<vmem>>, %arg18: memref<1x128xf32, #tpu.memory_space<vmem>>, %arg19: memref<128x128xf32, #tpu.memory_space<vmem>>, %arg20: memref<1x128xf32, #tpu.memory_space<vmem>>, %arg21: memref<1x128xf32, #tpu.memory_space<vmem>>, %arg22: memref<1x128xf32, #tpu.memory_space<vmem>>, %arg23: memref<2x128x16xf32, #tpu.memory_space<vmem>>, %arg24: memref<2x1x16xf32, #tpu.memory_space<vmem>>, %arg25: memref<2x64x128xf32, #tpu.memory_space<vmem>>, %arg26: memref<2x16x3xf32, #tpu.memory_space<vmem>>, %arg27: memref<2x16x3xf32, #tpu.memory_space<vmem>>, %arg28: memref<2x128x3xf32, #tpu.memory_space<vmem>>, %arg29: memref<2x16x16xf32, #tpu.memory_space<vmem>>, %arg30: memref<2x128x16xf32, #tpu.memory_space<vmem>>, %arg31: memref<2x1x16xf32, #tpu.memory_space<vmem>>, %arg32: memref<2x1x48xf32, #tpu.memory_space<vmem>>, %arg33: memref<2x1x48xf32, #tpu.memory_space<vmem>>, %arg34: memref<48x64xf32, #tpu.memory_space<vmem>>, %arg35: memref<1x64xf32, #tpu.memory_space<vmem>>, %arg36: memref<64x4xf32, #tpu.memory_space<vmem>>, %arg37: memref<1x4xf32, #tpu.memory_space<vmem>>, %arg38: memref<16x48xf32, #tpu.memory_space<vmem>>, %arg39: memref<3x48xf32, #tpu.memory_space<vmem>>, %arg40: memref<8x128xf32, #tpu.memory_space<vmem>>) attributes {dimension_semantics = [#tpu.dimension_semantics<arbitrary>], iteration_bounds = array<i64: 1>, scalar_prefetch = 0 : i64, scratch_operands = 0 : i64, tpu.core_type = #tpu.core_type<tc>, window_params = [{pipeline_mode = #tpu.pipeline_mode<synchronous>, transform_indices = @transform_0, window_bounds = array<i64: 8, 2>}, {pipeline_mode = #tpu.pipeline_mode<synchronous>, transform_indices = @transform_1, window_bounds = array<i64: 16, 3>}, {pipeline_mode = #tpu.pipeline_mode<synchronous>, transform_indices = @transform_2, window_bounds = array<i64: 1, 16>}, {pipeline_mode = #tpu.pipeline_mode<synchronous>, transform_indices = @transform_3, window_bounds = array<i64: 32, 1>}, {pipeline_mode = #tpu.pipeline_mode<synchronous>, transform_indices = @transform_4, window_bounds = array<i64: 2, 16>}, {pipeline_mode = #tpu.pipeline_mode<synchronous>, transform_indices = @transform_5, window_bounds = array<i64: 1, 16>}, {pipeline_mode = #tpu.pipeline_mode<synchronous>, transform_indices = @transform_6, window_bounds = array<i64: 3, 64>}, {pipeline_mode = #tpu.pipeline_mode<synchronous>, transform_indices = @transform_7, window_bounds = array<i64: 1, 64>}, {pipeline_mode = #tpu.pipeline_mode<synchronous>, transform_indices = @transform_8, window_bounds = array<i64: 16, 64>}, {pipeline_mode = #tpu.pipeline_mode<synchronous>, transform_indices = @transform_9, window_bounds = array<i64: 16, 64>}, {pipeline_mode = #tpu.pipeline_mode<synchronous>, transform_indices = @transform_10, window_bounds = array<i64: 1, 64>}, {pipeline_mode = #tpu.pipeline_mode<synchronous>, transform_indices = @transform_11, window_bounds = array<i64: 64, 64>}, {pipeline_mode = #tpu.pipeline_mode<synchronous>, transform_indices = @transform_12, window_bounds = array<i64: 1, 64>}, {pipeline_mode = #tpu.pipeline_mode<synchronous>, transform_indices = @transform_13, window_bounds = array<i64: 1, 64>}, {pipeline_mode = #tpu.pipeline_mode<synchronous>, transform_indices = @transform_14, window_bounds = array<i64: 1, 64>}, {pipeline_mode = #tpu.pipeline_mode<synchronous>, transform_indices = @transform_15, window_bounds = array<i64: 64, 128>}, {pipeline_mode = #tpu.pipeline_mode<synchronous>, transform_indices = @transform_16, window_bounds = array<i64: 64, 128>}, {pipeline_mode = #tpu.pipeline_mode<synchronous>, transform_indices = @transform_17, window_bounds = array<i64: 1, 128>}, {pipeline_mode = #tpu.pipeline_mode<synchronous>, transform_indices = @transform_18, window_bounds = array<i64: 128, 128>}, {pipeline_mode = #tpu.pipeline_mode<synchronous>, transform_indices = @transform_19, window_bounds = array<i64: 1, 128>}, {pipeline_mode = #tpu.pipeline_mode<synchronous>, transform_indices = @transform_20, window_bounds = array<i64: 1, 128>}, {pipeline_mode = #tpu.pipeline_mode<synchronous>, transform_indices = @transform_21, window_bounds = array<i64: 1, 128>}, {pipeline_mode = #tpu.pipeline_mode<synchronous>, transform_indices = @transform_22, window_bounds = array<i64: 2, 128, 16>}, {pipeline_mode = #tpu.pipeline_mode<synchronous>, transform_indices = @transform_23, window_bounds = array<i64: 2, 1, 16>}, {pipeline_mode = #tpu.pipeline_mode<synchronous>, transform_indices = @transform_24, window_bounds = array<i64: 2, 64, 128>}, {pipeline_mode = #tpu.pipeline_mode<synchronous>, transform_indices = @transform_25, window_bounds = array<i64: 2, 16, 3>}, {pipeline_mode = #tpu.pipeline_mode<synchronous>, transform_indices = @transform_26, window_bounds = array<i64: 2, 16, 3>}, {pipeline_mode = #tpu.pipeline_mode<synchronous>, transform_indices = @transform_27, window_bounds = array<i64: 2, 128, 3>}, {pipeline_mode = #tpu.pipeline_mode<synchronous>, transform_indices = @transform_28, window_bounds = array<i64: 2, 16, 16>}, {pipeline_mode = #tpu.pipeline_mode<synchronous>, transform_indices = @transform_29, window_bounds = array<i64: 2, 128, 16>}, {pipeline_mode = #tpu.pipeline_mode<synchronous>, transform_indices = @transform_30, window_bounds = array<i64: 2, 1, 16>}, {pipeline_mode = #tpu.pipeline_mode<synchronous>, transform_indices = @transform_31, window_bounds = array<i64: 2, 1, 48>}, {pipeline_mode = #tpu.pipeline_mode<synchronous>, transform_indices = @transform_32, window_bounds = array<i64: 2, 1, 48>}, {pipeline_mode = #tpu.pipeline_mode<synchronous>, transform_indices = @transform_33, window_bounds = array<i64: 48, 64>}, {pipeline_mode = #tpu.pipeline_mode<synchronous>, transform_indices = @transform_34, window_bounds = array<i64: 1, 64>}, {pipeline_mode = #tpu.pipeline_mode<synchronous>, transform_indices = @transform_35, window_bounds = array<i64: 64, 4>}, {pipeline_mode = #tpu.pipeline_mode<synchronous>, transform_indices = @transform_36, window_bounds = array<i64: 1, 4>}, {pipeline_mode = #tpu.pipeline_mode<synchronous>, transform_indices = @transform_37, window_bounds = array<i64: 16, 48>}, {pipeline_mode = #tpu.pipeline_mode<synchronous>, transform_indices = @transform_38, window_bounds = array<i64: 3, 48>}, {pipeline_mode = #tpu.pipeline_mode<synchronous>, transform_indices = @transform_39, window_bounds = array<i64: 8, 128>}]} {
    %0 = tpu.iota {dimensions = array<i32: 0>} : vector<8x16xi32>
    %c0 = arith.constant 0 : index
    %c0_0 = arith.constant 0 : index
    %1 = vector.load %arg3[%c0, %c0_0] : memref<1x16xi32, #tpu.memory_space<vmem>>, vector<1x16xi32>
    %2 = vector.broadcast %1 : vector<1x16xi32> to vector<8x16xi32>
    %3 = arith.cmpi eq, %0, %2 : vector<8x16xi32>
    %4 = arith.extui %3 : vector<8x16xi1> to vector<8x16xi32>
    %5 = arith.sitofp %4 : vector<8x16xi32> to vector<8x16xf32>
    %cst = arith.constant dense<0.000000e+00> : vector<8xf32>
    %6 = vector.multi_reduction <add>, %5, %cst [1] : vector<8x16xf32> to vector<8xf32>
    %7 = vector.shape_cast %6 : vector<8xf32> to vector<8x1xf32>
    %8 = tpu.iota {dimensions = array<i32: 1>} : vector<32x8xi32>
    %c0_1 = arith.constant 0 : index
    %c0_2 = arith.constant 0 : index
    %9 = vector.load %arg4[%c0_1, %c0_2] : memref<32x1xi32, #tpu.memory_space<vmem>>, vector<32x1xi32>
    %10 = vector.broadcast %9 : vector<32x1xi32> to vector<32x8xi32>
    %11 = arith.cmpi eq, %8, %10 : vector<32x8xi32>
    %12 = arith.extui %11 : vector<32x8xi1> to vector<32x8xi32>
    %13 = arith.sitofp %12 : vector<32x8xi32> to vector<32x8xf32>
    %14 = vector.extract_strided_slice %13 {offsets = [0, 0], sizes = [16, 8], strides = [1, 1]} : vector<32x8xf32> to vector<16x8xf32>
    %c0_3 = arith.constant 0 : index
    %c0_4 = arith.constant 0 : index
    %15 = vector.load %arg4[%c0_3, %c0_4] : memref<32x1xi32, #tpu.memory_space<vmem>>, vector<32x1xi32>
    %16 = vector.extract_strided_slice %15 {offsets = [0, 0], sizes = [16, 1], strides = [1, 1]} : vector<32x1xi32> to vector<16x1xi32>
    %c0_i32 = arith.constant 0 : i32
    %17 = vector.broadcast %c0_i32 : i32 to vector<16x1xi32>
    %18 = arith.cmpi eq, %16, %17 : vector<16x1xi32>
    %cst_5 = arith.constant 0.000000e+00 : f32
    %cst_6 = arith.constant -1.000000e+30 : f32
    %19 = vector.broadcast %cst_5 : f32 to vector<16x1xf32>
    %20 = vector.broadcast %cst_6 : f32 to vector<16x1xf32>
    %21 = arith.select %18, %19, %20 : vector<16x1xi1>, vector<16x1xf32>
    %22 = vector.shape_cast %21 : vector<16x1xf32> to vector<1x16x1xf32>
    %c1_i32 = arith.constant 1 : i32
    %23 = vector.broadcast %c1_i32 : i32 to vector<16x1xi32>
    %24 = arith.cmpi eq, %16, %23 : vector<16x1xi32>
    %cst_7 = arith.constant 0.000000e+00 : f32
    %cst_8 = arith.constant -1.000000e+30 : f32
    %25 = vector.broadcast %cst_7 : f32 to vector<16x1xf32>
    %26 = vector.broadcast %cst_8 : f32 to vector<16x1xf32>
    %27 = arith.select %24, %25, %26 : vector<16x1xi1>, vector<16x1xf32>
    %28 = vector.shape_cast %27 : vector<16x1xf32> to vector<1x16x1xf32>
    %c2_i32 = arith.constant 2 : i32
    %29 = vector.broadcast %c2_i32 : i32 to vector<16x1xi32>
    %30 = arith.cmpi eq, %16, %29 : vector<16x1xi32>
    %cst_9 = arith.constant 0.000000e+00 : f32
    %cst_10 = arith.constant -1.000000e+30 : f32
    %31 = vector.broadcast %cst_9 : f32 to vector<16x1xf32>
    %32 = vector.broadcast %cst_10 : f32 to vector<16x1xf32>
    %33 = arith.select %30, %31, %32 : vector<16x1xi1>, vector<16x1xf32>
    %34 = vector.shape_cast %33 : vector<16x1xf32> to vector<1x16x1xf32>
    %c3_i32 = arith.constant 3 : i32
    %35 = vector.broadcast %c3_i32 : i32 to vector<16x1xi32>
    %36 = arith.cmpi eq, %16, %35 : vector<16x1xi32>
    %cst_11 = arith.constant 0.000000e+00 : f32
    %cst_12 = arith.constant -1.000000e+30 : f32
    %37 = vector.broadcast %cst_11 : f32 to vector<16x1xf32>
    %38 = vector.broadcast %cst_12 : f32 to vector<16x1xf32>
    %39 = arith.select %36, %37, %38 : vector<16x1xi1>, vector<16x1xf32>
    %40 = vector.shape_cast %39 : vector<16x1xf32> to vector<1x16x1xf32>
    %c4_i32 = arith.constant 4 : i32
    %41 = vector.broadcast %c4_i32 : i32 to vector<16x1xi32>
    %42 = arith.cmpi eq, %16, %41 : vector<16x1xi32>
    %cst_13 = arith.constant 0.000000e+00 : f32
    %cst_14 = arith.constant -1.000000e+30 : f32
    %43 = vector.broadcast %cst_13 : f32 to vector<16x1xf32>
    %44 = vector.broadcast %cst_14 : f32 to vector<16x1xf32>
    %45 = arith.select %42, %43, %44 : vector<16x1xi1>, vector<16x1xf32>
    %46 = vector.shape_cast %45 : vector<16x1xf32> to vector<1x16x1xf32>
    %c5_i32 = arith.constant 5 : i32
    %47 = vector.broadcast %c5_i32 : i32 to vector<16x1xi32>
    %48 = arith.cmpi eq, %16, %47 : vector<16x1xi32>
    %cst_15 = arith.constant 0.000000e+00 : f32
    %cst_16 = arith.constant -1.000000e+30 : f32
    %49 = vector.broadcast %cst_15 : f32 to vector<16x1xf32>
    %50 = vector.broadcast %cst_16 : f32 to vector<16x1xf32>
    %51 = arith.select %48, %49, %50 : vector<16x1xi1>, vector<16x1xf32>
    %52 = vector.shape_cast %51 : vector<16x1xf32> to vector<1x16x1xf32>
    %c6_i32 = arith.constant 6 : i32
    %53 = vector.broadcast %c6_i32 : i32 to vector<16x1xi32>
    %54 = arith.cmpi eq, %16, %53 : vector<16x1xi32>
    %cst_17 = arith.constant 0.000000e+00 : f32
    %cst_18 = arith.constant -1.000000e+30 : f32
    %55 = vector.broadcast %cst_17 : f32 to vector<16x1xf32>
    %56 = vector.broadcast %cst_18 : f32 to vector<16x1xf32>
    %57 = arith.select %54, %55, %56 : vector<16x1xi1>, vector<16x1xf32>
    %58 = vector.shape_cast %57 : vector<16x1xf32> to vector<1x16x1xf32>
    %c7_i32 = arith.constant 7 : i32
    %59 = vector.broadcast %c7_i32 : i32 to vector<16x1xi32>
    %60 = arith.cmpi eq, %16, %59 : vector<16x1xi32>
    %cst_19 = arith.constant 0.000000e+00 : f32
    %cst_20 = arith.constant -1.000000e+30 : f32
    %61 = vector.broadcast %cst_19 : f32 to vector<16x1xf32>
    %62 = vector.broadcast %cst_20 : f32 to vector<16x1xf32>
    %63 = arith.select %60, %61, %62 : vector<16x1xi1>, vector<16x1xf32>
    %64 = vector.shape_cast %63 : vector<16x1xf32> to vector<1x16x1xf32>
    %65 = tpu.concatenate %22, %28, %34, %40, %46, %52, %58, %64 in 0 : vector<1x16x1xf32>, vector<1x16x1xf32>, vector<1x16x1xf32>, vector<1x16x1xf32>, vector<1x16x1xf32>, vector<1x16x1xf32>, vector<1x16x1xf32>, vector<1x16x1xf32> -> vector<8x16x1xf32>
    %c0_21 = arith.constant 0 : index
    %c0_22 = arith.constant 0 : index
    %66 = vector.load %arg1[%c0_21, %c0_22] : memref<8x2xf32, #tpu.memory_space<vmem>>, vector<8x2xf32>
    %c0_23 = arith.constant 0 : index
    %c0_24 = arith.constant 0 : index
    %67 = vector.load %arg5[%c0_23, %c0_24] : memref<2x16xf32, #tpu.memory_space<vmem>>, vector<2x16xf32>
    %cst_25 = arith.constant dense<0.000000e+00> : vector<8x16xf32>
    %68 = tpu.matmul %66, %67, %cst_25 {dimension_numbers = #tpu.dot_dimension_numbers<[1], [0], [0], [1], [0, 0, 1, 1], [], []>} : vector<8x2xf32>, vector<2x16xf32>, vector<8x16xf32> -> vector<8x16xf32>
    %c0_26 = arith.constant 0 : index
    %c0_27 = arith.constant 0 : index
    %69 = vector.load %arg6[%c0_26, %c0_27] : memref<1x16xf32, #tpu.memory_space<vmem>>, vector<1x16xf32>
    %70 = vector.broadcast %69 : vector<1x16xf32> to vector<8x16xf32>
    %71 = arith.addf %68, %70 : vector<8x16xf32>
    %cst_28 = arith.constant 0.000000e+00 : f32
    %72 = vector.broadcast %cst_28 : f32 to vector<8x16xf32>
    %73 = arith.maximumf %71, %72 : vector<8x16xf32>
    %c0_29 = arith.constant 0 : index
    %c0_30 = arith.constant 0 : index
    %74 = vector.load %arg2[%c0_29, %c0_30] : memref<16x3xf32, #tpu.memory_space<vmem>>, vector<16x3xf32>
    %c0_31 = arith.constant 0 : index
    %c0_32 = arith.constant 0 : index
    %75 = vector.load %arg7[%c0_31, %c0_32] : memref<3x64xf32, #tpu.memory_space<vmem>>, vector<3x64xf32>
    %cst_33 = arith.constant dense<0.000000e+00> : vector<16x64xf32>
    %76 = tpu.matmul %74, %75, %cst_33 {dimension_numbers = #tpu.dot_dimension_numbers<[1], [0], [0], [1], [0, 0, 1, 1], [], []>} : vector<16x3xf32>, vector<3x64xf32>, vector<16x64xf32> -> vector<16x64xf32>
    %c0_34 = arith.constant 0 : index
    %c0_35 = arith.constant 0 : index
    %77 = vector.load %arg8[%c0_34, %c0_35] : memref<1x64xf32, #tpu.memory_space<vmem>>, vector<1x64xf32>
    %78 = vector.broadcast %77 : vector<1x64xf32> to vector<16x64xf32>
    %79 = arith.addf %76, %78 : vector<16x64xf32>
    %cst_36 = arith.constant 0.000000e+00 : f32
    %80 = vector.broadcast %cst_36 : f32 to vector<16x64xf32>
    %81 = arith.maximumf %79, %80 : vector<16x64xf32>
    %c0_37 = arith.constant 0 : index
    %c0_38 = arith.constant 0 : index
    %82 = vector.load %arg9[%c0_37, %c0_38] : memref<16x64xf32, #tpu.memory_space<vmem>>, vector<16x64xf32>
    %c0_39 = arith.constant 0 : index
    %c0_40 = arith.constant 0 : index
    %83 = vector.load %arg10[%c0_39, %c0_40] : memref<16x64xf32, #tpu.memory_space<vmem>>, vector<16x64xf32>
    %c0_41 = arith.constant 0 : index
    %c0_42 = arith.constant 0 : index
    %84 = vector.load %arg11[%c0_41, %c0_42] : memref<1x64xf32, #tpu.memory_space<vmem>>, vector<1x64xf32>
    %c0_43 = arith.constant 0 : index
    %c0_44 = arith.constant 0 : index
    %85 = vector.load %arg12[%c0_43, %c0_44] : memref<64x64xf32, #tpu.memory_space<vmem>>, vector<64x64xf32>
    %c0_45 = arith.constant 0 : index
    %c0_46 = arith.constant 0 : index
    %86 = vector.load %arg13[%c0_45, %c0_46] : memref<1x64xf32, #tpu.memory_space<vmem>>, vector<1x64xf32>
    %cst_47 = arith.constant dense<0.000000e+00> : vector<32x16xf32>
    %87 = tpu.matmul %13, %73, %cst_47 {dimension_numbers = #tpu.dot_dimension_numbers<[1], [0], [0], [1], [0, 0, 1, 1], [], []>} : vector<32x8xf32>, vector<8x16xf32>, vector<32x16xf32> -> vector<32x16xf32>
    %88 = vector.extract_strided_slice %87 {offsets = [0, 0], sizes = [16, 16], strides = [1, 1]} : vector<32x16xf32> to vector<16x16xf32>
    %89 = vector.extract_strided_slice %87 {offsets = [16, 0], sizes = [16, 16], strides = [1, 1]} : vector<32x16xf32> to vector<16x16xf32>
    %cst_48 = arith.constant dense<0.000000e+00> : vector<16x64xf32>
    %90 = tpu.matmul %88, %82, %cst_48 {dimension_numbers = #tpu.dot_dimension_numbers<[1], [0], [0], [1], [0, 0, 1, 1], [], []>} : vector<16x16xf32>, vector<16x64xf32>, vector<16x64xf32> -> vector<16x64xf32>
    %91 = arith.subf %89, %88 : vector<16x16xf32>
    %cst_49 = arith.constant dense<0.000000e+00> : vector<16x64xf32>
    %92 = tpu.matmul %91, %83, %cst_49 {dimension_numbers = #tpu.dot_dimension_numbers<[1], [0], [0], [1], [0, 0, 1, 1], [], []>} : vector<16x16xf32>, vector<16x64xf32>, vector<16x64xf32> -> vector<16x64xf32>
    %93 = arith.addf %90, %92 : vector<16x64xf32>
    %94 = vector.broadcast %84 : vector<1x64xf32> to vector<16x64xf32>
    %95 = arith.addf %93, %94 : vector<16x64xf32>
    %cst_50 = arith.constant 0.000000e+00 : f32
    %96 = vector.broadcast %cst_50 : f32 to vector<16x64xf32>
    %97 = arith.maximumf %95, %96 : vector<16x64xf32>
    %cst_51 = arith.constant dense<0.000000e+00> : vector<16x64xf32>
    %98 = tpu.matmul %97, %85, %cst_51 {dimension_numbers = #tpu.dot_dimension_numbers<[1], [0], [0], [1], [0, 0, 1, 1], [], []>} : vector<16x64xf32>, vector<64x64xf32>, vector<16x64xf32> -> vector<16x64xf32>
    %99 = vector.broadcast %86 : vector<1x64xf32> to vector<16x64xf32>
    %100 = arith.addf %98, %99 : vector<16x64xf32>
    %101 = vector.shape_cast %100 : vector<16x64xf32> to vector<1x16x64xf32>
    %102 = vector.broadcast %101 : vector<1x16x64xf32> to vector<8x16x64xf32>
    %103 = vector.broadcast %65 : vector<8x16x1xf32> to vector<8x16x64xf32>
    %104 = arith.addf %102, %103 : vector<8x16x64xf32>
    %cst_52 = arith.constant dense<0xFF800000> : vector<8x64xf32>
    %105 = vector.multi_reduction <maximumf>, %104, %cst_52 [1] : vector<8x16x64xf32> to vector<8x64xf32>
    %cst_53 = arith.constant 5.000000e-01 : f32
    %106 = vector.broadcast %cst_53 : f32 to vector<8x1xf32>
    %107 = arith.cmpf ogt, %7, %106 : vector<8x1xf32>
    %cst_54 = arith.constant 0.000000e+00 : f32
    %108 = vector.shape_cast %107 : vector<8x1xi1> to vector<8x1xi1>
    %109 = vector.broadcast %108 : vector<8x1xi1> to vector<8x64xi1>
    %110 = vector.broadcast %cst_54 : f32 to vector<8x64xf32>
    %111 = arith.select %109, %105, %110 : vector<8x64xi1>, vector<8x64xf32>
    %c0_55 = arith.constant 0 : index
    %c0_56 = arith.constant 0 : index
    %112 = vector.load %arg14[%c0_55, %c0_56] : memref<1x64xf32, #tpu.memory_space<vmem>>, vector<1x64xf32>
    %c0_57 = arith.constant 0 : index
    %c0_58 = arith.constant 0 : index
    %113 = vector.load %arg15[%c0_57, %c0_58] : memref<1x64xf32, #tpu.memory_space<vmem>>, vector<1x64xf32>
    %cst_59 = arith.constant dense<0.000000e+00> : vector<64xf32>
    %114 = vector.multi_reduction <add>, %111, %cst_59 [0] : vector<8x64xf32> to vector<64xf32>
    %115 = vector.shape_cast %114 : vector<64xf32> to vector<1x64xf32>
    %cst_60 = arith.constant 8.000000e+00 : f32
    %116 = vector.broadcast %cst_60 : f32 to vector<1x64xf32>
    %117 = arith.divf %115, %116 : vector<1x64xf32>
    %118 = vector.broadcast %117 : vector<1x64xf32> to vector<8x64xf32>
    %119 = arith.subf %111, %118 : vector<8x64xf32>
    %120 = arith.mulf %119, %119 : vector<8x64xf32>
    %cst_61 = arith.constant dense<0.000000e+00> : vector<64xf32>
    %121 = vector.multi_reduction <add>, %120, %cst_61 [0] : vector<8x64xf32> to vector<64xf32>
    %122 = vector.shape_cast %121 : vector<64xf32> to vector<1x64xf32>
    %cst_62 = arith.constant 8.000000e+00 : f32
    %123 = vector.broadcast %cst_62 : f32 to vector<1x64xf32>
    %124 = arith.divf %122, %123 : vector<1x64xf32>
    %125 = vector.broadcast %117 : vector<1x64xf32> to vector<8x64xf32>
    %126 = arith.subf %111, %125 : vector<8x64xf32>
    %cst_63 = arith.constant 9.99999974E-6 : f32
    %127 = vector.broadcast %cst_63 : f32 to vector<1x64xf32>
    %128 = arith.addf %124, %127 : vector<1x64xf32>
    %129 = math.rsqrt %128 : vector<1x64xf32>
    %130 = vector.broadcast %129 : vector<1x64xf32> to vector<8x64xf32>
    %131 = arith.mulf %126, %130 : vector<8x64xf32>
    %132 = vector.broadcast %112 : vector<1x64xf32> to vector<8x64xf32>
    %133 = arith.mulf %131, %132 : vector<8x64xf32>
    %134 = vector.broadcast %113 : vector<1x64xf32> to vector<8x64xf32>
    %135 = arith.addf %133, %134 : vector<8x64xf32>
    %cst_64 = arith.constant 0.000000e+00 : f32
    %136 = vector.broadcast %cst_64 : f32 to vector<8x64xf32>
    %137 = arith.maximumf %135, %136 : vector<8x64xf32>
    %c0_65 = arith.constant 0 : index
    %c0_66 = arith.constant 0 : index
    %138 = vector.load %arg16[%c0_65, %c0_66] : memref<64x128xf32, #tpu.memory_space<vmem>>, vector<64x128xf32>
    %c0_67 = arith.constant 0 : index
    %c0_68 = arith.constant 0 : index
    %139 = vector.load %arg17[%c0_67, %c0_68] : memref<64x128xf32, #tpu.memory_space<vmem>>, vector<64x128xf32>
    %c0_69 = arith.constant 0 : index
    %c0_70 = arith.constant 0 : index
    %140 = vector.load %arg18[%c0_69, %c0_70] : memref<1x128xf32, #tpu.memory_space<vmem>>, vector<1x128xf32>
    %c0_71 = arith.constant 0 : index
    %c0_72 = arith.constant 0 : index
    %141 = vector.load %arg19[%c0_71, %c0_72] : memref<128x128xf32, #tpu.memory_space<vmem>>, vector<128x128xf32>
    %c0_73 = arith.constant 0 : index
    %c0_74 = arith.constant 0 : index
    %142 = vector.load %arg20[%c0_73, %c0_74] : memref<1x128xf32, #tpu.memory_space<vmem>>, vector<1x128xf32>
    %cst_75 = arith.constant dense<0.000000e+00> : vector<32x64xf32>
    %143 = tpu.matmul %13, %137, %cst_75 {dimension_numbers = #tpu.dot_dimension_numbers<[1], [0], [0], [1], [0, 0, 1, 1], [], []>} : vector<32x8xf32>, vector<8x64xf32>, vector<32x64xf32> -> vector<32x64xf32>
    %144 = vector.extract_strided_slice %143 {offsets = [0, 0], sizes = [16, 64], strides = [1, 1]} : vector<32x64xf32> to vector<16x64xf32>
    %145 = vector.extract_strided_slice %143 {offsets = [16, 0], sizes = [16, 64], strides = [1, 1]} : vector<32x64xf32> to vector<16x64xf32>
    %cst_76 = arith.constant dense<0.000000e+00> : vector<16x128xf32>
    %146 = tpu.matmul %144, %138, %cst_76 {dimension_numbers = #tpu.dot_dimension_numbers<[1], [0], [0], [1], [0, 0, 1, 1], [], []>} : vector<16x64xf32>, vector<64x128xf32>, vector<16x128xf32> -> vector<16x128xf32>
    %147 = arith.subf %145, %144 : vector<16x64xf32>
    %cst_77 = arith.constant dense<0.000000e+00> : vector<16x128xf32>
    %148 = tpu.matmul %147, %139, %cst_77 {dimension_numbers = #tpu.dot_dimension_numbers<[1], [0], [0], [1], [0, 0, 1, 1], [], []>} : vector<16x64xf32>, vector<64x128xf32>, vector<16x128xf32> -> vector<16x128xf32>
    %149 = arith.addf %146, %148 : vector<16x128xf32>
    %150 = vector.broadcast %140 : vector<1x128xf32> to vector<16x128xf32>
    %151 = arith.addf %149, %150 : vector<16x128xf32>
    %cst_78 = arith.constant 0.000000e+00 : f32
    %152 = vector.broadcast %cst_78 : f32 to vector<16x128xf32>
    %153 = arith.maximumf %151, %152 : vector<16x128xf32>
    %cst_79 = arith.constant dense<0.000000e+00> : vector<16x128xf32>
    %154 = tpu.matmul %153, %141, %cst_79 {dimension_numbers = #tpu.dot_dimension_numbers<[1], [0], [0], [1], [0, 0, 1, 1], [], []>} : vector<16x128xf32>, vector<128x128xf32>, vector<16x128xf32> -> vector<16x128xf32>
    %155 = vector.broadcast %142 : vector<1x128xf32> to vector<16x128xf32>
    %156 = arith.addf %154, %155 : vector<16x128xf32>
    %157 = vector.shape_cast %156 : vector<16x128xf32> to vector<1x16x128xf32>
    %158 = vector.broadcast %157 : vector<1x16x128xf32> to vector<8x16x128xf32>
    %159 = vector.broadcast %65 : vector<8x16x1xf32> to vector<8x16x128xf32>
    %160 = arith.addf %158, %159 : vector<8x16x128xf32>
    %cst_80 = arith.constant dense<0xFF800000> : vector<8x128xf32>
    %161 = vector.multi_reduction <maximumf>, %160, %cst_80 [1] : vector<8x16x128xf32> to vector<8x128xf32>
    %cst_81 = arith.constant 5.000000e-01 : f32
    %162 = vector.broadcast %cst_81 : f32 to vector<8x1xf32>
    %163 = arith.cmpf ogt, %7, %162 : vector<8x1xf32>
    %cst_82 = arith.constant 0.000000e+00 : f32
    %164 = vector.shape_cast %163 : vector<8x1xi1> to vector<8x1xi1>
    %165 = vector.broadcast %164 : vector<8x1xi1> to vector<8x128xi1>
    %166 = vector.broadcast %cst_82 : f32 to vector<8x128xf32>
    %167 = arith.select %165, %161, %166 : vector<8x128xi1>, vector<8x128xf32>
    %c0_83 = arith.constant 0 : index
    %c0_84 = arith.constant 0 : index
    %168 = vector.load %arg21[%c0_83, %c0_84] : memref<1x128xf32, #tpu.memory_space<vmem>>, vector<1x128xf32>
    %c0_85 = arith.constant 0 : index
    %c0_86 = arith.constant 0 : index
    %169 = vector.load %arg22[%c0_85, %c0_86] : memref<1x128xf32, #tpu.memory_space<vmem>>, vector<1x128xf32>
    %cst_87 = arith.constant dense<0.000000e+00> : vector<128xf32>
    %170 = vector.multi_reduction <add>, %167, %cst_87 [0] : vector<8x128xf32> to vector<128xf32>
    %171 = vector.shape_cast %170 : vector<128xf32> to vector<1x128xf32>
    %cst_88 = arith.constant 8.000000e+00 : f32
    %172 = vector.broadcast %cst_88 : f32 to vector<1x128xf32>
    %173 = arith.divf %171, %172 : vector<1x128xf32>
    %174 = vector.broadcast %173 : vector<1x128xf32> to vector<8x128xf32>
    %175 = arith.subf %167, %174 : vector<8x128xf32>
    %176 = arith.mulf %175, %175 : vector<8x128xf32>
    %cst_89 = arith.constant dense<0.000000e+00> : vector<128xf32>
    %177 = vector.multi_reduction <add>, %176, %cst_89 [0] : vector<8x128xf32> to vector<128xf32>
    %178 = vector.shape_cast %177 : vector<128xf32> to vector<1x128xf32>
    %cst_90 = arith.constant 8.000000e+00 : f32
    %179 = vector.broadcast %cst_90 : f32 to vector<1x128xf32>
    %180 = arith.divf %178, %179 : vector<1x128xf32>
    %181 = vector.broadcast %173 : vector<1x128xf32> to vector<8x128xf32>
    %182 = arith.subf %167, %181 : vector<8x128xf32>
    %cst_91 = arith.constant 9.99999974E-6 : f32
    %183 = vector.broadcast %cst_91 : f32 to vector<1x128xf32>
    %184 = arith.addf %180, %183 : vector<1x128xf32>
    %185 = math.rsqrt %184 : vector<1x128xf32>
    %186 = vector.broadcast %185 : vector<1x128xf32> to vector<8x128xf32>
    %187 = arith.mulf %182, %186 : vector<8x128xf32>
    %188 = vector.broadcast %168 : vector<1x128xf32> to vector<8x128xf32>
    %189 = arith.mulf %187, %188 : vector<8x128xf32>
    %190 = vector.broadcast %169 : vector<1x128xf32> to vector<8x128xf32>
    %191 = arith.addf %189, %190 : vector<8x128xf32>
    %cst_92 = arith.constant 0.000000e+00 : f32
    %192 = vector.broadcast %cst_92 : f32 to vector<8x128xf32>
    %193 = arith.maximumf %191, %192 : vector<8x128xf32>
    %c0_93 = arith.constant 0 : index
    %c0_94 = arith.constant 0 : index
    %194 = vector.load %arg38[%c0_93, %c0_94] : memref<16x48xf32, #tpu.memory_space<vmem>>, vector<16x48xf32>
    %c0_95 = arith.constant 0 : index
    %c0_96 = arith.constant 0 : index
    %195 = vector.load %arg39[%c0_95, %c0_96] : memref<3x48xf32, #tpu.memory_space<vmem>>, vector<3x48xf32>
    %c0_97 = arith.constant 0 : index
    %c0_98 = arith.constant 0 : index
    %c0_99 = arith.constant 0 : index
    %196 = vector.load %arg25[%c0_97, %c0_98, %c0_99] : memref<2x64x128xf32, #tpu.memory_space<vmem>>, vector<1x64x128xf32>
    %197 = vector.shape_cast %196 : vector<1x64x128xf32> to vector<64x128xf32>
    %cst_100 = arith.constant dense<0.000000e+00> : vector<16x128xf32>
    %198 = tpu.matmul %81, %197, %cst_100 {dimension_numbers = #tpu.dot_dimension_numbers<[1], [0], [0], [1], [0, 0, 1, 1], [], []>} : vector<16x64xf32>, vector<64x128xf32>, vector<16x128xf32> -> vector<16x128xf32>
    %cst_101 = arith.constant 2.000000e-01 : f32
    %199 = vector.broadcast %cst_101 : f32 to vector<16x128xf32>
    %200 = arith.mulf %199, %198 : vector<16x128xf32>
    %201 = arith.maximumf %198, %200 : vector<16x128xf32>
    %c0_102 = arith.constant 0 : index
    %c0_103 = arith.constant 0 : index
    %c0_104 = arith.constant 0 : index
    %202 = vector.load %arg23[%c0_102, %c0_103, %c0_104] : memref<2x128x16xf32, #tpu.memory_space<vmem>>, vector<1x128x16xf32>
    %203 = vector.shape_cast %202 : vector<1x128x16xf32> to vector<128x16xf32>
    %cst_105 = arith.constant dense<0.000000e+00> : vector<8x16xf32>
    %204 = tpu.matmul %193, %203, %cst_105 {dimension_numbers = #tpu.dot_dimension_numbers<[1], [0], [0], [1], [0, 0, 1, 1], [], []>} : vector<8x128xf32>, vector<128x16xf32>, vector<8x16xf32> -> vector<8x16xf32>
    %c0_106 = arith.constant 0 : index
    %c0_107 = arith.constant 0 : index
    %c0_108 = arith.constant 0 : index
    %205 = vector.load %arg24[%c0_106, %c0_107, %c0_108] : memref<2x1x16xf32, #tpu.memory_space<vmem>>, vector<1x1x16xf32>
    %206 = vector.shape_cast %205 : vector<1x1x16xf32> to vector<1x16xf32>
    %207 = vector.broadcast %206 : vector<1x16xf32> to vector<8x16xf32>
    %208 = arith.addf %204, %207 : vector<8x16xf32>
    %cst_109 = arith.constant dense<0.000000e+00> : vector<32x16xf32>
    %209 = tpu.matmul %13, %208, %cst_109 {dimension_numbers = #tpu.dot_dimension_numbers<[1], [0], [0], [1], [0, 0, 1, 1], [], []>} : vector<32x8xf32>, vector<8x16xf32>, vector<32x16xf32> -> vector<32x16xf32>
    %210 = vector.extract_strided_slice %209 {offsets = [0, 0], sizes = [16, 16], strides = [1, 1]} : vector<32x16xf32> to vector<16x16xf32>
    %211 = vector.extract_strided_slice %209 {offsets = [16, 0], sizes = [16, 16], strides = [1, 1]} : vector<32x16xf32> to vector<16x16xf32>
    %c0_110 = arith.constant 0 : index
    %c0_111 = arith.constant 0 : index
    %c0_112 = arith.constant 0 : index
    %212 = vector.load %arg26[%c0_110, %c0_111, %c0_112] : memref<2x16x3xf32, #tpu.memory_space<vmem>>, vector<1x16x3xf32>
    %213 = vector.shape_cast %212 : vector<1x16x3xf32> to vector<16x3xf32>
    %cst_113 = arith.constant dense<0.000000e+00> : vector<16x3xf32>
    %214 = tpu.matmul %210, %213, %cst_113 {dimension_numbers = #tpu.dot_dimension_numbers<[1], [0], [0], [1], [0, 0, 1, 1], [], []>} : vector<16x16xf32>, vector<16x3xf32>, vector<16x3xf32> -> vector<16x3xf32>
    %c0_114 = arith.constant 0 : index
    %c0_115 = arith.constant 0 : index
    %c0_116 = arith.constant 0 : index
    %215 = vector.load %arg27[%c0_114, %c0_115, %c0_116] : memref<2x16x3xf32, #tpu.memory_space<vmem>>, vector<1x16x3xf32>
    %216 = vector.shape_cast %215 : vector<1x16x3xf32> to vector<16x3xf32>
    %cst_117 = arith.constant dense<0.000000e+00> : vector<16x3xf32>
    %217 = tpu.matmul %211, %216, %cst_117 {dimension_numbers = #tpu.dot_dimension_numbers<[1], [0], [0], [1], [0, 0, 1, 1], [], []>} : vector<16x16xf32>, vector<16x3xf32>, vector<16x3xf32> -> vector<16x3xf32>
    %218 = arith.addf %214, %217 : vector<16x3xf32>
    %c0_118 = arith.constant 0 : index
    %c0_119 = arith.constant 0 : index
    %c0_120 = arith.constant 0 : index
    %219 = vector.load %arg28[%c0_118, %c0_119, %c0_120] : memref<2x128x3xf32, #tpu.memory_space<vmem>>, vector<1x128x3xf32>
    %220 = vector.shape_cast %219 : vector<1x128x3xf32> to vector<128x3xf32>
    %cst_121 = arith.constant dense<0.000000e+00> : vector<16x3xf32>
    %221 = tpu.matmul %201, %220, %cst_121 {dimension_numbers = #tpu.dot_dimension_numbers<[1], [0], [0], [1], [0, 0, 1, 1], [], []>} : vector<16x128xf32>, vector<128x3xf32>, vector<16x3xf32> -> vector<16x3xf32>
    %222 = arith.addf %218, %221 : vector<16x3xf32>
    %cst_122 = arith.constant 2.000000e-01 : f32
    %223 = vector.broadcast %cst_122 : f32 to vector<16x3xf32>
    %224 = arith.mulf %223, %222 : vector<16x3xf32>
    %225 = arith.maximumf %222, %224 : vector<16x3xf32>
    %226 = vector.shape_cast %225 : vector<16x3xf32> to vector<1x16x3xf32>
    %227 = vector.broadcast %226 : vector<1x16x3xf32> to vector<8x16x3xf32>
    %228 = vector.broadcast %65 : vector<8x16x1xf32> to vector<8x16x3xf32>
    %229 = arith.addf %227, %228 : vector<8x16x3xf32>
    %cst_123 = arith.constant dense<0xFF800000> : vector<8x3xf32>
    %230 = vector.multi_reduction <maximumf>, %229, %cst_123 [1] : vector<8x16x3xf32> to vector<8x3xf32>
    %cst_124 = arith.constant 5.000000e-01 : f32
    %231 = vector.broadcast %cst_124 : f32 to vector<8x1xf32>
    %232 = arith.cmpf ogt, %7, %231 : vector<8x1xf32>
    %cst_125 = arith.constant 0.000000e+00 : f32
    %233 = vector.shape_cast %232 : vector<8x1xi1> to vector<8x1xi1>
    %234 = vector.broadcast %233 : vector<8x1xi1> to vector<8x3xi1>
    %235 = vector.broadcast %cst_125 : f32 to vector<8x3xf32>
    %236 = arith.select %234, %230, %235 : vector<8x3xi1>, vector<8x3xf32>
    %cst_126 = arith.constant dense<0.000000e+00> : vector<16x3xf32>
    %237 = tpu.matmul %14, %236, %cst_126 {dimension_numbers = #tpu.dot_dimension_numbers<[1], [0], [0], [1], [0, 0, 1, 1], [], []>} : vector<16x8xf32>, vector<8x3xf32>, vector<16x3xf32> -> vector<16x3xf32>
    %238 = arith.subf %225, %237 : vector<16x3xf32>
    %239 = math.exp %238 : vector<16x3xf32>
    %cst_127 = arith.constant dense<0.000000e+00> : vector<8x3xf32>
    %240 = tpu.matmul %5, %239, %cst_127 {dimension_numbers = #tpu.dot_dimension_numbers<[1], [0], [0], [1], [0, 0, 1, 1], [], []>} : vector<8x16xf32>, vector<16x3xf32>, vector<8x3xf32> -> vector<8x3xf32>
    %cst_128 = arith.constant dense<0.000000e+00> : vector<16x3xf32>
    %241 = tpu.matmul %14, %240, %cst_128 {dimension_numbers = #tpu.dot_dimension_numbers<[1], [0], [0], [1], [0, 0, 1, 1], [], []>} : vector<16x8xf32>, vector<8x3xf32>, vector<16x3xf32> -> vector<16x3xf32>
    %cst_129 = arith.constant 1.000000e-16 : f32
    %242 = vector.broadcast %cst_129 : f32 to vector<16x3xf32>
    %243 = arith.addf %241, %242 : vector<16x3xf32>
    %244 = arith.divf %239, %243 : vector<16x3xf32>
    %c0_130 = arith.constant 0 : index
    %c0_131 = arith.constant 0 : index
    %c0_132 = arith.constant 0 : index
    %245 = vector.load %arg29[%c0_130, %c0_131, %c0_132] : memref<2x16x16xf32, #tpu.memory_space<vmem>>, vector<1x16x16xf32>
    %246 = vector.shape_cast %245 : vector<1x16x16xf32> to vector<16x16xf32>
    %cst_133 = arith.constant dense<0.000000e+00> : vector<16x16xf32>
    %247 = tpu.matmul %211, %246, %cst_133 {dimension_numbers = #tpu.dot_dimension_numbers<[1], [0], [0], [1], [0, 0, 1, 1], [], []>} : vector<16x16xf32>, vector<16x16xf32>, vector<16x16xf32> -> vector<16x16xf32>
    %c0_134 = arith.constant 0 : index
    %c0_135 = arith.constant 0 : index
    %c0_136 = arith.constant 0 : index
    %248 = vector.load %arg30[%c0_134, %c0_135, %c0_136] : memref<2x128x16xf32, #tpu.memory_space<vmem>>, vector<1x128x16xf32>
    %249 = vector.shape_cast %248 : vector<1x128x16xf32> to vector<128x16xf32>
    %cst_137 = arith.constant dense<0.000000e+00> : vector<16x16xf32>
    %250 = tpu.matmul %201, %249, %cst_137 {dimension_numbers = #tpu.dot_dimension_numbers<[1], [0], [0], [1], [0, 0, 1, 1], [], []>} : vector<16x128xf32>, vector<128x16xf32>, vector<16x16xf32> -> vector<16x16xf32>
    %251 = arith.addf %247, %250 : vector<16x16xf32>
    %c0_138 = arith.constant 0 : index
    %c0_139 = arith.constant 0 : index
    %c0_140 = arith.constant 0 : index
    %252 = vector.load %arg31[%c0_138, %c0_139, %c0_140] : memref<2x1x16xf32, #tpu.memory_space<vmem>>, vector<1x1x16xf32>
    %253 = vector.shape_cast %252 : vector<1x1x16xf32> to vector<1x16xf32>
    %254 = vector.broadcast %253 : vector<1x16xf32> to vector<16x16xf32>
    %255 = arith.addf %251, %254 : vector<16x16xf32>
    %cst_141 = arith.constant dense<0.000000e+00> : vector<16x48xf32>
    %256 = tpu.matmul %255, %194, %cst_141 {dimension_numbers = #tpu.dot_dimension_numbers<[1], [0], [0], [1], [0, 0, 1, 1], [], []>} : vector<16x16xf32>, vector<16x48xf32>, vector<16x48xf32> -> vector<16x48xf32>
    %cst_142 = arith.constant dense<0.000000e+00> : vector<16x48xf32>
    %257 = tpu.matmul %244, %195, %cst_142 {dimension_numbers = #tpu.dot_dimension_numbers<[1], [0], [0], [1], [0, 0, 1, 1], [], []>} : vector<16x3xf32>, vector<3x48xf32>, vector<16x48xf32> -> vector<16x48xf32>
    %258 = arith.mulf %256, %257 : vector<16x48xf32>
    %259 = vector.shape_cast %258 : vector<16x48xf32> to vector<1x16x48xf32>
    %260 = vector.broadcast %259 : vector<1x16x48xf32> to vector<8x16x48xf32>
    %261 = vector.broadcast %65 : vector<8x16x1xf32> to vector<8x16x48xf32>
    %262 = arith.addf %260, %261 : vector<8x16x48xf32>
    %cst_143 = arith.constant dense<0xFF800000> : vector<8x48xf32>
    %263 = vector.multi_reduction <maximumf>, %262, %cst_143 [1] : vector<8x16x48xf32> to vector<8x48xf32>
    %cst_144 = arith.constant 5.000000e-01 : f32
    %264 = vector.broadcast %cst_144 : f32 to vector<8x1xf32>
    %265 = arith.cmpf ogt, %7, %264 : vector<8x1xf32>
    %cst_145 = arith.constant 0.000000e+00 : f32
    %266 = vector.shape_cast %265 : vector<8x1xi1> to vector<8x1xi1>
    %267 = vector.broadcast %266 : vector<8x1xi1> to vector<8x48xi1>
    %268 = vector.broadcast %cst_145 : f32 to vector<8x48xf32>
    %269 = arith.select %267, %263, %268 : vector<8x48xi1>, vector<8x48xf32>
    %cst_146 = arith.constant dense<0.000000e+00> : vector<8x48xf32>
    %270 = tpu.matmul %208, %194, %cst_146 {dimension_numbers = #tpu.dot_dimension_numbers<[1], [0], [0], [1], [0, 0, 1, 1], [], []>} : vector<8x16xf32>, vector<16x48xf32>, vector<8x48xf32> -> vector<8x48xf32>
    %271 = arith.addf %269, %270 : vector<8x48xf32>
    %c0_147 = arith.constant 0 : index
    %c0_148 = arith.constant 0 : index
    %c0_149 = arith.constant 0 : index
    %272 = vector.load %arg32[%c0_147, %c0_148, %c0_149] : memref<2x1x48xf32, #tpu.memory_space<vmem>>, vector<1x1x48xf32>
    %273 = vector.shape_cast %272 : vector<1x1x48xf32> to vector<1x48xf32>
    %c0_150 = arith.constant 0 : index
    %c0_151 = arith.constant 0 : index
    %c0_152 = arith.constant 0 : index
    %274 = vector.load %arg33[%c0_150, %c0_151, %c0_152] : memref<2x1x48xf32, #tpu.memory_space<vmem>>, vector<1x1x48xf32>
    %275 = vector.shape_cast %274 : vector<1x1x48xf32> to vector<1x48xf32>
    %cst_153 = arith.constant dense<0.000000e+00> : vector<48xf32>
    %276 = vector.multi_reduction <add>, %271, %cst_153 [0] : vector<8x48xf32> to vector<48xf32>
    %277 = vector.shape_cast %276 : vector<48xf32> to vector<1x48xf32>
    %cst_154 = arith.constant 8.000000e+00 : f32
    %278 = vector.broadcast %cst_154 : f32 to vector<1x48xf32>
    %279 = arith.divf %277, %278 : vector<1x48xf32>
    %280 = vector.broadcast %279 : vector<1x48xf32> to vector<8x48xf32>
    %281 = arith.subf %271, %280 : vector<8x48xf32>
    %282 = arith.mulf %281, %281 : vector<8x48xf32>
    %cst_155 = arith.constant dense<0.000000e+00> : vector<48xf32>
    %283 = vector.multi_reduction <add>, %282, %cst_155 [0] : vector<8x48xf32> to vector<48xf32>
    %284 = vector.shape_cast %283 : vector<48xf32> to vector<1x48xf32>
    %cst_156 = arith.constant 8.000000e+00 : f32
    %285 = vector.broadcast %cst_156 : f32 to vector<1x48xf32>
    %286 = arith.divf %284, %285 : vector<1x48xf32>
    %287 = vector.broadcast %279 : vector<1x48xf32> to vector<8x48xf32>
    %288 = arith.subf %271, %287 : vector<8x48xf32>
    %cst_157 = arith.constant 9.99999974E-6 : f32
    %289 = vector.broadcast %cst_157 : f32 to vector<1x48xf32>
    %290 = arith.addf %286, %289 : vector<1x48xf32>
    %291 = math.rsqrt %290 : vector<1x48xf32>
    %292 = vector.broadcast %291 : vector<1x48xf32> to vector<8x48xf32>
    %293 = arith.mulf %288, %292 : vector<8x48xf32>
    %294 = vector.broadcast %273 : vector<1x48xf32> to vector<8x48xf32>
    %295 = arith.mulf %293, %294 : vector<8x48xf32>
    %296 = vector.broadcast %275 : vector<1x48xf32> to vector<8x48xf32>
    %297 = arith.addf %295, %296 : vector<8x48xf32>
    %cst_158 = arith.constant 0.000000e+00 : f32
    %298 = vector.broadcast %cst_158 : f32 to vector<8x48xf32>
    %299 = arith.maximumf %297, %298 : vector<8x48xf32>
    %c0_159 = arith.constant 0 : index
    %c0_160 = arith.constant 0 : index
    %300 = vector.load %arg34[%c0_159, %c0_160] : memref<48x64xf32, #tpu.memory_space<vmem>>, vector<48x64xf32>
    %cst_161 = arith.constant dense<0.000000e+00> : vector<8x64xf32>
    %301 = tpu.matmul %299, %300, %cst_161 {dimension_numbers = #tpu.dot_dimension_numbers<[1], [0], [0], [1], [0, 0, 1, 1], [], []>} : vector<8x48xf32>, vector<48x64xf32>, vector<8x64xf32> -> vector<8x64xf32>
    %c0_162 = arith.constant 0 : index
    %c0_163 = arith.constant 0 : index
    %302 = vector.load %arg35[%c0_162, %c0_163] : memref<1x64xf32, #tpu.memory_space<vmem>>, vector<1x64xf32>
    %303 = vector.broadcast %302 : vector<1x64xf32> to vector<8x64xf32>
    %304 = arith.addf %301, %303 : vector<8x64xf32>
    %cst_164 = arith.constant 0.000000e+00 : f32
    %305 = vector.broadcast %cst_164 : f32 to vector<8x64xf32>
    %306 = arith.maximumf %304, %305 : vector<8x64xf32>
    %c0_165 = arith.constant 0 : index
    %c0_166 = arith.constant 0 : index
    %307 = vector.load %arg36[%c0_165, %c0_166] : memref<64x4xf32, #tpu.memory_space<vmem>>, vector<64x4xf32>
    %cst_167 = arith.constant dense<0.000000e+00> : vector<8x4xf32>
    %308 = tpu.matmul %306, %307, %cst_167 {dimension_numbers = #tpu.dot_dimension_numbers<[1], [0], [0], [1], [0, 0, 1, 1], [], []>} : vector<8x64xf32>, vector<64x4xf32>, vector<8x4xf32> -> vector<8x4xf32>
    %c0_168 = arith.constant 0 : index
    %c0_169 = arith.constant 0 : index
    %309 = vector.load %arg37[%c0_168, %c0_169] : memref<1x4xf32, #tpu.memory_space<vmem>>, vector<1x4xf32>
    %310 = vector.broadcast %309 : vector<1x4xf32> to vector<8x4xf32>
    %311 = arith.addf %308, %310 : vector<8x4xf32>
    %312 = arith.negf %311 : vector<8x4xf32>
    %313 = math.exp %312 : vector<8x4xf32>
    %cst_170 = arith.constant 1.000000e+00 : f32
    %314 = vector.broadcast %cst_170 : f32 to vector<8x4xf32>
    %315 = arith.addf %314, %313 : vector<8x4xf32>
    %316 = arith.divf %314, %315 : vector<8x4xf32>
    %c1 = arith.constant 1 : index
    %c0_171 = arith.constant 0 : index
    %c0_172 = arith.constant 0 : index
    %317 = vector.load %arg25[%c1, %c0_171, %c0_172] : memref<2x64x128xf32, #tpu.memory_space<vmem>>, vector<1x64x128xf32>
    %318 = vector.shape_cast %317 : vector<1x64x128xf32> to vector<64x128xf32>
    %cst_173 = arith.constant dense<0.000000e+00> : vector<16x128xf32>
    %319 = tpu.matmul %81, %318, %cst_173 {dimension_numbers = #tpu.dot_dimension_numbers<[1], [0], [0], [1], [0, 0, 1, 1], [], []>} : vector<16x64xf32>, vector<64x128xf32>, vector<16x128xf32> -> vector<16x128xf32>
    %cst_174 = arith.constant 2.000000e-01 : f32
    %320 = vector.broadcast %cst_174 : f32 to vector<16x128xf32>
    %321 = arith.mulf %320, %319 : vector<16x128xf32>
    %322 = arith.maximumf %319, %321 : vector<16x128xf32>
    %c1_175 = arith.constant 1 : index
    %c0_176 = arith.constant 0 : index
    %c0_177 = arith.constant 0 : index
    %323 = vector.load %arg23[%c1_175, %c0_176, %c0_177] : memref<2x128x16xf32, #tpu.memory_space<vmem>>, vector<1x128x16xf32>
    %324 = vector.shape_cast %323 : vector<1x128x16xf32> to vector<128x16xf32>
    %cst_178 = arith.constant dense<0.000000e+00> : vector<8x16xf32>
    %325 = tpu.matmul %193, %324, %cst_178 {dimension_numbers = #tpu.dot_dimension_numbers<[1], [0], [0], [1], [0, 0, 1, 1], [], []>} : vector<8x128xf32>, vector<128x16xf32>, vector<8x16xf32> -> vector<8x16xf32>
    %c1_179 = arith.constant 1 : index
    %c0_180 = arith.constant 0 : index
    %c0_181 = arith.constant 0 : index
    %326 = vector.load %arg24[%c1_179, %c0_180, %c0_181] : memref<2x1x16xf32, #tpu.memory_space<vmem>>, vector<1x1x16xf32>
    %327 = vector.shape_cast %326 : vector<1x1x16xf32> to vector<1x16xf32>
    %328 = vector.broadcast %327 : vector<1x16xf32> to vector<8x16xf32>
    %329 = arith.addf %325, %328 : vector<8x16xf32>
    %cst_182 = arith.constant dense<0.000000e+00> : vector<32x16xf32>
    %330 = tpu.matmul %13, %329, %cst_182 {dimension_numbers = #tpu.dot_dimension_numbers<[1], [0], [0], [1], [0, 0, 1, 1], [], []>} : vector<32x8xf32>, vector<8x16xf32>, vector<32x16xf32> -> vector<32x16xf32>
    %331 = vector.extract_strided_slice %330 {offsets = [0, 0], sizes = [16, 16], strides = [1, 1]} : vector<32x16xf32> to vector<16x16xf32>
    %332 = vector.extract_strided_slice %330 {offsets = [16, 0], sizes = [16, 16], strides = [1, 1]} : vector<32x16xf32> to vector<16x16xf32>
    %c1_183 = arith.constant 1 : index
    %c0_184 = arith.constant 0 : index
    %c0_185 = arith.constant 0 : index
    %333 = vector.load %arg26[%c1_183, %c0_184, %c0_185] : memref<2x16x3xf32, #tpu.memory_space<vmem>>, vector<1x16x3xf32>
    %334 = vector.shape_cast %333 : vector<1x16x3xf32> to vector<16x3xf32>
    %cst_186 = arith.constant dense<0.000000e+00> : vector<16x3xf32>
    %335 = tpu.matmul %331, %334, %cst_186 {dimension_numbers = #tpu.dot_dimension_numbers<[1], [0], [0], [1], [0, 0, 1, 1], [], []>} : vector<16x16xf32>, vector<16x3xf32>, vector<16x3xf32> -> vector<16x3xf32>
    %c1_187 = arith.constant 1 : index
    %c0_188 = arith.constant 0 : index
    %c0_189 = arith.constant 0 : index
    %336 = vector.load %arg27[%c1_187, %c0_188, %c0_189] : memref<2x16x3xf32, #tpu.memory_space<vmem>>, vector<1x16x3xf32>
    %337 = vector.shape_cast %336 : vector<1x16x3xf32> to vector<16x3xf32>
    %cst_190 = arith.constant dense<0.000000e+00> : vector<16x3xf32>
    %338 = tpu.matmul %332, %337, %cst_190 {dimension_numbers = #tpu.dot_dimension_numbers<[1], [0], [0], [1], [0, 0, 1, 1], [], []>} : vector<16x16xf32>, vector<16x3xf32>, vector<16x3xf32> -> vector<16x3xf32>
    %339 = arith.addf %335, %338 : vector<16x3xf32>
    %c1_191 = arith.constant 1 : index
    %c0_192 = arith.constant 0 : index
    %c0_193 = arith.constant 0 : index
    %340 = vector.load %arg28[%c1_191, %c0_192, %c0_193] : memref<2x128x3xf32, #tpu.memory_space<vmem>>, vector<1x128x3xf32>
    %341 = vector.shape_cast %340 : vector<1x128x3xf32> to vector<128x3xf32>
    %cst_194 = arith.constant dense<0.000000e+00> : vector<16x3xf32>
    %342 = tpu.matmul %322, %341, %cst_194 {dimension_numbers = #tpu.dot_dimension_numbers<[1], [0], [0], [1], [0, 0, 1, 1], [], []>} : vector<16x128xf32>, vector<128x3xf32>, vector<16x3xf32> -> vector<16x3xf32>
    %343 = arith.addf %339, %342 : vector<16x3xf32>
    %cst_195 = arith.constant 2.000000e-01 : f32
    %344 = vector.broadcast %cst_195 : f32 to vector<16x3xf32>
    %345 = arith.mulf %344, %343 : vector<16x3xf32>
    %346 = arith.maximumf %343, %345 : vector<16x3xf32>
    %347 = vector.shape_cast %346 : vector<16x3xf32> to vector<1x16x3xf32>
    %348 = vector.broadcast %347 : vector<1x16x3xf32> to vector<8x16x3xf32>
    %349 = vector.broadcast %65 : vector<8x16x1xf32> to vector<8x16x3xf32>
    %350 = arith.addf %348, %349 : vector<8x16x3xf32>
    %cst_196 = arith.constant dense<0xFF800000> : vector<8x3xf32>
    %351 = vector.multi_reduction <maximumf>, %350, %cst_196 [1] : vector<8x16x3xf32> to vector<8x3xf32>
    %cst_197 = arith.constant 5.000000e-01 : f32
    %352 = vector.broadcast %cst_197 : f32 to vector<8x1xf32>
    %353 = arith.cmpf ogt, %7, %352 : vector<8x1xf32>
    %cst_198 = arith.constant 0.000000e+00 : f32
    %354 = vector.shape_cast %353 : vector<8x1xi1> to vector<8x1xi1>
    %355 = vector.broadcast %354 : vector<8x1xi1> to vector<8x3xi1>
    %356 = vector.broadcast %cst_198 : f32 to vector<8x3xf32>
    %357 = arith.select %355, %351, %356 : vector<8x3xi1>, vector<8x3xf32>
    %cst_199 = arith.constant dense<0.000000e+00> : vector<16x3xf32>
    %358 = tpu.matmul %14, %357, %cst_199 {dimension_numbers = #tpu.dot_dimension_numbers<[1], [0], [0], [1], [0, 0, 1, 1], [], []>} : vector<16x8xf32>, vector<8x3xf32>, vector<16x3xf32> -> vector<16x3xf32>
    %359 = arith.subf %346, %358 : vector<16x3xf32>
    %360 = math.exp %359 : vector<16x3xf32>
    %cst_200 = arith.constant dense<0.000000e+00> : vector<8x3xf32>
    %361 = tpu.matmul %5, %360, %cst_200 {dimension_numbers = #tpu.dot_dimension_numbers<[1], [0], [0], [1], [0, 0, 1, 1], [], []>} : vector<8x16xf32>, vector<16x3xf32>, vector<8x3xf32> -> vector<8x3xf32>
    %cst_201 = arith.constant dense<0.000000e+00> : vector<16x3xf32>
    %362 = tpu.matmul %14, %361, %cst_201 {dimension_numbers = #tpu.dot_dimension_numbers<[1], [0], [0], [1], [0, 0, 1, 1], [], []>} : vector<16x8xf32>, vector<8x3xf32>, vector<16x3xf32> -> vector<16x3xf32>
    %cst_202 = arith.constant 1.000000e-16 : f32
    %363 = vector.broadcast %cst_202 : f32 to vector<16x3xf32>
    %364 = arith.addf %362, %363 : vector<16x3xf32>
    %365 = arith.divf %360, %364 : vector<16x3xf32>
    %c1_203 = arith.constant 1 : index
    %c0_204 = arith.constant 0 : index
    %c0_205 = arith.constant 0 : index
    %366 = vector.load %arg29[%c1_203, %c0_204, %c0_205] : memref<2x16x16xf32, #tpu.memory_space<vmem>>, vector<1x16x16xf32>
    %367 = vector.shape_cast %366 : vector<1x16x16xf32> to vector<16x16xf32>
    %cst_206 = arith.constant dense<0.000000e+00> : vector<16x16xf32>
    %368 = tpu.matmul %332, %367, %cst_206 {dimension_numbers = #tpu.dot_dimension_numbers<[1], [0], [0], [1], [0, 0, 1, 1], [], []>} : vector<16x16xf32>, vector<16x16xf32>, vector<16x16xf32> -> vector<16x16xf32>
    %c1_207 = arith.constant 1 : index
    %c0_208 = arith.constant 0 : index
    %c0_209 = arith.constant 0 : index
    %369 = vector.load %arg30[%c1_207, %c0_208, %c0_209] : memref<2x128x16xf32, #tpu.memory_space<vmem>>, vector<1x128x16xf32>
    %370 = vector.shape_cast %369 : vector<1x128x16xf32> to vector<128x16xf32>
    %cst_210 = arith.constant dense<0.000000e+00> : vector<16x16xf32>
    %371 = tpu.matmul %322, %370, %cst_210 {dimension_numbers = #tpu.dot_dimension_numbers<[1], [0], [0], [1], [0, 0, 1, 1], [], []>} : vector<16x128xf32>, vector<128x16xf32>, vector<16x16xf32> -> vector<16x16xf32>
    %372 = arith.addf %368, %371 : vector<16x16xf32>
    %c1_211 = arith.constant 1 : index
    %c0_212 = arith.constant 0 : index
    %c0_213 = arith.constant 0 : index
    %373 = vector.load %arg31[%c1_211, %c0_212, %c0_213] : memref<2x1x16xf32, #tpu.memory_space<vmem>>, vector<1x1x16xf32>
    %374 = vector.shape_cast %373 : vector<1x1x16xf32> to vector<1x16xf32>
    %375 = vector.broadcast %374 : vector<1x16xf32> to vector<16x16xf32>
    %376 = arith.addf %372, %375 : vector<16x16xf32>
    %cst_214 = arith.constant dense<0.000000e+00> : vector<16x48xf32>
    %377 = tpu.matmul %376, %194, %cst_214 {dimension_numbers = #tpu.dot_dimension_numbers<[1], [0], [0], [1], [0, 0, 1, 1], [], []>} : vector<16x16xf32>, vector<16x48xf32>, vector<16x48xf32> -> vector<16x48xf32>
    %cst_215 = arith.constant dense<0.000000e+00> : vector<16x48xf32>
    %378 = tpu.matmul %365, %195, %cst_215 {dimension_numbers = #tpu.dot_dimension_numbers<[1], [0], [0], [1], [0, 0, 1, 1], [], []>} : vector<16x3xf32>, vector<3x48xf32>, vector<16x48xf32> -> vector<16x48xf32>
    %379 = arith.mulf %377, %378 : vector<16x48xf32>
    %380 = vector.shape_cast %379 : vector<16x48xf32> to vector<1x16x48xf32>
    %381 = vector.broadcast %380 : vector<1x16x48xf32> to vector<8x16x48xf32>
    %382 = vector.broadcast %65 : vector<8x16x1xf32> to vector<8x16x48xf32>
    %383 = arith.addf %381, %382 : vector<8x16x48xf32>
    %cst_216 = arith.constant dense<0xFF800000> : vector<8x48xf32>
    %384 = vector.multi_reduction <maximumf>, %383, %cst_216 [1] : vector<8x16x48xf32> to vector<8x48xf32>
    %cst_217 = arith.constant 5.000000e-01 : f32
    %385 = vector.broadcast %cst_217 : f32 to vector<8x1xf32>
    %386 = arith.cmpf ogt, %7, %385 : vector<8x1xf32>
    %cst_218 = arith.constant 0.000000e+00 : f32
    %387 = vector.shape_cast %386 : vector<8x1xi1> to vector<8x1xi1>
    %388 = vector.broadcast %387 : vector<8x1xi1> to vector<8x48xi1>
    %389 = vector.broadcast %cst_218 : f32 to vector<8x48xf32>
    %390 = arith.select %388, %384, %389 : vector<8x48xi1>, vector<8x48xf32>
    %cst_219 = arith.constant dense<0.000000e+00> : vector<8x48xf32>
    %391 = tpu.matmul %329, %194, %cst_219 {dimension_numbers = #tpu.dot_dimension_numbers<[1], [0], [0], [1], [0, 0, 1, 1], [], []>} : vector<8x16xf32>, vector<16x48xf32>, vector<8x48xf32> -> vector<8x48xf32>
    %392 = arith.addf %390, %391 : vector<8x48xf32>
    %c1_220 = arith.constant 1 : index
    %c0_221 = arith.constant 0 : index
    %c0_222 = arith.constant 0 : index
    %393 = vector.load %arg32[%c1_220, %c0_221, %c0_222] : memref<2x1x48xf32, #tpu.memory_space<vmem>>, vector<1x1x48xf32>
    %394 = vector.shape_cast %393 : vector<1x1x48xf32> to vector<1x48xf32>
    %c1_223 = arith.constant 1 : index
    %c0_224 = arith.constant 0 : index
    %c0_225 = arith.constant 0 : index
    %395 = vector.load %arg33[%c1_223, %c0_224, %c0_225] : memref<2x1x48xf32, #tpu.memory_space<vmem>>, vector<1x1x48xf32>
    %396 = vector.shape_cast %395 : vector<1x1x48xf32> to vector<1x48xf32>
    %cst_226 = arith.constant dense<0.000000e+00> : vector<48xf32>
    %397 = vector.multi_reduction <add>, %392, %cst_226 [0] : vector<8x48xf32> to vector<48xf32>
    %398 = vector.shape_cast %397 : vector<48xf32> to vector<1x48xf32>
    %cst_227 = arith.constant 8.000000e+00 : f32
    %399 = vector.broadcast %cst_227 : f32 to vector<1x48xf32>
    %400 = arith.divf %398, %399 : vector<1x48xf32>
    %401 = vector.broadcast %400 : vector<1x48xf32> to vector<8x48xf32>
    %402 = arith.subf %392, %401 : vector<8x48xf32>
    %403 = arith.mulf %402, %402 : vector<8x48xf32>
    %cst_228 = arith.constant dense<0.000000e+00> : vector<48xf32>
    %404 = vector.multi_reduction <add>, %403, %cst_228 [0] : vector<8x48xf32> to vector<48xf32>
    %405 = vector.shape_cast %404 : vector<48xf32> to vector<1x48xf32>
    %cst_229 = arith.constant 8.000000e+00 : f32
    %406 = vector.broadcast %cst_229 : f32 to vector<1x48xf32>
    %407 = arith.divf %405, %406 : vector<1x48xf32>
    %408 = vector.broadcast %400 : vector<1x48xf32> to vector<8x48xf32>
    %409 = arith.subf %392, %408 : vector<8x48xf32>
    %cst_230 = arith.constant 9.99999974E-6 : f32
    %410 = vector.broadcast %cst_230 : f32 to vector<1x48xf32>
    %411 = arith.addf %407, %410 : vector<1x48xf32>
    %412 = math.rsqrt %411 : vector<1x48xf32>
    %413 = vector.broadcast %412 : vector<1x48xf32> to vector<8x48xf32>
    %414 = arith.mulf %409, %413 : vector<8x48xf32>
    %415 = vector.broadcast %394 : vector<1x48xf32> to vector<8x48xf32>
    %416 = arith.mulf %414, %415 : vector<8x48xf32>
    %417 = vector.broadcast %396 : vector<1x48xf32> to vector<8x48xf32>
    %418 = arith.addf %416, %417 : vector<8x48xf32>
    %cst_231 = arith.constant 0.000000e+00 : f32
    %419 = vector.broadcast %cst_231 : f32 to vector<8x48xf32>
    %420 = arith.maximumf %418, %419 : vector<8x48xf32>
    %c0_232 = arith.constant 0 : index
    %c0_233 = arith.constant 0 : index
    %421 = vector.load %arg34[%c0_232, %c0_233] : memref<48x64xf32, #tpu.memory_space<vmem>>, vector<48x64xf32>
    %cst_234 = arith.constant dense<0.000000e+00> : vector<8x64xf32>
    %422 = tpu.matmul %420, %421, %cst_234 {dimension_numbers = #tpu.dot_dimension_numbers<[1], [0], [0], [1], [0, 0, 1, 1], [], []>} : vector<8x48xf32>, vector<48x64xf32>, vector<8x64xf32> -> vector<8x64xf32>
    %c0_235 = arith.constant 0 : index
    %c0_236 = arith.constant 0 : index
    %423 = vector.load %arg35[%c0_235, %c0_236] : memref<1x64xf32, #tpu.memory_space<vmem>>, vector<1x64xf32>
    %424 = vector.broadcast %423 : vector<1x64xf32> to vector<8x64xf32>
    %425 = arith.addf %422, %424 : vector<8x64xf32>
    %cst_237 = arith.constant 0.000000e+00 : f32
    %426 = vector.broadcast %cst_237 : f32 to vector<8x64xf32>
    %427 = arith.maximumf %425, %426 : vector<8x64xf32>
    %c0_238 = arith.constant 0 : index
    %c0_239 = arith.constant 0 : index
    %428 = vector.load %arg36[%c0_238, %c0_239] : memref<64x4xf32, #tpu.memory_space<vmem>>, vector<64x4xf32>
    %cst_240 = arith.constant dense<0.000000e+00> : vector<8x4xf32>
    %429 = tpu.matmul %427, %428, %cst_240 {dimension_numbers = #tpu.dot_dimension_numbers<[1], [0], [0], [1], [0, 0, 1, 1], [], []>} : vector<8x64xf32>, vector<64x4xf32>, vector<8x4xf32> -> vector<8x4xf32>
    %c0_241 = arith.constant 0 : index
    %c0_242 = arith.constant 0 : index
    %430 = vector.load %arg37[%c0_241, %c0_242] : memref<1x4xf32, #tpu.memory_space<vmem>>, vector<1x4xf32>
    %431 = vector.broadcast %430 : vector<1x4xf32> to vector<8x4xf32>
    %432 = arith.addf %429, %431 : vector<8x4xf32>
    %433 = arith.negf %432 : vector<8x4xf32>
    %434 = math.exp %433 : vector<8x4xf32>
    %cst_243 = arith.constant 1.000000e+00 : f32
    %435 = vector.broadcast %cst_243 : f32 to vector<8x4xf32>
    %436 = arith.addf %435, %434 : vector<8x4xf32>
    %437 = arith.divf %435, %436 : vector<8x4xf32>
    %438 = tpu.iota {dimensions = array<i32: 1>} : vector<4x128xi32>
    %439 = tpu.iota {dimensions = array<i32: 0>} : vector<4x128xi32>
    %c0_i32_244 = arith.constant 0 : i32
    %440 = vector.broadcast %c0_i32_244 : i32 to vector<4x128xi32>
    %441 = arith.addi %439, %440 : vector<4x128xi32>
    %442 = arith.cmpi eq, %438, %441 : vector<4x128xi32>
    %443 = arith.extui %442 : vector<4x128xi1> to vector<4x128xi32>
    %444 = arith.sitofp %443 : vector<4x128xi32> to vector<4x128xf32>
    %cst_245 = arith.constant dense<0.000000e+00> : vector<8x128xf32>
    %445 = tpu.matmul %316, %444, %cst_245 {dimension_numbers = #tpu.dot_dimension_numbers<[1], [0], [0], [1], [0, 0, 1, 1], [], []>} : vector<8x4xf32>, vector<4x128xf32>, vector<8x128xf32> -> vector<8x128xf32>
    %446 = tpu.iota {dimensions = array<i32: 1>} : vector<4x128xi32>
    %447 = tpu.iota {dimensions = array<i32: 0>} : vector<4x128xi32>
    %c4_i32_246 = arith.constant 4 : i32
    %448 = vector.broadcast %c4_i32_246 : i32 to vector<4x128xi32>
    %449 = arith.addi %447, %448 : vector<4x128xi32>
    %450 = arith.cmpi eq, %446, %449 : vector<4x128xi32>
    %451 = arith.extui %450 : vector<4x128xi1> to vector<4x128xi32>
    %452 = arith.sitofp %451 : vector<4x128xi32> to vector<4x128xf32>
    %cst_247 = arith.constant dense<0.000000e+00> : vector<8x128xf32>
    %453 = tpu.matmul %437, %452, %cst_247 {dimension_numbers = #tpu.dot_dimension_numbers<[1], [0], [0], [1], [0, 0, 1, 1], [], []>} : vector<8x4xf32>, vector<4x128xf32>, vector<8x128xf32> -> vector<8x128xf32>
    %454 = arith.addf %445, %453 : vector<8x128xf32>
    %455 = tpu.iota {dimensions = array<i32: 1>} : vector<48x128xi32>
    %456 = tpu.iota {dimensions = array<i32: 0>} : vector<48x128xi32>
    %c8_i32 = arith.constant 8 : i32
    %457 = vector.broadcast %c8_i32 : i32 to vector<48x128xi32>
    %458 = arith.addi %456, %457 : vector<48x128xi32>
    %459 = arith.cmpi eq, %455, %458 : vector<48x128xi32>
    %460 = arith.extui %459 : vector<48x128xi1> to vector<48x128xi32>
    %461 = arith.sitofp %460 : vector<48x128xi32> to vector<48x128xf32>
    %cst_248 = arith.constant dense<0.000000e+00> : vector<8x128xf32>
    %462 = tpu.matmul %299, %461, %cst_248 {dimension_numbers = #tpu.dot_dimension_numbers<[1], [0], [0], [1], [0, 0, 1, 1], [], []>} : vector<8x48xf32>, vector<48x128xf32>, vector<8x128xf32> -> vector<8x128xf32>
    %463 = arith.addf %454, %462 : vector<8x128xf32>
    %464 = tpu.iota {dimensions = array<i32: 1>} : vector<48x128xi32>
    %465 = tpu.iota {dimensions = array<i32: 0>} : vector<48x128xi32>
    %c56_i32 = arith.constant 56 : i32
    %466 = vector.broadcast %c56_i32 : i32 to vector<48x128xi32>
    %467 = arith.addi %465, %466 : vector<48x128xi32>
    %468 = arith.cmpi eq, %464, %467 : vector<48x128xi32>
    %469 = arith.extui %468 : vector<48x128xi1> to vector<48x128xi32>
    %470 = arith.sitofp %469 : vector<48x128xi32> to vector<48x128xf32>
    %cst_249 = arith.constant dense<0.000000e+00> : vector<8x128xf32>
    %471 = tpu.matmul %420, %470, %cst_249 {dimension_numbers = #tpu.dot_dimension_numbers<[1], [0], [0], [1], [0, 0, 1, 1], [], []>} : vector<8x48xf32>, vector<48x128xf32>, vector<8x128xf32> -> vector<8x128xf32>
    %472 = arith.addf %463, %471 : vector<8x128xf32>
    %c0_250 = arith.constant 0 : index
    %c0_251 = arith.constant 0 : index
    %473 = vector.load %arg40[%c0_250, %c0_251] : memref<8x128xf32, #tpu.memory_space<vmem>>, vector<8x128xf32>
    tpu.vector_store %arg40[%c0_250, %c0_251], %472 {strides = array<i32>} : memref<8x128xf32, #tpu.memory_space<vmem>>, vector<8x128xf32>,
    return
  }
  func.func @transform_0(%arg0: i32) -> (i32, i32) {
    %c0_i32 = arith.constant 0 : i32
    %c0_i32_0 = arith.constant 0 : i32
    %c0_i32_1 = arith.constant 0 : i32
    return %c0_i32, %c0_i32_0 : i32, i32
  }
  func.func @transform_1(%arg0: i32) -> (i32, i32) {
    %c0_i32 = arith.constant 0 : i32
    %c0_i32_0 = arith.constant 0 : i32
    %c0_i32_1 = arith.constant 0 : i32
    return %c0_i32, %c0_i32_0 : i32, i32
  }
  func.func @transform_2(%arg0: i32) -> (i32, i32) {
    %c0_i32 = arith.constant 0 : i32
    %c0_i32_0 = arith.constant 0 : i32
    %c0_i32_1 = arith.constant 0 : i32
    return %c0_i32, %c0_i32_0 : i32, i32
  }
  func.func @transform_3(%arg0: i32) -> (i32, i32) {
    %c0_i32 = arith.constant 0 : i32
    %c0_i32_0 = arith.constant 0 : i32
    %c0_i32_1 = arith.constant 0 : i32
    return %c0_i32, %c0_i32_0 : i32, i32
  }
  func.func @transform_4(%arg0: i32) -> (i32, i32) {
    %c0_i32 = arith.constant 0 : i32
    %c0_i32_0 = arith.constant 0 : i32
    %c0_i32_1 = arith.constant 0 : i32
    return %c0_i32, %c0_i32_0 : i32, i32
  }
  func.func @transform_5(%arg0: i32) -> (i32, i32) {
    %c0_i32 = arith.constant 0 : i32
    %c0_i32_0 = arith.constant 0 : i32
    %c0_i32_1 = arith.constant 0 : i32
    return %c0_i32, %c0_i32_0 : i32, i32
  }
  func.func @transform_6(%arg0: i32) -> (i32, i32) {
    %c0_i32 = arith.constant 0 : i32
    %c0_i32_0 = arith.constant 0 : i32
    %c0_i32_1 = arith.constant 0 : i32
    return %c0_i32, %c0_i32_0 : i32, i32
  }
  func.func @transform_7(%arg0: i32) -> (i32, i32) {
    %c0_i32 = arith.constant 0 : i32
    %c0_i32_0 = arith.constant 0 : i32
    %c0_i32_1 = arith.constant 0 : i32
    return %c0_i32, %c0_i32_0 : i32, i32
  }
  func.func @transform_8(%arg0: i32) -> (i32, i32) {
    %c0_i32 = arith.constant 0 : i32
    %c0_i32_0 = arith.constant 0 : i32
    %c0_i32_1 = arith.constant 0 : i32
    return %c0_i32, %c0_i32_0 : i32, i32
  }
  func.func @transform_9(%arg0: i32) -> (i32, i32) {
    %c0_i32 = arith.constant 0 : i32
    %c0_i32_0 = arith.constant 0 : i32
    %c0_i32_1 = arith.constant 0 : i32
    return %c0_i32, %c0_i32_0 : i32, i32
  }
  func.func @transform_10(%arg0: i32) -> (i32, i32) {
    %c0_i32 = arith.constant 0 : i32
    %c0_i32_0 = arith.constant 0 : i32
    %c0_i32_1 = arith.constant 0 : i32
    return %c0_i32, %c0_i32_0 : i32, i32
  }
  func.func @transform_11(%arg0: i32) -> (i32, i32) {
    %c0_i32 = arith.constant 0 : i32
    %c0_i32_0 = arith.constant 0 : i32
    %c0_i32_1 = arith.constant 0 : i32
    return %c0_i32, %c0_i32_0 : i32, i32
  }
  func.func @transform_12(%arg0: i32) -> (i32, i32) {
    %c0_i32 = arith.constant 0 : i32
    %c0_i32_0 = arith.constant 0 : i32
    %c0_i32_1 = arith.constant 0 : i32
    return %c0_i32, %c0_i32_0 : i32, i32
  }
  func.func @transform_13(%arg0: i32) -> (i32, i32) {
    %c0_i32 = arith.constant 0 : i32
    %c0_i32_0 = arith.constant 0 : i32
    %c0_i32_1 = arith.constant 0 : i32
    return %c0_i32, %c0_i32_0 : i32, i32
  }
  func.func @transform_14(%arg0: i32) -> (i32, i32) {
    %c0_i32 = arith.constant 0 : i32
    %c0_i32_0 = arith.constant 0 : i32
    %c0_i32_1 = arith.constant 0 : i32
    return %c0_i32, %c0_i32_0 : i32, i32
  }
  func.func @transform_15(%arg0: i32) -> (i32, i32) {
    %c0_i32 = arith.constant 0 : i32
    %c0_i32_0 = arith.constant 0 : i32
    %c0_i32_1 = arith.constant 0 : i32
    return %c0_i32, %c0_i32_0 : i32, i32
  }
  func.func @transform_16(%arg0: i32) -> (i32, i32) {
    %c0_i32 = arith.constant 0 : i32
    %c0_i32_0 = arith.constant 0 : i32
    %c0_i32_1 = arith.constant 0 : i32
    return %c0_i32, %c0_i32_0 : i32, i32
  }
  func.func @transform_17(%arg0: i32) -> (i32, i32) {
    %c0_i32 = arith.constant 0 : i32
    %c0_i32_0 = arith.constant 0 : i32
    %c0_i32_1 = arith.constant 0 : i32
    return %c0_i32, %c0_i32_0 : i32, i32
  }
  func.func @transform_18(%arg0: i32) -> (i32, i32) {
    %c0_i32 = arith.constant 0 : i32
    %c0_i32_0 = arith.constant 0 : i32
    %c0_i32_1 = arith.constant 0 : i32
    return %c0_i32, %c0_i32_0 : i32, i32
  }
  func.func @transform_19(%arg0: i32) -> (i32, i32) {
    %c0_i32 = arith.constant 0 : i32
    %c0_i32_0 = arith.constant 0 : i32
    %c0_i32_1 = arith.constant 0 : i32
    return %c0_i32, %c0_i32_0 : i32, i32
  }
  func.func @transform_20(%arg0: i32) -> (i32, i32) {
    %c0_i32 = arith.constant 0 : i32
    %c0_i32_0 = arith.constant 0 : i32
    %c0_i32_1 = arith.constant 0 : i32
    return %c0_i32, %c0_i32_0 : i32, i32
  }
  func.func @transform_21(%arg0: i32) -> (i32, i32) {
    %c0_i32 = arith.constant 0 : i32
    %c0_i32_0 = arith.constant 0 : i32
    %c0_i32_1 = arith.constant 0 : i32
    return %c0_i32, %c0_i32_0 : i32, i32
  }
  func.func @transform_22(%arg0: i32) -> (i32, i32, i32) {
    %c0_i32 = arith.constant 0 : i32
    %c0_i32_0 = arith.constant 0 : i32
    %c0_i32_1 = arith.constant 0 : i32
    %c0_i32_2 = arith.constant 0 : i32
    return %c0_i32, %c0_i32_0, %c0_i32_1 : i32, i32, i32
  }
  func.func @transform_23(%arg0: i32) -> (i32, i32, i32) {
    %c0_i32 = arith.constant 0 : i32
    %c0_i32_0 = arith.constant 0 : i32
    %c0_i32_1 = arith.constant 0 : i32
    %c0_i32_2 = arith.constant 0 : i32
    return %c0_i32, %c0_i32_0, %c0_i32_1 : i32, i32, i32
  }
  func.func @transform_24(%arg0: i32) -> (i32, i32, i32) {
    %c0_i32 = arith.constant 0 : i32
    %c0_i32_0 = arith.constant 0 : i32
    %c0_i32_1 = arith.constant 0 : i32
    %c0_i32_2 = arith.constant 0 : i32
    return %c0_i32, %c0_i32_0, %c0_i32_1 : i32, i32, i32
  }
  func.func @transform_25(%arg0: i32) -> (i32, i32, i32) {
    %c0_i32 = arith.constant 0 : i32
    %c0_i32_0 = arith.constant 0 : i32
    %c0_i32_1 = arith.constant 0 : i32
    %c0_i32_2 = arith.constant 0 : i32
    return %c0_i32, %c0_i32_0, %c0_i32_1 : i32, i32, i32
  }
  func.func @transform_26(%arg0: i32) -> (i32, i32, i32) {
    %c0_i32 = arith.constant 0 : i32
    %c0_i32_0 = arith.constant 0 : i32
    %c0_i32_1 = arith.constant 0 : i32
    %c0_i32_2 = arith.constant 0 : i32
    return %c0_i32, %c0_i32_0, %c0_i32_1 : i32, i32, i32
  }
  func.func @transform_27(%arg0: i32) -> (i32, i32, i32) {
    %c0_i32 = arith.constant 0 : i32
    %c0_i32_0 = arith.constant 0 : i32
    %c0_i32_1 = arith.constant 0 : i32
    %c0_i32_2 = arith.constant 0 : i32
    return %c0_i32, %c0_i32_0, %c0_i32_1 : i32, i32, i32
  }
  func.func @transform_28(%arg0: i32) -> (i32, i32, i32) {
    %c0_i32 = arith.constant 0 : i32
    %c0_i32_0 = arith.constant 0 : i32
    %c0_i32_1 = arith.constant 0 : i32
    %c0_i32_2 = arith.constant 0 : i32
    return %c0_i32, %c0_i32_0, %c0_i32_1 : i32, i32, i32
  }
  func.func @transform_29(%arg0: i32) -> (i32, i32, i32) {
    %c0_i32 = arith.constant 0 : i32
    %c0_i32_0 = arith.constant 0 : i32
    %c0_i32_1 = arith.constant 0 : i32
    %c0_i32_2 = arith.constant 0 : i32
    return %c0_i32, %c0_i32_0, %c0_i32_1 : i32, i32, i32
  }
  func.func @transform_30(%arg0: i32) -> (i32, i32, i32) {
    %c0_i32 = arith.constant 0 : i32
    %c0_i32_0 = arith.constant 0 : i32
    %c0_i32_1 = arith.constant 0 : i32
    %c0_i32_2 = arith.constant 0 : i32
    return %c0_i32, %c0_i32_0, %c0_i32_1 : i32, i32, i32
  }
  func.func @transform_31(%arg0: i32) -> (i32, i32, i32) {
    %c0_i32 = arith.constant 0 : i32
    %c0_i32_0 = arith.constant 0 : i32
    %c0_i32_1 = arith.constant 0 : i32
    %c0_i32_2 = arith.constant 0 : i32
    return %c0_i32, %c0_i32_0, %c0_i32_1 : i32, i32, i32
  }
  func.func @transform_32(%arg0: i32) -> (i32, i32, i32) {
    %c0_i32 = arith.constant 0 : i32
    %c0_i32_0 = arith.constant 0 : i32
    %c0_i32_1 = arith.constant 0 : i32
    %c0_i32_2 = arith.constant 0 : i32
    return %c0_i32, %c0_i32_0, %c0_i32_1 : i32, i32, i32
  }
  func.func @transform_33(%arg0: i32) -> (i32, i32) {
    %c0_i32 = arith.constant 0 : i32
    %c0_i32_0 = arith.constant 0 : i32
    %c0_i32_1 = arith.constant 0 : i32
    return %c0_i32, %c0_i32_0 : i32, i32
  }
  func.func @transform_34(%arg0: i32) -> (i32, i32) {
    %c0_i32 = arith.constant 0 : i32
    %c0_i32_0 = arith.constant 0 : i32
    %c0_i32_1 = arith.constant 0 : i32
    return %c0_i32, %c0_i32_0 : i32, i32
  }
  func.func @transform_35(%arg0: i32) -> (i32, i32) {
    %c0_i32 = arith.constant 0 : i32
    %c0_i32_0 = arith.constant 0 : i32
    %c0_i32_1 = arith.constant 0 : i32
    return %c0_i32, %c0_i32_0 : i32, i32
  }
  func.func @transform_36(%arg0: i32) -> (i32, i32) {
    %c0_i32 = arith.constant 0 : i32
    %c0_i32_0 = arith.constant 0 : i32
    %c0_i32_1 = arith.constant 0 : i32
    return %c0_i32, %c0_i32_0 : i32, i32
  }
  func.func @transform_37(%arg0: i32) -> (i32, i32) {
    %c0_i32 = arith.constant 0 : i32
    %c0_i32_0 = arith.constant 0 : i32
    %c0_i32_1 = arith.constant 0 : i32
    return %c0_i32, %c0_i32_0 : i32, i32
  }
  func.func @transform_38(%arg0: i32) -> (i32, i32) {
    %c0_i32 = arith.constant 0 : i32
    %c0_i32_0 = arith.constant 0 : i32
    %c0_i32_1 = arith.constant 0 : i32
    return %c0_i32, %c0_i32_0 : i32, i32
  }
  func.func @transform_39(%arg0: i32) -> (i32, i32) {
    %c0_i32 = arith.constant 0 : i32
    %c0_i32_0 = arith.constant 0 : i32
    %c0_i32_1 = arith.constant 0 : i32
    return %c0_i32, %c0_i32_0 : i32, i32
  }
}

</mosaic_0001>

<llo_original>
// kernel: tile.9
$region0: #{tile.9}
  %s0 = inlined_call_operand.vmem [shape: f32[16,3,16], index: 0, kind: input, shape index: {}]
  %s1 = inlined_call_operand.vmem [shape: f32[16,48], index: 1, kind: output, shape index: {}]
  $region1: #{tile.9} parent=0
    #allocation0 [shape = 'u8[65536]{0}', space=vmem, size = 0x10000, scoped, tag = 'scoped mem for input reshape']
    %s3 = ssub.s32 16, 1
    %s4 = scalar_lea.vmem %s0, 60
    %v5 = vld [vmem:[%s4] sm:%s3]
    %s6 = scalar_lea.vmem [#allocation0], 120
    %7 = vst [vmem:[%s6] sm:%s3] %v5
    %s8 = scalar_lea.vmem %s0, 56
    %v9 = vld [vmem:[%s8] sm:%s3]
    %s10 = scalar_lea.vmem [#allocation0], 112
    %11 = vst [vmem:[%s10] sm:%s3] %v9
    %s12 = scalar_lea.vmem %s0, 52
    %v13 = vld [vmem:[%s12] sm:%s3]
    %s14 = scalar_lea.vmem [#allocation0], 104
    %15 = vst [vmem:[%s14] sm:%s3] %v13
    %s16 = scalar_lea.vmem %s0, 48
    %v17 = vld [vmem:[%s16] sm:%s3]
    %s18 = scalar_lea.vmem [#allocation0], 96
    %19 = vst [vmem:[%s18] sm:%s3] %v17
    %s20 = scalar_lea.vmem %s0, 44
    %v21 = vld [vmem:[%s20] sm:%s3]
    %s22 = scalar_lea.vmem [#allocation0], 88
    %23 = vst [vmem:[%s22] sm:%s3] %v21
    %s24 = scalar_lea.vmem %s0, 40
    %v25 = vld [vmem:[%s24] sm:%s3]
    %s26 = scalar_lea.vmem [#allocation0], 80
    %27 = vst [vmem:[%s26] sm:%s3] %v25
    %s28 = scalar_lea.vmem %s0, 36
    %v29 = vld [vmem:[%s28] sm:%s3]
    %s30 = scalar_lea.vmem [#allocation0], 72
    %31 = vst [vmem:[%s30] sm:%s3] %v29
    %s32 = scalar_lea.vmem %s0, 32
    %v33 = vld [vmem:[%s32] sm:%s3]
    %s34 = scalar_lea.vmem [#allocation0], 64
    %35 = vst [vmem:[%s34] sm:%s3] %v33
    %s36 = scalar_lea.vmem %s0, 28
    %v37 = vld [vmem:[%s36] sm:%s3]
    %s38 = scalar_lea.vmem [#allocation0], 56
    %39 = vst [vmem:[%s38] sm:%s3] %v37
    %s40 = scalar_lea.vmem %s0, 24
    %v41 = vld [vmem:[%s40] sm:%s3]
    %s42 = scalar_lea.vmem [#allocation0], 48
    %43 = vst [vmem:[%s42] sm:%s3] %v41
    %s44 = scalar_lea.vmem %s0, 20
    %v45 = vld [vmem:[%s44] sm:%s3]
    %s46 = scalar_lea.vmem [#allocation0], 40
    %47 = vst [vmem:[%s46] sm:%s3] %v45
    %s48 = scalar_lea.vmem %s0, 16
    %v49 = vld [vmem:[%s48] sm:%s3]
    %s50 = scalar_lea.vmem [#allocation0], 32
    %51 = vst [vmem:[%s50] sm:%s3] %v49
    %s52 = scalar_lea.vmem %s0, 12
    %v53 = vld [vmem:[%s52] sm:%s3]
    %s54 = scalar_lea.vmem [#allocation0], 24
    %55 = vst [vmem:[%s54] sm:%s3] %v53
    %s56 = scalar_lea.vmem %s0, 8
    %v57 = vld [vmem:[%s56] sm:%s3]
    %s58 = scalar_lea.vmem [#allocation0], 16
    %59 = vst [vmem:[%s58] sm:%s3] %v57
    %s60 = scalar_lea.vmem %s0, 4
    %v61 = vld [vmem:[%s60] sm:%s3]
    %s62 = scalar_lea.vmem [#allocation0], 8
    %63 = vst [vmem:[%s62] sm:%s3] %v61
    %v64 = vld [vmem:[%s0] sm:%s3]
    %65 = vst [vmem:[#allocation0] sm:%s3] %v64
    %v66 = vld [vmem:[#allocation0] ss:$8 sm:$0xf]
    %v67 = vld [vmem:[#allocation0] ss:$8 sm:$0xf0]
    %vm68 = vcmask 1047556
    %v69 = vsel %vm68, %v67, %v66
    %vm70 = vcmask 130048
    %71 = vst.msk [vmem:[%s1] sm:$0xff] %vm70, %v69
    %s72 = scalar_lea.vmem [#allocation0], 64
    %v73 = vld [vmem:[%s72] ss:$8 sm:$0xf]
    %s74 = scalar_lea.vmem [#allocation0], 64
    %v75 = vld [vmem:[%s74] ss:$8 sm:$0xf0]
    %vm76 = vcmask 1047556
    %v77 = vsel %vm76, %v75, %v73
    %vm78 = vcmask 130048
    %s79 = scalar_lea.vmem %s1, 8
    %80 = vst.msk [vmem:[%s79] sm:$0xff] %vm78, %v77
    %s81 = scalar_lea.vmem [#allocation0], 2
    %v82 = vld [vmem:[%s81] ss:$8 sm:$0xf]
    %s83 = scalar_lea.vmem [#allocation0], 2
    %v84 = vld [vmem:[%s83] ss:$8 sm:$0xf0]
    %vm85 = vcmask 1047556
    %v86 = vsel %vm85, %v84, %v82
    %87 = vrot.lane.b32.xlu0 %v86, 32
    %v88 = vpop.permute.xlu0 %87
    %vm89 = vcmask 392448
    %90 = vst.msk [vmem:[%s1] sm:$0xff] %vm89, %v88
    %s91 = scalar_lea.vmem [#allocation0], 66
    %v92 = vld [vmem:[%s91] ss:$8 sm:$0xf]
    %s93 = scalar_lea.vmem [#allocation0], 66
    %v94 = vld [vmem:[%s93] ss:$8 sm:$0xf0]
    %vm95 = vcmask 1047556
    %v96 = vsel %vm95, %v94, %v92
    %97 = vrot.lane.b32.xlu0 %v96, 32
    %v98 = vpop.permute.xlu0 %97
    %vm99 = vcmask 392448
    %s100 = scalar_lea.vmem %s1, 8
    %101 = vst.msk [vmem:[%s100] sm:$0xff] %vm99, %v98
    %s102 = scalar_lea.vmem [#allocation0], 1
    %v103 = vld [vmem:[%s102] ss:$8 sm:$0xf]
    %s104 = scalar_lea.vmem [#allocation0], 1
    %v105 = vld [vmem:[%s104] ss:$8 sm:$0xf0]
    %vm106 = vcmask 1047556
    %v107 = vsel %vm106, %v105, %v103
    %108 = vrot.lane.b32.xlu0 %v107, 16
    %v109 = vpop.permute.xlu0 %108
    %vm110 = vcmask 261248
    %111 = vst.msk [vmem:[%s1] sm:$0xff] %vm110, %v109
    %s112 = scalar_lea.vmem [#allocation0], 65
    %v113 = vld [vmem:[%s112] ss:$8 sm:$0xf]
    %s114 = scalar_lea.vmem [#allocation0], 65
    %v115 = vld [vmem:[%s114] ss:$8 sm:$0xf0]
    %vm116 = vcmask 1047556
    %v117 = vsel %vm116, %v115, %v113
    %118 = vrot.lane.b32.xlu0 %v117, 16
    %v119 = vpop.permute.xlu0 %118
    %vm120 = vcmask 261248
    %s121 = scalar_lea.vmem %s1, 8
    %122 = vst.msk [vmem:[%s121] sm:$0xff] %vm120, %v119

// kernel: traffic_representation_net.1
$region0: #{traffic_representation_net.1}
  #allocation0 [shape = 'u32[]', space=smem, size = 0x4, offset = 0x4, fixed_abs, tag = 'smem constant byte address 0x4 - core index']
  #allocation1 [shape = 'u32[72,128]{1,0:T(1,128)}', space=vmem, size = 0x9000, scoped, tag = 'internal scratch']
  %s0 = inlined_call_operand.smem [shape: u32[40], index: -1, kind: input, shape index: {}]
  %s1 = sld [smem:[%s0]]
  %s2 = scalar_lea.smem %s0, 1
  %s3 = sld [smem:[%s2]]
  %s4 = scalar_lea.smem %s0, 2
  %s5 = sld [smem:[%s4]]
  %s6 = scalar_lea.smem %s0, 3
  %s7 = sld [smem:[%s6]]
  %s8 = scalar_lea.smem %s0, 4
  %s9 = sld [smem:[%s8]]
  %s10 = scalar_lea.smem %s0, 5
  %s11 = sld [smem:[%s10]]
  %s12 = scalar_lea.smem %s0, 6
  %s13 = sld [smem:[%s12]]
  %s14 = scalar_lea.smem %s0, 7
  %s15 = sld [smem:[%s14]]
  %s16 = scalar_lea.smem %s0, 8
  %s17 = sld [smem:[%s16]]
  %s18 = scalar_lea.smem %s0, 9
  %s19 = sld [smem:[%s18]]
  %s20 = scalar_lea.smem %s0, 10
  %s21 = sld [smem:[%s20]]
  %s22 = scalar_lea.smem %s0, 11
  %s23 = sld [smem:[%s22]]
  %s24 = scalar_lea.smem %s0, 12
  %s25 = sld [smem:[%s24]]
  %s26 = scalar_lea.smem %s0, 13
  %s27 = sld [smem:[%s26]]
  %s28 = scalar_lea.smem %s0, 14
  %s29 = sld [smem:[%s28]]
  %s30 = scalar_lea.smem %s0, 15
  %s31 = sld [smem:[%s30]]
  %s32 = scalar_lea.smem %s0, 16
  %s33 = sld [smem:[%s32]]
  %s34 = scalar_lea.smem %s0, 17
  %s35 = sld [smem:[%s34]]
  %s36 = scalar_lea.smem %s0, 18
  %s37 = sld [smem:[%s36]]
  %s38 = scalar_lea.smem %s0, 19
  %s39 = sld [smem:[%s38]]
  %s40 = scalar_lea.smem %s0, 20
  %s41 = sld [smem:[%s40]]
  %s42 = scalar_lea.smem %s0, 21
  %s43 = sld [smem:[%s42]]
  %s44 = scalar_lea.smem %s0, 22
  %s45 = sld [smem:[%s44]]
  %s46 = scalar_lea.smem %s0, 23
  %s47 = sld [smem:[%s46]]
  %s48 = scalar_lea.smem %s0, 24
  %s49 = sld [smem:[%s48]]
  %s50 = scalar_lea.smem %s0, 25
  %s51 = sld [smem:[%s50]]
  %s52 = scalar_lea.smem %s0, 26
  %s53 = sld [smem:[%s52]]
  %s54 = scalar_lea.smem %s0, 27
  %s55 = sld [smem:[%s54]]
  %s56 = scalar_lea.smem %s0, 28
  %s57 = sld [smem:[%s56]]
  %s58 = scalar_lea.smem %s0, 29
  %s59 = sld [smem:[%s58]]
  %s60 = scalar_lea.smem %s0, 30
  %s61 = sld [smem:[%s60]]
  %s62 = scalar_lea.smem %s0, 31
  %s63 = sld [smem:[%s62]]
  %s64 = scalar_lea.smem %s0, 32
  %s65 = sld [smem:[%s64]]
  %s66 = scalar_lea.smem %s0, 33
  %s67 = sld [smem:[%s66]]
  %s68 = scalar_lea.smem %s0, 34
  %s69 = sld [smem:[%s68]]
  %s70 = scalar_lea.smem %s0, 35
  %s71 = sld [smem:[%s70]]
  %s72 = scalar_lea.smem %s0, 36
  %s73 = sld [smem:[%s72]]
  %s74 = scalar_lea.smem %s0, 37
  %s75 = sld [smem:[%s74]]
  %s76 = scalar_lea.smem %s0, 38
  %s77 = sld [smem:[%s76]]
  %s78 = scalar_lea.smem %s0, 39
  %s79 = sld [smem:[%s78]]
  %s80 = sld [smem:[#allocation0]]
  $region166: #{traffic_representation_net.1} parent=0
    _
  %s82 = ssub.s32 1, %s80
  %s83 = scalar_select 0, %s82, %s80
  // Predicated region
  $region2: #{traffic_representation_net.1} parent=0 // pred_check
    _
  $region3: #{traffic_representation_net.1} parent=0 // pred_check_branch
    %85 = sbr.rel (0) target = $region5
  $region4: #{traffic_representation_net.1} parent=0 // pred_region
    _
  $region5: #{traffic_representation_net.1} parent=0 // pred_fallthru
    _
  // Predicated region
  $region6: #{traffic_representation_net.1} parent=0 // pred_check
    _
  $region7: #{traffic_representation_net.1} parent=0 // pred_check_branch
    %87 = sbr.rel (0) target = $region9
  $region8: #{traffic_representation_net.1} parent=0 // pred_region
    _
  $region9: #{traffic_representation_net.1} parent=0 // pred_fallthru
    _
  // Predicated region
  $region10: #{traffic_representation_net.1} parent=0 // pred_check
    _
  $region11: #{traffic_representation_net.1} parent=0 // pred_check_branch
    %89 = sbr.rel (0) target = $region13
  $region12: #{traffic_representation_net.1} parent=0 // pred_region
    _
  $region13: #{traffic_representation_net.1} parent=0 // pred_fallthru
    _
  // Predicated region
  $region14: #{traffic_representation_net.1} parent=0 // pred_check
    _
  $region15: #{traffic_representation_net.1} parent=0 // pred_check_branch
    %91 = sbr.rel (0) target = $region17
  $region16: #{traffic_representation_net.1} parent=0 // pred_region
    _
  $region17: #{traffic_representation_net.1} parent=0 // pred_fallthru
    _
  // Predicated region
  $region18: #{traffic_representation_net.1} parent=0 // pred_check
    _
  $region19: #{traffic_representation_net.1} parent=0 // pred_check_branch
    %93 = sbr.rel (0) target = $region21
  $region20: #{traffic_representation_net.1} parent=0 // pred_region
    _
  $region21: #{traffic_representation_net.1} parent=0 // pred_fallthru
    _
  // Predicated region
  $region22: #{traffic_representation_net.1} parent=0 // pred_check
    _
  $region23: #{traffic_representation_net.1} parent=0 // pred_check_branch
    %95 = sbr.rel (0) target = $region25
  $region24: #{traffic_representation_net.1} parent=0 // pred_region
    _
  $region25: #{traffic_representation_net.1} parent=0 // pred_fallthru
    _
  // Predicated region
  $region26: #{traffic_representation_net.1} parent=0 // pred_check
    _
  $region27: #{traffic_representation_net.1} parent=0 // pred_check_branch
    %97 = sbr.rel (0) target = $region29
  $region28: #{traffic_representation_net.1} parent=0 // pred_region
    _
  $region29: #{traffic_representation_net.1} parent=0 // pred_fallthru
    _
  // Predicated region
  $region30: #{traffic_representation_net.1} parent=0 // pred_check
    _
  $region31: #{traffic_representation_net.1} parent=0 // pred_check_branch
    %99 = sbr.rel (0) target = $region33
  $region32: #{traffic_representation_net.1} parent=0 // pred_region
    _
  $region33: #{traffic_representation_net.1} parent=0 // pred_fallthru
    _
  // Predicated region
  $region34: #{traffic_representation_net.1} parent=0 // pred_check
    _
  $region35: #{traffic_representation_net.1} parent=0 // pred_check_branch
    %101 = sbr.rel (0) target = $region37
  $region36: #{traffic_representation_net.1} parent=0 // pred_region
    _
  $region37: #{traffic_representation_net.1} parent=0 // pred_fallthru
    _
  // Predicated region
  $region38: #{traffic_representation_net.1} parent=0 // pred_check
    _
  $region39: #{traffic_representation_net.1} parent=0 // pred_check_branch
    %103 = sbr.rel (0) target = $region41
  $region40: #{traffic_representation_net.1} parent=0 // pred_region
    _
  $region41: #{traffic_representation_net.1} parent=0 // pred_fallthru
    _
  // Predicated region
  $region42: #{traffic_representation_net.1} parent=0 // pred_check
    _
  $region43: #{traffic_representation_net.1} parent=0 // pred_check_branch
    %105 = sbr.rel (0) target = $region45
  $region44: #{traffic_representation_net.1} parent=0 // pred_region
    _
  $region45: #{traffic_representation_net.1} parent=0 // pred_fallthru
    _
  // Predicated region
  $region46: #{traffic_representation_net.1} parent=0 // pred_check
    _
  $region47: #{traffic_representation_net.1} parent=0 // pred_check_branch
    %107 = sbr.rel (0) target = $region49
  $region48: #{traffic_representation_net.1} parent=0 // pred_region
    _
  $region49: #{traffic_representation_net.1} parent=0 // pred_fallthru
    _
  // Predicated region
  $region50: #{traffic_representation_net.1} parent=0 // pred_check
    _
  $region51: #{traffic_representation_net.1} parent=0 // pred_check_branch
    %109 = sbr.rel (0) target = $region53
  $region52: #{traffic_representation_net.1} parent=0 // pred_region
    _
  $region53: #{traffic_representation_net.1} parent=0 // pred_fallthru
    _
  // Predicated region
  $region54: #{traffic_representation_net.1} parent=0 // pred_check
    _
  $region55: #{traffic_representation_net.1} parent=0 // pred_check_branch
    %111 = sbr.rel (0) target = $region57
  $region56: #{traffic_representation_net.1} parent=0 // pred_region
    _
  $region57: #{traffic_representation_net.1} parent=0 // pred_fallthru
    _
  // Predicated region
  $region58: #{traffic_representation_net.1} parent=0 // pred_check
    _
  $region59: #{traffic_representation_net.1} parent=0 // pred_check_branch
    %113 = sbr.rel (0) target = $region61
  $region60: #{traffic_representation_net.1} parent=0 // pred_region
    _
  $region61: #{traffic_representation_net.1} parent=0 // pred_fallthru
    _
  // Predicated region
  $region62: #{traffic_representation_net.1} parent=0 // pred_check
    _
  $region63: #{traffic_representation_net.1} parent=0 // pred_check_branch
    %115 = sbr.rel (0) target = $region65
  $region64: #{traffic_representation_net.1} parent=0 // pred_region
    _
  $region65: #{traffic_representation_net.1} parent=0 // pred_fallthru
    _
  // Predicated region
  $region66: #{traffic_representation_net.1} parent=0 // pred_check
    _
  $region67: #{traffic_representation_net.1} parent=0 // pred_check_branch
    %117 = sbr.rel (0) target = $region69
  $region68: #{traffic_representation_net.1} parent=0 // pred_region
    _
  $region69: #{traffic_representation_net.1} parent=0 // pred_fallthru
    _
  // Predicated region
  $region70: #{traffic_representation_net.1} parent=0 // pred_check
    _
  $region71: #{traffic_representation_net.1} parent=0 // pred_check_branch
    %119 = sbr.rel (0) target = $region73
  $region72: #{traffic_representation_net.1} parent=0 // pred_region
    _
  $region73: #{traffic_representation_net.1} parent=0 // pred_fallthru
    _
  // Predicated region
  $region74: #{traffic_representation_net.1} parent=0 // pred_check
    _
  $region75: #{traffic_representation_net.1} parent=0 // pred_check_branch
    %121 = sbr.rel (0) target = $region77
  $region76: #{traffic_representation_net.1} parent=0 // pred_region
    _
  $region77: #{traffic_representation_net.1} parent=0 // pred_fallthru
    _
  // Predicated region
  $region78: #{traffic_representation_net.1} parent=0 // pred_check
    _
  $region79: #{traffic_representation_net.1} parent=0 // pred_check_branch
    %123 = sbr.rel (0) target = $region81
  $region80: #{traffic_representation_net.1} parent=0 // pred_region
    _
  $region81: #{traffic_representation_net.1} parent=0 // pred_fallthru
    _
  // Predicated region
  $region82: #{traffic_representation_net.1} parent=0 // pred_check
    _
  $region83: #{traffic_representation_net.1} parent=0 // pred_check_branch
    %125 = sbr.rel (0) target = $region85
  $region84: #{traffic_representation_net.1} parent=0 // pred_region
    _
  $region85: #{traffic_representation_net.1} parent=0 // pred_fallthru
    _
  // Predicated region
  $region86: #{traffic_representation_net.1} parent=0 // pred_check
    _
  $region87: #{traffic_representation_net.1} parent=0 // pred_check_branch
    %127 = sbr.rel (0) target = $region89
  $region88: #{traffic_representation_net.1} parent=0 // pred_region
    _
  $region89: #{traffic_representation_net.1} parent=0 // pred_fallthru
    _
  // Predicated region
  $region90: #{traffic_representation_net.1} parent=0 // pred_check
    _
  $region91: #{traffic_representation_net.1} parent=0 // pred_check_branch
    %129 = sbr.rel (0) target = $region93
  $region92: #{traffic_representation_net.1} parent=0 // pred_region
    _
  $region93: #{traffic_representation_net.1} parent=0 // pred_fallthru
    _
  // Predicated region
  $region94: #{traffic_representation_net.1} parent=0 // pred_check
    _
  $region95: #{traffic_representation_net.1} parent=0 // pred_check_branch
    %131 = sbr.rel (0) target = $region97
  $region96: #{traffic_representation_net.1} parent=0 // pred_region
    _
  $region97: #{traffic_representation_net.1} parent=0 // pred_fallthru
    _
  // Predicated region
  $region98: #{traffic_representation_net.1} parent=0 // pred_check
    _
  $region99: #{traffic_representation_net.1} parent=0 // pred_check_branch
    %133 = sbr.rel (0) target = $region101
  $region100: #{traffic_representation_net.1} parent=0 // pred_region
    _
  $region101: #{traffic_representation_net.1} parent=0 // pred_fallthru
    _
  // Predicated region
  $region102: #{traffic_representation_net.1} parent=0 // pred_check
    _
  $region103: #{traffic_representation_net.1} parent=0 // pred_check_branch
    %135 = sbr.rel (0) target = $region105
  $region104: #{traffic_representation_net.1} parent=0 // pred_region
    _
  $region105: #{traffic_representation_net.1} parent=0 // pred_fallthru
    _
  // Predicated region
  $region106: #{traffic_representation_net.1} parent=0 // pred_check
    _
  $region107: #{traffic_representation_net.1} parent=0 // pred_check_branch
    %137 = sbr.rel (0) target = $region109
  $region108: #{traffic_representation_net.1} parent=0 // pred_region
    _
  $region109: #{traffic_representation_net.1} parent=0 // pred_fallthru
    _
  // Predicated region
  $region110: #{traffic_representation_net.1} parent=0 // pred_check
    _
  $region111: #{traffic_representation_net.1} parent=0 // pred_check_branch
    %139 = sbr.rel (0) target = $region113
  $region112: #{traffic_representation_net.1} parent=0 // pred_region
    _
  $region113: #{traffic_representation_net.1} parent=0 // pred_fallthru
    _
  // Predicated region
  $region114: #{traffic_representation_net.1} parent=0 // pred_check
    _
  $region115: #{traffic_representation_net.1} parent=0 // pred_check_branch
    %141 = sbr.rel (0) target = $region117
  $region116: #{traffic_representation_net.1} parent=0 // pred_region
    _
  $region117: #{traffic_representation_net.1} parent=0 // pred_fallthru
    _
  // Predicated region
  $region118: #{traffic_representation_net.1} parent=0 // pred_check
    _
  $region119: #{traffic_representation_net.1} parent=0 // pred_check_branch
    %143 = sbr.rel (0) target = $region121
  $region120: #{traffic_representation_net.1} parent=0 // pred_region
    _
  $region121: #{traffic_representation_net.1} parent=0 // pred_fallthru
    _
  // Predicated region
  $region122: #{traffic_representation_net.1} parent=0 // pred_check
    _
  $region123: #{traffic_representation_net.1} parent=0 // pred_check_branch
    %145 = sbr.rel (0) target = $region125
  $region124: #{traffic_representation_net.1} parent=0 // pred_region
    _
  $region125: #{traffic_representation_net.1} parent=0 // pred_fallthru
    _
  // Predicated region
  $region126: #{traffic_representation_net.1} parent=0 // pred_check
    _
  $region127: #{traffic_representation_net.1} parent=0 // pred_check_branch
    %147 = sbr.rel (0) target = $region129
  $region128: #{traffic_representation_net.1} parent=0 // pred_region
    _
  $region129: #{traffic_representation_net.1} parent=0 // pred_fallthru
    _
  // Predicated region
  $region130: #{traffic_representation_net.1} parent=0 // pred_check
    _
  $region131: #{traffic_representation_net.1} parent=0 // pred_check_branch
    %149 = sbr.rel (0) target = $region133
  $region132: #{traffic_representation_net.1} parent=0 // pred_region
    _
  $region133: #{traffic_representation_net.1} parent=0 // pred_fallthru
    _
  // Predicated region
  $region134: #{traffic_representation_net.1} parent=0 // pred_check
    _
  $region135: #{traffic_representation_net.1} parent=0 // pred_check_branch
    %151 = sbr.rel (0) target = $region137
  $region136: #{traffic_representation_net.1} parent=0 // pred_region
    _
  $region137: #{traffic_representation_net.1} parent=0 // pred_fallthru
    _
  // Predicated region
  $region138: #{traffic_representation_net.1} parent=0 // pred_check
    _
  $region139: #{traffic_representation_net.1} parent=0 // pred_check_branch
    %153 = sbr.rel (0) target = $region141
  $region140: #{traffic_representation_net.1} parent=0 // pred_region
    _
  $region141: #{traffic_representation_net.1} parent=0 // pred_fallthru
    _
  // Predicated region
  $region142: #{traffic_representation_net.1} parent=0 // pred_check
    _
  $region143: #{traffic_representation_net.1} parent=0 // pred_check_branch
    %155 = sbr.rel (0) target = $region145
  $region144: #{traffic_representation_net.1} parent=0 // pred_region
    _
  $region145: #{traffic_representation_net.1} parent=0 // pred_fallthru
    _
  // Predicated region
  $region146: #{traffic_representation_net.1} parent=0 // pred_check
    _
  $region147: #{traffic_representation_net.1} parent=0 // pred_check_branch
    %157 = sbr.rel (0) target = $region149
  $region148: #{traffic_representation_net.1} parent=0 // pred_region
    _
  $region149: #{traffic_representation_net.1} parent=0 // pred_fallthru
    _
  // Predicated region
  $region150: #{traffic_representation_net.1} parent=0 // pred_check
    _
  $region151: #{traffic_representation_net.1} parent=0 // pred_check_branch
    %159 = sbr.rel (0) target = $region153
  $region152: #{traffic_representation_net.1} parent=0 // pred_region
    _
  $region153: #{traffic_representation_net.1} parent=0 // pred_fallthru
    _
  // Predicated region
  $region154: #{traffic_representation_net.1} parent=0 // pred_check
    _
  $region155: #{traffic_representation_net.1} parent=0 // pred_check_branch
    %161 = sbr.rel (0) target = $region157
  $region156: #{traffic_representation_net.1} parent=0 // pred_region
    _
  $region157: #{traffic_representation_net.1} parent=0 // pred_fallthru
    _
  %v162 = vlaneseq
  %v163 = vshrl.u32 %v162, 7
  %v164 = vld [vmem:[%s5] sm:$0x1]
  %v165 = vperm.slane %v164, 0
  %vm166 = vcmp.eq.s32.totalorder %v163, %v165
  %v167 = vsel %vm166, 1, 0
  %v168 = vcvt.s32.f32 %v167
  %vm169 = vcmask 130048
  %v170 = vsel %vm169, %v168, 0.0
  %171 = vadd.xlane.f32.xlu0 %v170
  %v172 = vpop.xlane.xlu0 %171
  %v173 = vlaneseq
  %v174 = vand.u32 %v173, 127
  %v175 = vld [vmem:[%s7] sm:$0xff]
  %v176 = vld [vmem:[%s7 + $0x8] sm:$0xff]
  %v177 = vld [vmem:[%s7 + $0x10] sm:$0xff]
  %v178 = vld [vmem:[%s7 + $0x18] sm:$0xff]
  %179 = vset.pattern.permute.xlu0 0
  %180 = vperm.xlu0 %179, %v175
  %v181 = vpop.permute.xlu0 %180
  %182 = vset.pattern.permute.xlu0 0
  %183 = vperm.xlu0 %182, %v176
  %v184 = vpop.permute.xlu0 %183
  %185 = vset.pattern.permute.xlu0 0
  %186 = vperm.xlu0 %185, %v177
  %v187 = vpop.permute.xlu0 %186
  %188 = vset.pattern.permute.xlu0 0
  %189 = vperm.xlu0 %188, %v178
  %v190 = vpop.permute.xlu0 %189
  %vm191 = vcmp.eq.s32.totalorder %v174, %v181
  %vm192 = vcmp.eq.s32.totalorder %v174, %v184
  %vm193 = vcmp.eq.s32.totalorder %v174, %v187
  %vm194 = vcmp.eq.s32.totalorder %v174, %v190
  %v195 = vsel %vm191, 1, 0
  %v196 = vsel %vm192, 1, 0
  %v197 = vsel %vm193, 1, 0
  %v198 = vsel %vm194, 1, 0
  %v199 = vcvt.s32.f32 %v195
  %v200 = vcvt.s32.f32 %v196
  %v201 = vcvt.s32.f32 %v197
  %v202 = vcvt.s32.f32 %v198
  %vm203 = vcmp.eq.s32.totalorder %v175, 0
  %vm204 = vcmp.eq.s32.totalorder %v176, 0
  %v205 = vsel %vm203, 0.0, -1e+30
  %v206 = vsel %vm204, 0.0, -1e+30
  %vm207 = vcmp.eq.s32.totalorder %v175, 1
  %vm208 = vcmp.eq.s32.totalorder %v176, 1
  %v209 = vsel %vm207, 0.0, -1e+30
  %v210 = vsel %vm208, 0.0, -1e+30
  %vm211 = vcmp.eq.s32.totalorder %v175, 2
  %vm212 = vcmp.eq.s32.totalorder %v176, 2
  %v213 = vsel %vm211, 0.0, -1e+30
  %v214 = vsel %vm212, 0.0, -1e+30
  %vm215 = vcmp.eq.s32.totalorder %v175, 3
  %vm216 = vcmp.eq.s32.totalorder %v176, 3
  %v217 = vsel %vm215, 0.0, -1e+30
  %v218 = vsel %vm216, 0.0, -1e+30
  %vm219 = vcmp.eq.s32.totalorder %v175, 4
  %vm220 = vcmp.eq.s32.totalorder %v176, 4
  %v221 = vsel %vm219, 0.0, -1e+30
  %v222 = vsel %vm220, 0.0, -1e+30
  %vm223 = vcmp.eq.s32.totalorder %v175, 5
  %vm224 = vcmp.eq.s32.totalorder %v176, 5
  %v225 = vsel %vm223, 0.0, -1e+30
  %v226 = vsel %vm224, 0.0, -1e+30
  %vm227 = vcmp.eq.s32.totalorder %v175, 6
  %vm228 = vcmp.eq.s32.totalorder %v176, 6
  %v229 = vsel %vm227, 0.0, -1e+30
  %v230 = vsel %vm228, 0.0, -1e+30
  %vm231 = vcmp.eq.s32.totalorder %v175, 7
  %vm232 = vcmp.eq.s32.totalorder %v176, 7
  %v233 = vsel %vm231, 0.0, -1e+30
  %v234 = vsel %vm232, 0.0, -1e+30
  %v235 = vld [vmem:[%s1] sm:$0xff]
  %v236 = vld [vmem:[%s9] sm:$0x3]
  %v237 = vld [vmem:[%s11] sm:$0x1]
  %v239 = vperm.slane %v237, 0
  %vm241 = vcmask 15360
  %v243 = vsel %vm241, %v235, 0
  %vm245 = vcmask 1041408
  %v247 = vsel %vm245, %v236, 0
  %249 = vmatpush.msra.mxu0 0.0
  %250 = vmatpush.msra.mxu0 0.0
  %251 = vmatpush.msra.mxu0 0.0
  %252 = vmatpush.msra.mxu0 0.0
  %253 = vmatpush.msra.mxu0 0.0
  %254 = vmatpush.msra.mxu0 0.0
  %255 = vmatpush.msra.mxu0 0.0
  %256 = vmatpush.msra.mxu0 0.0
  %257 = vmatpush.msra.mxu0 0.0
  %258 = vmatpush.msra.mxu0 0.0
  %259 = vmatpush.msra.mxu0 0.0
  %260 = vmatpush.msra.mxu0 0.0
  %261 = vmatpush.msra.mxu0 0.0
  %262 = vmatpush.msra.mxu0 0.0
  %263 = vmatpush.msra.mxu0 0.0
  %264 = vmatpush.msra.mxu0 %v247
  %265 = vmatmul.f32.gmra.mxu0 %v243
  %v266 = vpop.f32.mrf.mxu0
  %v267 = vadd.f32 %v239, %v266
  %268 = vdwg.mxu0
  %v269 = vmax.f32 %v267, 0.0
  %v270 = vld [vmem:[%s3] sm:$0xff]
  %v271 = vld [vmem:[%s3 + $0x8] sm:$0xff]
  %v272 = vld [vmem:[%s13] sm:$0x7]
  %v273 = vld [vmem:[%s15] sm:$0x1]
  %v275 = vperm.slane %v273, 0
  %vm277 = vcmask 23552
  %v279 = vsel %vm277, %v270, 0
  %v282 = vsel %vm277, %v271, 0
  %vm284 = vcmask 1042432
  %v286 = vsel %vm284, %v272, 0
  %288 = vmatpush.msra.mxu0 0.0
  %289 = vmatpush.msra.mxu0 0.0
  %290 = vmatpush.msra.mxu0 0.0
  %291 = vmatpush.msra.mxu0 0.0
  %292 = vmatpush.msra.mxu0 0.0
  %293 = vmatpush.msra.mxu0 0.0
  %294 = vmatpush.msra.mxu0 0.0
  %295 = vmatpush.msra.mxu0 0.0
  %296 = vmatpush.msra.mxu0 0.0
  %297 = vmatpush.msra.mxu0 0.0
  %298 = vmatpush.msra.mxu0 0.0
  %299 = vmatpush.msra.mxu0 0.0
  %300 = vmatpush.msra.mxu0 0.0
  %301 = vmatpush.msra.mxu0 0.0
  %302 = vmatpush.msra.mxu0 0.0
  %303 = vmatpush.msra.mxu0 %v286
  %304 = vmatmul.f32.gmra.mxu0 %v279
  %v305 = vpop.f32.mrf.mxu0
  %v306 = vadd.f32 %v275, %v305
  %307 = vmatmul.f32.gmra.mxu0 %v282
  %v308 = vpop.f32.mrf.mxu0
  %v309 = vadd.f32 %v275, %v308
  %310 = vdwg.mxu0
  %v311 = vmax.f32 %v306, 0.0
  %v312 = vmax.f32 %v309, 0.0
  %v313 = vld [vmem:[%s17] sm:$0xff]
  %v314 = vld [vmem:[%s17 + $0x8] sm:$0xff]
  %v315 = vld [vmem:[%s19] sm:$0xff]
  %v316 = vld [vmem:[%s19 + $0x8] sm:$0xff]
  %v317 = vld [vmem:[%s21] sm:$0x1]
  %v318 = vld [vmem:[%s23] sm:$0xff]
  %v319 = vld [vmem:[%s23 + $0x8] sm:$0xff]
  %v320 = vld [vmem:[%s23 + $0x10] sm:$0xff]
  %v321 = vld [vmem:[%s23 + $0x18] sm:$0xff]
  %v322 = vld [vmem:[%s23 + $0x20] sm:$0xff]
  %v323 = vld [vmem:[%s23 + $0x28] sm:$0xff]
  %v324 = vld [vmem:[%s23 + $0x30] sm:$0xff]
  %v325 = vld [vmem:[%s23 + $0x38] sm:$0xff]
  %v326 = vld [vmem:[%s25] sm:$0x1]
  %vm327 = vcmask 64512
  %v329 = vsel %vm327, %v199, 0
  %v332 = vsel %vm327, %v200, 0
  %v335 = vsel %vm327, %v201, 0
  %v338 = vsel %vm327, %v202, 0
  %340 = vmatpush.msra.mxu0 0.0
  %341 = vmatpush.msra.mxu0 0.0
  %342 = vmatpush.msra.mxu0 0.0
  %343 = vmatpush.msra.mxu0 0.0
  %344 = vmatpush.msra.mxu0 0.0
  %345 = vmatpush.msra.mxu0 0.0
  %346 = vmatpush.msra.mxu0 0.0
  %347 = vmatpush.msra.mxu0 0.0
  %348 = vmatpush.msra.mxu0 0.0
  %349 = vmatpush.msra.mxu0 0.0
  %350 = vmatpush.msra.mxu0 0.0
  %351 = vmatpush.msra.mxu0 0.0
  %352 = vmatpush.msra.mxu0 0.0
  %353 = vmatpush.msra.mxu0 0.0
  %354 = vmatpush.msra.mxu0 0.0
  %355 = vmatpush.msra.mxu0 %v269
  %356 = vmatmul.f32.gmra.mxu0 %v329
  %v357 = vpop.f32.mrf.mxu0
  %v358 = vadd.f32 0.0, %v357
  %359 = vmatmul.f32.gmra.mxu0 %v332
  %v360 = vpop.f32.mrf.mxu0
  %v361 = vadd.f32 0.0, %v360
  %362 = vmatmul.f32.gmra.mxu0 %v335
  %v363 = vpop.f32.mrf.mxu0
  %v364 = vadd.f32 0.0, %v363
  %365 = vmatmul.f32.gmra.mxu0 %v338
  %v366 = vpop.f32.mrf.mxu0
  %v367 = vadd.f32 0.0, %v366
  %368 = vdwg.mxu0
  %v369 = vsub.f32 %v364, %v358
  %v370 = vsub.f32 %v367, %v361
  %v372 = vsel %vm169, %v369, 0
  %v375 = vsel %vm169, %v370, 0
  %377 = vmatpush.msra.mxu0 0.0
  %378 = vmatpush.msra.mxu0 0.0
  %379 = vmatpush.msra.mxu0 0.0
  %380 = vmatpush.msra.mxu0 0.0
  %381 = vmatpush.msra.mxu0 0.0
  %382 = vmatpush.msra.mxu0 0.0
  %383 = vmatpush.msra.mxu0 0.0
  %384 = vmatpush.msra.mxu0 0.0
  %385 = vmatpush.msra.mxu0 0.0
  %386 = vmatpush.msra.mxu0 0.0
  %387 = vmatpush.msra.mxu0 0.0
  %388 = vmatpush.msra.mxu0 0.0
  %389 = vmatpush.msra.mxu0 0.0
  %390 = vmatpush.msra.mxu0 0.0
  %391 = vmatpush.msra.mxu0 %v316
  %392 = vmatpush.msra.mxu0 %v315
  %393 = vmatmul.f32.gmra.mxu0 %v372
  %v394 = vpop.f32.mrf.mxu0
  %v395 = vadd.f32 0.0, %v394
  %396 = vmatmul.f32.gmra.mxu0 %v375
  %v397 = vpop.f32.mrf.mxu0
  %v398 = vadd.f32 0.0, %v397
  %399 = vdwg.mxu0
  %v401 = vsel %vm169, %v358, 0
  %v404 = vsel %vm169, %v361, 0
  %406 = vmatpush.msra.mxu0 0.0
  %407 = vmatpush.msra.mxu0 0.0
  %408 = vmatpush.msra.mxu0 0.0
  %409 = vmatpush.msra.mxu0 0.0
  %410 = vmatpush.msra.mxu0 0.0
  %411 = vmatpush.msra.mxu0 0.0
  %412 = vmatpush.msra.mxu0 0.0
  %413 = vmatpush.msra.mxu0 0.0
  %414 = vmatpush.msra.mxu0 0.0
  %415 = vmatpush.msra.mxu0 0.0
  %416 = vmatpush.msra.mxu0 0.0
  %417 = vmatpush.msra.mxu0 0.0
  %418 = vmatpush.msra.mxu0 0.0
  %419 = vmatpush.msra.mxu0 0.0
  %420 = vmatpush.msra.mxu0 %v314
  %421 = vmatpush.msra.mxu0 %v313
  %422 = vmatmul.f32.gmra.mxu0 %v401
  %v423 = vpop.f32.mrf.mxu0
  %v424 = vadd.f32 %v395, %v423
  %425 = vmatmul.f32.gmra.mxu0 %v404
  %v426 = vpop.f32.mrf.mxu0
  %v427 = vadd.f32 %v398, %v426
  %428 = vdwg.mxu0
  %v430 = vperm.slane %v317, 0
  %v432 = vadd.f32 %v424, %v430
  %v433 = vadd.f32 %v427, %v430
  %v434 = vmax.f32 %v432, 0.0
  %v435 = vmax.f32 %v433, 0.0
  %v437 = vperm.slane %v326, 0
  %vm439 = vcmask 523264
  %v441 = vsel %vm439, %v434, 0
  %v444 = vsel %vm439, %v435, 0
  %446 = vmatpush.msra.mxu0 0.0
  %447 = vmatpush.msra.mxu0 0.0
  %448 = vmatpush.msra.mxu0 0.0
  %449 = vmatpush.msra.mxu0 0.0
  %450 = vmatpush.msra.mxu0 0.0
  %451 = vmatpush.msra.mxu0 0.0
  %452 = vmatpush.msra.mxu0 0.0
  %453 = vmatpush.msra.mxu0 0.0
  %454 = vmatpush.msra.mxu0 %v325
  %455 = vmatpush.msra.mxu0 %v324
  %456 = vmatpush.msra.mxu0 %v323
  %457 = vmatpush.msra.mxu0 %v322
  %458 = vmatpush.msra.mxu0 %v321
  %459 = vmatpush.msra.mxu0 %v320
  %460 = vmatpush.msra.mxu0 %v319
  %461 = vmatpush.msra.mxu0 %v318
  %462 = vmatmul.f32.gmra.mxu0 %v441
  %v463 = vpop.f32.mrf.mxu0
  %v464 = vadd.f32 %v437, %v463
  %465 = vmatmul.f32.gmra.mxu0 %v444
  %v466 = vpop.f32.mrf.mxu0
  %v467 = vadd.f32 %v437, %v466
  %468 = vdwg.mxu0
  %470 = vset.pattern.permute.xlu0 0
  %471 = vperm.xlu0 %470, %v205
  %v472 = vpop.permute.xlu0 %471
  %475 = vset.pattern.permute.xlu0 0
  %476 = vperm.xlu0 %475, %v206
  %v477 = vpop.permute.xlu0 %476
  %480 = vset.pattern.permute.xlu0 0
  %481 = vperm.xlu0 %480, %v209
  %v482 = vpop.permute.xlu0 %481
  %485 = vset.pattern.permute.xlu0 0
  %486 = vperm.xlu0 %485, %v210
  %v487 = vpop.permute.xlu0 %486
  %490 = vset.pattern.permute.xlu0 0
  %491 = vperm.xlu0 %490, %v213
  %v492 = vpop.permute.xlu0 %491
  %495 = vset.pattern.permute.xlu0 0
  %496 = vperm.xlu0 %495, %v214
  %v497 = vpop.permute.xlu0 %496
  %500 = vset.pattern.permute.xlu0 0
  %501 = vperm.xlu0 %500, %v217
  %v502 = vpop.permute.xlu0 %501
  %505 = vset.pattern.permute.xlu0 0
  %506 = vperm.xlu0 %505, %v218
  %v507 = vpop.permute.xlu0 %506
  %510 = vset.pattern.permute.xlu0 0
  %511 = vperm.xlu0 %510, %v221
  %v512 = vpop.permute.xlu0 %511
  %515 = vset.pattern.permute.xlu0 0
  %516 = vperm.xlu0 %515, %v222
  %v517 = vpop.permute.xlu0 %516
  %520 = vset.pattern.permute.xlu0 0
  %521 = vperm.xlu0 %520, %v225
  %v522 = vpop.permute.xlu0 %521
  %525 = vset.pattern.permute.xlu0 0
  %526 = vperm.xlu0 %525, %v226
  %v527 = vpop.permute.xlu0 %526
  %530 = vset.pattern.permute.xlu0 0
  %531 = vperm.xlu0 %530, %v229
  %v532 = vpop.permute.xlu0 %531
  %535 = vset.pattern.permute.xlu0 0
  %536 = vperm.xlu0 %535, %v230
  %v537 = vpop.permute.xlu0 %536
  %540 = vset.pattern.permute.xlu0 0
  %541 = vperm.xlu0 %540, %v233
  %v542 = vpop.permute.xlu0 %541
  %545 = vset.pattern.permute.xlu0 0
  %546 = vperm.xlu0 %545, %v234
  %v547 = vpop.permute.xlu0 %546
  %v549 = vadd.f32 %v464, %v472
  %v550 = vadd.f32 %v467, %v477
  %v551 = vadd.f32 %v464, %v482
  %v552 = vadd.f32 %v467, %v487
  %v553 = vadd.f32 %v464, %v492
  %v554 = vadd.f32 %v467, %v497
  %v555 = vadd.f32 %v464, %v502
  %v556 = vadd.f32 %v467, %v507
  %v557 = vadd.f32 %v464, %v512
  %v558 = vadd.f32 %v467, %v517
  %v559 = vadd.f32 %v464, %v522
  %v560 = vadd.f32 %v467, %v527
  %v561 = vadd.f32 %v464, %v532
  %v562 = vadd.f32 %v467, %v537
  %v563 = vadd.f32 %v464, %v542
  %v564 = vadd.f32 %v467, %v547
  %v565 = vsel %vm439, %v549, -inf
  %v566 = vsel %vm439, %v550, -inf
  %v567 = vmax.f32 %v565, %v566
  %v568 = vrot.slane %v567, 4
  %v569 = vmax.f32 %v567, %v568
  %v570 = vrot.slane %v569, 2
  %v571 = vmax.f32 %v569, %v570
  %v572 = vrot.slane %v571, 1
  %v573 = vmax.f32 %v571, %v572
  %v574 = vsel %vm439, %v551, -inf
  %v575 = vsel %vm439, %v552, -inf
  %v576 = vmax.f32 %v574, %v575
  %v577 = vrot.slane %v576, 4
  %v578 = vmax.f32 %v576, %v577
  %v579 = vrot.slane %v578, 2
  %v580 = vmax.f32 %v578, %v579
  %v581 = vrot.slane %v580, 1
  %v582 = vmax.f32 %v580, %v581
  %v583 = vsel %vm439, %v553, -inf
  %v584 = vsel %vm439, %v554, -inf
  %v585 = vmax.f32 %v583, %v584
  %v586 = vrot.slane %v585, 4
  %v587 = vmax.f32 %v585, %v586
  %v588 = vrot.slane %v587, 2
  %v589 = vmax.f32 %v587, %v588
  %v590 = vrot.slane %v589, 1
  %v591 = vmax.f32 %v589, %v590
  %v592 = vsel %vm439, %v555, -inf
  %v593 = vsel %vm439, %v556, -inf
  %v594 = vmax.f32 %v592, %v593
  %v595 = vrot.slane %v594, 4
  %v596 = vmax.f32 %v594, %v595
  %v597 = vrot.slane %v596, 2
  %v598 = vmax.f32 %v596, %v597
  %v599 = vrot.slane %v598, 1
  %v600 = vmax.f32 %v598, %v599
  %v601 = vsel %vm439, %v557, -inf
  %v602 = vsel %vm439, %v558, -inf
  %v603 = vmax.f32 %v601, %v602
  %v604 = vrot.slane %v603, 4
  %v605 = vmax.f32 %v603, %v604
  %v606 = vrot.slane %v605, 2
  %v607 = vmax.f32 %v605, %v606
  %v608 = vrot.slane %v607, 1
  %v609 = vmax.f32 %v607, %v608
  %v610 = vsel %vm439, %v559, -inf
  %v611 = vsel %vm439, %v560, -inf
  %v612 = vmax.f32 %v610, %v611
  %v613 = vrot.slane %v612, 4
  %v614 = vmax.f32 %v612, %v613
  %v615 = vrot.slane %v614, 2
  %v616 = vmax.f32 %v614, %v615
  %v617 = vrot.slane %v616, 1
  %v618 = vmax.f32 %v616, %v617
  %v619 = vsel %vm439, %v561, -inf
  %v620 = vsel %vm439, %v562, -inf
  %v621 = vmax.f32 %v619, %v620
  %v622 = vrot.slane %v621, 4
  %v623 = vmax.f32 %v621, %v622
  %v624 = vrot.slane %v623, 2
  %v625 = vmax.f32 %v623, %v624
  %v626 = vrot.slane %v625, 1
  %v627 = vmax.f32 %v625, %v626
  %v628 = vsel %vm439, %v563, -inf
  %v629 = vsel %vm439, %v564, -inf
  %v630 = vmax.f32 %v628, %v629
  %v631 = vrot.slane %v630, 4
  %v632 = vmax.f32 %v630, %v631
  %v633 = vrot.slane %v632, 2
  %v634 = vmax.f32 %v632, %v633
  %v635 = vrot.slane %v634, 1
  %v636 = vmax.f32 %v634, %v635
  %vm637 = vcmp.gt.f32.partialorder %v172, 0.5
  %v638 = vsel %vm637, 1, 0
  %vm639 = vcmp.eq.s32.totalorder %v638, 1
  %vm648 = vcmask 1041409
  %v649 = vsel %vm648, %v582, %v573
  %vm650 = vcmask 1042434
  %v651 = vsel %vm650, %v591, %v649
  %vm652 = vcmask 1043459
  %v653 = vsel %vm652, %v600, %v651
  %vm654 = vcmask 1044484
  %v655 = vsel %vm654, %v609, %v653
  %vm656 = vcmask 1045509
  %v657 = vsel %vm656, %v618, %v655
  %vm658 = vcmask 1046534
  %v659 = vsel %vm658, %v627, %v657
  %vm660 = vcmask 1047559
  %v661 = vsel %vm660, %v636, %v659
  %v663 = vsel %vm639, %v661, 0.0
  %v664 = vld [vmem:[%s27] sm:$0x1]
  %v665 = vld [vmem:[%s29] sm:$0x1]
  %v666 = vsel %vm439, %v663, 0.0
  %v667 = vrot.slane %v666, 4
  %v668 = vadd.f32 %v666, %v667
  %v669 = vrot.slane %v668, 2
  %v670 = vadd.f32 %v668, %v669
  %v671 = vrot.slane %v670, 1
  %v672 = vadd.f32 %v670, %v671
  %v673 = vrcp.pop 8.0
  %v674 = vmul.f32 8.0, %v673
  %v675 = vsub.f32 1.0, %v674
  %v676 = vmul.f32 %v673, %v675
  %v677 = vadd.f32 %v673, %v676
  %vm678 = vweird.f32 %v673
  %v679 = vsel %vm678, %v673, %v677
  %v680 = vmul.f32 %v672, %v679
  %v681 = vsub.f32 %v663, %v680
  %v682 = vmul.f32 %v681, %v681
  %v683 = vsel %vm439, %v682, 0.0
  %v684 = vrot.slane %v683, 4
  %v685 = vadd.f32 %v683, %v684
  %v686 = vrot.slane %v685, 2
  %v687 = vadd.f32 %v685, %v686
  %v688 = vrot.slane %v687, 1
  %v689 = vadd.f32 %v687, %v688
  %v690 = vmul.f32 %v689, %v679
  %v691 = vadd.f32 %v690, 1e-05
  %v692 = vrsqrt.pop %v691
  %v693 = vmul.f32 %v692, %v691
  %v694 = vmul.f32 %v693, %v692
  %v695 = vmul.f32 0.5, %v694
  %v696 = vsub.f32 1.5, %v695
  %v697 = vmul.f32 %v692, %v696
  %vm698 = vweird.f32 %v691
  %vm699 = vweird.f32 %v692
  %vm700 = vmor %vm698, %vm699
  %v701 = vsel %vm700, %v692, %v697
  %v702 = vmul.f32 %v681, %v701
  %v704 = vperm.slane %v664, 0
  %v706 = vmul.f32 %v702, %v704
  %v708 = vperm.slane %v665, 0
  %v710 = vadd.f32 %v706, %v708
  %v711 = vmax.f32 %v710, 0.0
  %v712 = vld [vmem:[%s31] sm:$0xff]
  %v713 = vld [vmem:[%s31 + $0x8] sm:$0xff]
  %v714 = vld [vmem:[%s31 + $0x10] sm:$0xff]
  %v715 = vld [vmem:[%s31 + $0x18] sm:$0xff]
  %v716 = vld [vmem:[%s31 + $0x20] sm:$0xff]
  %v717 = vld [vmem:[%s31 + $0x28] sm:$0xff]
  %v718 = vld [vmem:[%s31 + $0x30] sm:$0xff]
  %v719 = vld [vmem:[%s31 + $0x38] sm:$0xff]
  %v720 = vld [vmem:[%s33] sm:$0xff]
  %v721 = vld [vmem:[%s33 + $0x8] sm:$0xff]
  %v722 = vld [vmem:[%s33 + $0x10] sm:$0xff]
  %v723 = vld [vmem:[%s33 + $0x18] sm:$0xff]
  %v724 = vld [vmem:[%s33 + $0x20] sm:$0xff]
  %v725 = vld [vmem:[%s33 + $0x28] sm:$0xff]
  %v726 = vld [vmem:[%s33 + $0x30] sm:$0xff]
  %v727 = vld [vmem:[%s33 + $0x38] sm:$0xff]
  %v728 = vld [vmem:[%s35] sm:$0x1]
  %v729 = vld [vmem:[%s37] sm:$0xff]
  %v730 = vld [vmem:[%s37 + $0x8] sm:$0xff]
  %v731 = vld [vmem:[%s37 + $0x10] sm:$0xff]
  %v732 = vld [vmem:[%s37 + $0x18] sm:$0xff]
  %v733 = vld [vmem:[%s37 + $0x20] sm:$0xff]
  %v734 = vld [vmem:[%s37 + $0x28] sm:$0xff]
  %v735 = vld [vmem:[%s37 + $0x30] sm:$0xff]
  %v736 = vld [vmem:[%s37 + $0x38] sm:$0xff]
  %v737 = vld [vmem:[%s37 + $0x40] sm:$0xff]
  %v738 = vld [vmem:[%s37 + $0x48] sm:$0xff]
  %v739 = vld [vmem:[%s37 + $0x50] sm:$0xff]
  %v740 = vld [vmem:[%s37 + $0x58] sm:$0xff]
  %v741 = vld [vmem:[%s37 + $0x60] sm:$0xff]
  %v742 = vld [vmem:[%s37 + $0x68] sm:$0xff]
  %v743 = vld [vmem:[%s37 + $0x70] sm:$0xff]
  %v744 = vld [vmem:[%s37 + $0x78] sm:$0xff]
  %v745 = vld [vmem:[%s39] sm:$0x1]
  %746 = vmatpush.msra.mxu0 0.0
  %747 = vmatpush.msra.mxu0 0.0
  %748 = vmatpush.msra.mxu0 0.0
  %749 = vmatpush.msra.mxu0 0.0
  %750 = vmatpush.msra.mxu0 0.0
  %751 = vmatpush.msra.mxu0 0.0
  %752 = vmatpush.msra.mxu0 0.0
  %753 = vmatpush.msra.mxu0 0.0
  %754 = vmatpush.msra.mxu0 0.0
  %755 = vmatpush.msra.mxu0 0.0
  %756 = vmatpush.msra.mxu0 0.0
  %757 = vmatpush.msra.mxu0 0.0
  %758 = vmatpush.msra.mxu0 0.0
  %759 = vmatpush.msra.mxu0 0.0
  %760 = vmatpush.msra.mxu0 0.0
  %761 = vmatpush.msra.mxu0 %v711
  %762 = vmatmul.f32.gmra.mxu0 %v329
  %v763 = vpop.f32.mrf.mxu0
  %v764 = vadd.f32 0.0, %v763
  %765 = vmatmul.f32.gmra.mxu0 %v332
  %v766 = vpop.f32.mrf.mxu0
  %v767 = vadd.f32 0.0, %v766
  %768 = vmatmul.f32.gmra.mxu0 %v335
  %v769 = vpop.f32.mrf.mxu0
  %v770 = vadd.f32 0.0, %v769
  %771 = vmatmul.f32.gmra.mxu0 %v338
  %v772 = vpop.f32.mrf.mxu0
  %v773 = vadd.f32 0.0, %v772
  %774 = vdwg.mxu0
  %v775 = vsub.f32 %v770, %v764
  %v776 = vsub.f32 %v773, %v767
  %v778 = vsel %vm439, %v775, 0
  %v781 = vsel %vm439, %v776, 0
  %783 = vmatpush.msra.mxu0 0.0
  %784 = vmatpush.msra.mxu0 0.0
  %785 = vmatpush.msra.mxu0 0.0
  %786 = vmatpush.msra.mxu0 0.0
  %787 = vmatpush.msra.mxu0 0.0
  %788 = vmatpush.msra.mxu0 0.0
  %789 = vmatpush.msra.mxu0 0.0
  %790 = vmatpush.msra.mxu0 0.0
  %791 = vmatpush.msra.mxu0 %v727
  %792 = vmatpush.msra.mxu0 %v726
  %793 = vmatpush.msra.mxu0 %v725
  %794 = vmatpush.msra.mxu0 %v724
  %795 = vmatpush.msra.mxu0 %v723
  %796 = vmatpush.msra.mxu0 %v722
  %797 = vmatpush.msra.mxu0 %v721
  %798 = vmatpush.msra.mxu0 %v720
  %799 = vmatmul.f32.gmra.mxu0 %v778
  %v800 = vpop.f32.mrf.mxu0
  %v801 = vadd.f32 0.0, %v800
  %802 = vmatmul.f32.gmra.mxu0 %v781
  %v803 = vpop.f32.mrf.mxu0
  %v804 = vadd.f32 0.0, %v803
  %805 = vdwg.mxu0
  %v807 = vsel %vm439, %v764, 0
  %v810 = vsel %vm439, %v767, 0
  %812 = vmatpush.msra.mxu0 0.0
  %813 = vmatpush.msra.mxu0 0.0
  %814 = vmatpush.msra.mxu0 0.0
  %815 = vmatpush.msra.mxu0 0.0
  %816 = vmatpush.msra.mxu0 0.0
  %817 = vmatpush.msra.mxu0 0.0
  %818 = vmatpush.msra.mxu0 0.0
  %819 = vmatpush.msra.mxu0 0.0
  %820 = vmatpush.msra.mxu0 %v719
  %821 = vmatpush.msra.mxu0 %v718
  %822 = vmatpush.msra.mxu0 %v717
  %823 = vmatpush.msra.mxu0 %v716
  %824 = vmatpush.msra.mxu0 %v715
  %825 = vmatpush.msra.mxu0 %v714
  %826 = vmatpush.msra.mxu0 %v713
  %827 = vmatpush.msra.mxu0 %v712
  %828 = vmatmul.f32.gmra.mxu0 %v807
  %v829 = vpop.f32.mrf.mxu0
  %v830 = vadd.f32 %v801, %v829
  %831 = vmatmul.f32.gmra.mxu0 %v810
  %v832 = vpop.f32.mrf.mxu0
  %v833 = vadd.f32 %v804, %v832
  %834 = vdwg.mxu0
  %v836 = vperm.slane %v728, 0
  %v838 = vadd.f32 %v830, %v836
  %v839 = vadd.f32 %v833, %v836
  %v840 = vmax.f32 %v838, 0.0
  %v841 = vmax.f32 %v839, 0.0
  %v843 = vperm.slane %v745, 0
  %845 = vmatpush.msra.mxu0 %v744
  %846 = vmatpush.msra.mxu0 %v743
  %847 = vmatpush.msra.mxu0 %v742
  %848 = vmatpush.msra.mxu0 %v741
  %849 = vmatpush.msra.mxu0 %v740
  %850 = vmatpush.msra.mxu0 %v739
  %851 = vmatpush.msra.mxu0 %v738
  %852 = vmatpush.msra.mxu0 %v737
  %853 = vmatpush.msra.mxu0 %v736
  %854 = vmatpush.msra.mxu0 %v735
  %855 = vmatpush.msra.mxu0 %v734
  %856 = vmatpush.msra.mxu0 %v733
  %857 = vmatpush.msra.mxu0 %v732
  %858 = vmatpush.msra.mxu0 %v731
  %859 = vmatpush.msra.mxu0 %v730
  %860 = vmatpush.msra.mxu0 %v729
  %861 = vmatmul.f32.gmra.mxu0 %v840
  %v862 = vpop.f32.mrf.mxu0
  %v863 = vadd.f32 %v843, %v862
  %864 = vmatmul.f32.gmra.mxu0 %v841
  %v865 = vpop.f32.mrf.mxu0
  %v866 = vadd.f32 %v843, %v865
  %867 = vdwg.mxu0
  %v868 = vadd.f32 %v863, %v472
  %v869 = vadd.f32 %v866, %v477
  %v870 = vadd.f32 %v863, %v482
  %v871 = vadd.f32 %v866, %v487
  %v872 = vadd.f32 %v863, %v492
  %v873 = vadd.f32 %v866, %v497
  %v874 = vadd.f32 %v863, %v502
  %v875 = vadd.f32 %v866, %v507
  %v876 = vadd.f32 %v863, %v512
  %v877 = vadd.f32 %v866, %v517
  %v878 = vadd.f32 %v863, %v522
  %v879 = vadd.f32 %v866, %v527
  %v880 = vadd.f32 %v863, %v532
  %v881 = vadd.f32 %v866, %v537
  %v882 = vadd.f32 %v863, %v542
  %v883 = vadd.f32 %v866, %v547
  %v884 = vmax.f32 %v868, %v869
  %v885 = vrot.slane %v884, 4
  %v886 = vmax.f32 %v884, %v885
  %v887 = vrot.slane %v886, 2
  %v888 = vmax.f32 %v886, %v887
  %v889 = vrot.slane %v888, 1
  %v890 = vmax.f32 %v888, %v889
  %v891 = vmax.f32 %v870, %v871
  %v892 = vrot.slane %v891, 4
  %v893 = vmax.f32 %v891, %v892
  %v894 = vrot.slane %v893, 2
  %v895 = vmax.f32 %v893, %v894
  %v896 = vrot.slane %v895, 1
  %v897 = vmax.f32 %v895, %v896
  %v898 = vmax.f32 %v872, %v873
  %v899 = vrot.slane %v898, 4
  %v900 = vmax.f32 %v898, %v899
  %v901 = vrot.slane %v900, 2
  %v902 = vmax.f32 %v900, %v901
  %v903 = vrot.slane %v902, 1
  %v904 = vmax.f32 %v902, %v903
  %v905 = vmax.f32 %v874, %v875
  %v906 = vrot.slane %v905, 4
  %v907 = vmax.f32 %v905, %v906
  %v908 = vrot.slane %v907, 2
  %v909 = vmax.f32 %v907, %v908
  %v910 = vrot.slane %v909, 1
  %v911 = vmax.f32 %v909, %v910
  %v912 = vmax.f32 %v876, %v877
  %v913 = vrot.slane %v912, 4
  %v914 = vmax.f32 %v912, %v913
  %v915 = vrot.slane %v914, 2
  %v916 = vmax.f32 %v914, %v915
  %v917 = vrot.slane %v916, 1
  %v918 = vmax.f32 %v916, %v917
  %v919 = vmax.f32 %v878, %v879
  %v920 = vrot.slane %v919, 4
  %v921 = vmax.f32 %v919, %v920
  %v922 = vrot.slane %v921, 2
  %v923 = vmax.f32 %v921, %v922
  %v924 = vrot.slane %v923, 1
  %v925 = vmax.f32 %v923, %v924
  %v926 = vmax.f32 %v880, %v881
  %v927 = vrot.slane %v926, 4
  %v928 = vmax.f32 %v926, %v927
  %v929 = vrot.slane %v928, 2
  %v930 = vmax.f32 %v928, %v929
  %v931 = vrot.slane %v930, 1
  %v932 = vmax.f32 %v930, %v931
  %v933 = vmax.f32 %v882, %v883
  %v934 = vrot.slane %v933, 4
  %v935 = vmax.f32 %v933, %v934
  %v936 = vrot.slane %v935, 2
  %v937 = vmax.f32 %v935, %v936
  %v938 = vrot.slane %v937, 1
  %v939 = vmax.f32 %v937, %v938
  %v948 = vsel %vm648, %v897, %v890
  %v949 = vsel %vm650, %v904, %v948
  %v950 = vsel %vm652, %v911, %v949
  %v951 = vsel %vm654, %v918, %v950
  %v952 = vsel %vm656, %v925, %v951
  %v953 = vsel %vm658, %v932, %v952
  %v954 = vsel %vm660, %v939, %v953
  %v956 = vsel %vm639, %v954, 0.0
  %v957 = vld [vmem:[%s41] sm:$0x1]
  %v958 = vld [vmem:[%s43] sm:$0x1]
  %v959 = vrot.slane %v956, 4
  %v960 = vadd.f32 %v956, %v959
  %v961 = vrot.slane %v960, 2
  %v962 = vadd.f32 %v960, %v961
  %v963 = vrot.slane %v962, 1
  %v964 = vadd.f32 %v962, %v963
  %v965 = vmul.f32 %v964, %v679
  %v966 = vsub.f32 %v956, %v965
  %v967 = vmul.f32 %v966, %v966
  %v968 = vrot.slane %v967, 4
  %v969 = vadd.f32 %v967, %v968
  %v970 = vrot.slane %v969, 2
  %v971 = vadd.f32 %v969, %v970
  %v972 = vrot.slane %v971, 1
  %v973 = vadd.f32 %v971, %v972
  %v974 = vmul.f32 %v973, %v679
  %v975 = vadd.f32 %v974, 1e-05
  %v976 = vrsqrt.pop %v975
  %v977 = vmul.f32 %v976, %v975
  %v978 = vmul.f32 %v977, %v976
  %v979 = vmul.f32 0.5, %v978
  %v980 = vsub.f32 1.5, %v979
  %v981 = vmul.f32 %v976, %v980
  %vm982 = vweird.f32 %v975
  %vm983 = vweird.f32 %v976
  %vm984 = vmor %vm982, %vm983
  %v985 = vsel %vm984, %v976, %v981
  %v986 = vmul.f32 %v966, %v985
  %v988 = vperm.slane %v957, 0
  %v990 = vmul.f32 %v986, %v988
  %v992 = vperm.slane %v958, 0
  %v994 = vadd.f32 %v990, %v992
  %v995 = vmax.f32 %v994, 0.0
  %v996 = vld [vmem:[%s75] sm:$0xff]
  %v997 = vld [vmem:[%s75 + $0x8] sm:$0xff]
  %v998 = vld [vmem:[%s77] sm:$0x7]
  %v999 = vld [vmem:[%s49] sm:$0xff]
  %v1000 = vld [vmem:[%s49 + $0x8] sm:$0xff]
  %v1001 = vld [vmem:[%s49 + $0x10] sm:$0xff]
  %v1002 = vld [vmem:[%s49 + $0x18] sm:$0xff]
  %v1003 = vld [vmem:[%s49 + $0x20] sm:$0xff]
  %v1004 = vld [vmem:[%s49 + $0x28] sm:$0xff]
  %v1005 = vld [vmem:[%s49 + $0x30] sm:$0xff]
  %v1006 = vld [vmem:[%s49 + $0x38] sm:$0xff]
  %v1008 = vsel %vm439, %v311, 0
  %v1011 = vsel %vm439, %v312, 0
  %1013 = vmatpush.msra.mxu0 0.0
  %1014 = vmatpush.msra.mxu0 0.0
  %1015 = vmatpush.msra.mxu0 0.0
  %1016 = vmatpush.msra.mxu0 0.0
  %1017 = vmatpush.msra.mxu0 0.0
  %1018 = vmatpush.msra.mxu0 0.0
  %1019 = vmatpush.msra.mxu0 0.0
  %1020 = vmatpush.msra.mxu0 0.0
  %1021 = vmatpush.msra.mxu0 %v1006
  %1022 = vmatpush.msra.mxu0 %v1005
  %1023 = vmatpush.msra.mxu0 %v1004
  %1024 = vmatpush.msra.mxu0 %v1003
  %1025 = vmatpush.msra.mxu0 %v1002
  %1026 = vmatpush.msra.mxu0 %v1001
  %1027 = vmatpush.msra.mxu0 %v1000
  %1028 = vmatpush.msra.mxu0 %v999
  %1029 = vmatmul.f32.gmra.mxu0 %v1008
  %v1030 = vpop.f32.mrf.mxu0
  %v1031 = vadd.f32 0.0, %v1030
  %1032 = vmatmul.f32.gmra.mxu0 %v1011
  %v1033 = vpop.f32.mrf.mxu0
  %v1034 = vadd.f32 0.0, %v1033
  %1035 = vdwg.mxu0
  %v1036 = vmul.f32 %v1031, 0.2
  %v1037 = vmul.f32 %v1034, 0.2
  %v1038 = vmax.f32 %v1031, %v1036
  %v1039 = vmax.f32 %v1034, %v1037
  %v1040 = vld [vmem:[%s45] sm:$0xff]
  %v1041 = vld [vmem:[%s45 + $0x8] sm:$0xff]
  %v1042 = vld [vmem:[%s45 + $0x10] sm:$0xff]
  %v1043 = vld [vmem:[%s45 + $0x18] sm:$0xff]
  %v1044 = vld [vmem:[%s45 + $0x20] sm:$0xff]
  %v1045 = vld [vmem:[%s45 + $0x28] sm:$0xff]
  %v1046 = vld [vmem:[%s45 + $0x30] sm:$0xff]
  %v1047 = vld [vmem:[%s45 + $0x38] sm:$0xff]
  %v1048 = vld [vmem:[%s45 + $0x40] sm:$0xff]
  %v1049 = vld [vmem:[%s45 + $0x48] sm:$0xff]
  %v1050 = vld [vmem:[%s45 + $0x50] sm:$0xff]
  %v1051 = vld [vmem:[%s45 + $0x58] sm:$0xff]
  %v1052 = vld [vmem:[%s45 + $0x60] sm:$0xff]
  %v1053 = vld [vmem:[%s45 + $0x68] sm:$0xff]
  %v1054 = vld [vmem:[%s45 + $0x70] sm:$0xff]
  %v1055 = vld [vmem:[%s45 + $0x78] sm:$0xff]
  %v1056 = vld [vmem:[%s47] sm:$0x1]
  %v1058 = vperm.slane %v1056, 0
  %1060 = vmatpush.msra.mxu0 %v1055
  %1061 = vmatpush.msra.mxu0 %v1054
  %1062 = vmatpush.msra.mxu0 %v1053
  %1063 = vmatpush.msra.mxu0 %v1052
  %1064 = vmatpush.msra.mxu0 %v1051
  %1065 = vmatpush.msra.mxu0 %v1050
  %1066 = vmatpush.msra.mxu0 %v1049
  %1067 = vmatpush.msra.mxu0 %v1048
  %1068 = vmatpush.msra.mxu0 %v1047
  %1069 = vmatpush.msra.mxu0 %v1046
  %1070 = vmatpush.msra.mxu0 %v1045
  %1071 = vmatpush.msra.mxu0 %v1044
  %1072 = vmatpush.msra.mxu0 %v1043
  %1073 = vmatpush.msra.mxu0 %v1042
  %1074 = vmatpush.msra.mxu0 %v1041
  %1075 = vmatpush.msra.mxu0 %v1040
  %1076 = vmatmul.f32.gmra.mxu0 %v995
  %v1077 = vpop.f32.mrf.mxu0
  %v1078 = vadd.f32 %v1058, %v1077
  %1079 = vdwg.mxu0
  %1080 = vmatpush.msra.mxu0 0.0
  %1081 = vmatpush.msra.mxu0 0.0
  %1082 = vmatpush.msra.mxu0 0.0
  %1083 = vmatpush.msra.mxu0 0.0
  %1084 = vmatpush.msra.mxu0 0.0
  %1085 = vmatpush.msra.mxu0 0.0
  %1086 = vmatpush.msra.mxu0 0.0
  %1087 = vmatpush.msra.mxu0 0.0
  %1088 = vmatpush.msra.mxu0 0.0
  %1089 = vmatpush.msra.mxu0 0.0
  %1090 = vmatpush.msra.mxu0 0.0
  %1091 = vmatpush.msra.mxu0 0.0
  %1092 = vmatpush.msra.mxu0 0.0
  %1093 = vmatpush.msra.mxu0 0.0
  %1094 = vmatpush.msra.mxu0 0.0
  %1095 = vmatpush.msra.mxu0 %v1078
  %1096 = vmatmul.f32.gmra.mxu0 %v329
  %v1097 = vpop.f32.mrf.mxu0
  %v1098 = vadd.f32 0.0, %v1097
  %1099 = vmatmul.f32.gmra.mxu0 %v332
  %v1100 = vpop.f32.mrf.mxu0
  %v1101 = vadd.f32 0.0, %v1100
  %1102 = vmatmul.f32.gmra.mxu0 %v335
  %v1103 = vpop.f32.mrf.mxu0
  %v1104 = vadd.f32 0.0, %v1103
  %1105 = vmatmul.f32.gmra.mxu0 %v338
  %v1106 = vpop.f32.mrf.mxu0
  %v1107 = vadd.f32 0.0, %v1106
  %1108 = vdwg.mxu0
  %v1109 = vld [vmem:[%s51] sm:$0xff]
  %v1110 = vld [vmem:[%s51 + $0x8] sm:$0xff]
  %v1111 = vld [vmem:[%s53] sm:$0xff]
  %v1112 = vld [vmem:[%s53 + $0x8] sm:$0xff]
  %v1114 = vsel %vm169, %v1104, 0
  %v1117 = vsel %vm169, %v1107, 0
  %1119 = vmatpush.msra.mxu0 0.0
  %1120 = vmatpush.msra.mxu0 0.0
  %1121 = vmatpush.msra.mxu0 0.0
  %1122 = vmatpush.msra.mxu0 0.0
  %1123 = vmatpush.msra.mxu0 0.0
  %1124 = vmatpush.msra.mxu0 0.0
  %1125 = vmatpush.msra.mxu0 0.0
  %1126 = vmatpush.msra.mxu0 0.0
  %1127 = vmatpush.msra.mxu0 0.0
  %1128 = vmatpush.msra.mxu0 0.0
  %1129 = vmatpush.msra.mxu0 0.0
  %1130 = vmatpush.msra.mxu0 0.0
  %1131 = vmatpush.msra.mxu0 0.0
  %1132 = vmatpush.msra.mxu0 0.0
  %1133 = vmatpush.msra.mxu0 %v1112
  %1134 = vmatpush.msra.mxu0 %v1111
  %1135 = vmatmul.f32.gmra.mxu0 %v1114
  %v1136 = vpop.f32.mrf.mxu0
  %v1137 = vadd.f32 0.0, %v1136
  %1138 = vmatmul.f32.gmra.mxu0 %v1117
  %v1139 = vpop.f32.mrf.mxu0
  %v1140 = vadd.f32 0.0, %v1139
  %1141 = vdwg.mxu0
  %v1143 = vsel %vm169, %v1098, 0
  %v1146 = vsel %vm169, %v1101, 0
  %1148 = vmatpush.msra.mxu0 0.0
  %1149 = vmatpush.msra.mxu0 0.0
  %1150 = vmatpush.msra.mxu0 0.0
  %1151 = vmatpush.msra.mxu0 0.0
  %1152 = vmatpush.msra.mxu0 0.0
  %1153 = vmatpush.msra.mxu0 0.0
  %1154 = vmatpush.msra.mxu0 0.0
  %1155 = vmatpush.msra.mxu0 0.0
  %1156 = vmatpush.msra.mxu0 0.0
  %1157 = vmatpush.msra.mxu0 0.0
  %1158 = vmatpush.msra.mxu0 0.0
  %1159 = vmatpush.msra.mxu0 0.0
  %1160 = vmatpush.msra.mxu0 0.0
  %1161 = vmatpush.msra.mxu0 0.0
  %1162 = vmatpush.msra.mxu0 %v1110
  %1163 = vmatpush.msra.mxu0 %v1109
  %1164 = vmatmul.f32.gmra.mxu0 %v1143
  %v1165 = vpop.f32.mrf.mxu0
  %v1166 = vadd.f32 %v1137, %v1165
  %1167 = vmatmul.f32.gmra.mxu0 %v1146
  %v1168 = vpop.f32.mrf.mxu0
  %v1169 = vadd.f32 %v1140, %v1168
  %1170 = vdwg.mxu0
  %v1171 = vld [vmem:[%s55] sm:$0xff]
  %v1172 = vld [vmem:[%s55 + $0x8] sm:$0xff]
  %v1173 = vld [vmem:[%s55 + $0x10] sm:$0xff]
  %v1174 = vld [vmem:[%s55 + $0x18] sm:$0xff]
  %v1175 = vld [vmem:[%s55 + $0x20] sm:$0xff]
  %v1176 = vld [vmem:[%s55 + $0x28] sm:$0xff]
  %v1177 = vld [vmem:[%s55 + $0x30] sm:$0xff]
  %v1178 = vld [vmem:[%s55 + $0x38] sm:$0xff]
  %v1179 = vld [vmem:[%s55 + $0x40] sm:$0xff]
  %v1180 = vld [vmem:[%s55 + $0x48] sm:$0xff]
  %v1181 = vld [vmem:[%s55 + $0x50] sm:$0xff]
  %v1182 = vld [vmem:[%s55 + $0x58] sm:$0xff]
  %v1183 = vld [vmem:[%s55 + $0x60] sm:$0xff]
  %v1184 = vld [vmem:[%s55 + $0x68] sm:$0xff]
  %v1185 = vld [vmem:[%s55 + $0x70] sm:$0xff]
  %v1186 = vld [vmem:[%s55 + $0x78] sm:$0xff]
  %1187 = vmatpush.msra.mxu0 %v1186
  %1188 = vmatpush.msra.mxu0 %v1185
  %1189 = vmatpush.msra.mxu0 %v1184
  %1190 = vmatpush.msra.mxu0 %v1183
  %1191 = vmatpush.msra.mxu0 %v1182
  %1192 = vmatpush.msra.mxu0 %v1181
  %1193 = vmatpush.msra.mxu0 %v1180
  %1194 = vmatpush.msra.mxu0 %v1179
  %1195 = vmatpush.msra.mxu0 %v1178
  %1196 = vmatpush.msra.mxu0 %v1177
  %1197 = vmatpush.msra.mxu0 %v1176
  %1198 = vmatpush.msra.mxu0 %v1175
  %1199 = vmatpush.msra.mxu0 %v1174
  %1200 = vmatpush.msra.mxu0 %v1173
  %1201 = vmatpush.msra.mxu0 %v1172
  %1202 = vmatpush.msra.mxu0 %v1171
  %1203 = vmatmul.f32.gmra.mxu0 %v1038
  %v1204 = vpop.f32.mrf.mxu0
  %v1205 = vadd.f32 0.0, %v1204
  %1206 = vmatmul.f32.gmra.mxu0 %v1039
  %v1207 = vpop.f32.mrf.mxu0
  %v1208 = vadd.f32 0.0, %v1207
  %1209 = vdwg.mxu0
  %v1210 = vadd.f32 %v1166, %v1205
  %v1211 = vadd.f32 %v1169, %v1208
  %v1212 = vmul.f32 %v1210, 0.2
  %v1213 = vmul.f32 %v1211, 0.2
  %v1214 = vmax.f32 %v1210, %v1212
  %v1215 = vmax.f32 %v1211, %v1213
  %v1216 = vadd.f32 %v1214, %v472
  %v1217 = vadd.f32 %v1215, %v477
  %v1218 = vadd.f32 %v1214, %v482
  %v1219 = vadd.f32 %v1215, %v487
  %v1220 = vadd.f32 %v1214, %v492
  %v1221 = vadd.f32 %v1215, %v497
  %v1222 = vadd.f32 %v1214, %v502
  %v1223 = vadd.f32 %v1215, %v507
  %v1224 = vadd.f32 %v1214, %v512
  %v1225 = vadd.f32 %v1215, %v517
  %v1226 = vadd.f32 %v1214, %v522
  %v1227 = vadd.f32 %v1215, %v527
  %v1228 = vadd.f32 %v1214, %v532
  %v1229 = vadd.f32 %v1215, %v537
  %v1230 = vadd.f32 %v1214, %v542
  %v1231 = vadd.f32 %v1215, %v547
  %v1232 = vsel %vm277, %v1216, -inf
  %v1233 = vsel %vm277, %v1217, -inf
  %v1234 = vmax.f32 %v1232, %v1233
  %v1235 = vrot.slane %v1234, 4
  %v1236 = vmax.f32 %v1234, %v1235
  %v1237 = vrot.slane %v1236, 2
  %v1238 = vmax.f32 %v1236, %v1237
  %v1239 = vrot.slane %v1238, 1
  %v1240 = vmax.f32 %v1238, %v1239
  %v1241 = vsel %vm277, %v1218, -inf
  %v1242 = vsel %vm277, %v1219, -inf
  %v1243 = vmax.f32 %v1241, %v1242
  %v1244 = vrot.slane %v1243, 4
  %v1245 = vmax.f32 %v1243, %v1244
  %v1246 = vrot.slane %v1245, 2
  %v1247 = vmax.f32 %v1245, %v1246
  %v1248 = vrot.slane %v1247, 1
  %v1249 = vmax.f32 %v1247, %v1248
  %v1250 = vsel %vm277, %v1220, -inf
  %v1251 = vsel %vm277, %v1221, -inf
  %v1252 = vmax.f32 %v1250, %v1251
  %v1253 = vrot.slane %v1252, 4
  %v1254 = vmax.f32 %v1252, %v1253
  %v1255 = vrot.slane %v1254, 2
  %v1256 = vmax.f32 %v1254, %v1255
  %v1257 = vrot.slane %v1256, 1
  %v1258 = vmax.f32 %v1256, %v1257
  %v1259 = vsel %vm277, %v1222, -inf
  %v1260 = vsel %vm277, %v1223, -inf
  %v1261 = vmax.f32 %v1259, %v1260
  %v1262 = vrot.slane %v1261, 4
  %v1263 = vmax.f32 %v1261, %v1262
  %v1264 = vrot.slane %v1263, 2
  %v1265 = vmax.f32 %v1263, %v1264
  %v1266 = vrot.slane %v1265, 1
  %v1267 = vmax.f32 %v1265, %v1266
  %v1268 = vsel %vm277, %v1224, -inf
  %v1269 = vsel %vm277, %v1225, -inf
  %v1270 = vmax.f32 %v1268, %v1269
  %v1271 = vrot.slane %v1270, 4
  %v1272 = vmax.f32 %v1270, %v1271
  %v1273 = vrot.slane %v1272, 2
  %v1274 = vmax.f32 %v1272, %v1273
  %v1275 = vrot.slane %v1274, 1
  %v1276 = vmax.f32 %v1274, %v1275
  %v1277 = vsel %vm277, %v1226, -inf
  %v1278 = vsel %vm277, %v1227, -inf
  %v1279 = vmax.f32 %v1277, %v1278
  %v1280 = vrot.slane %v1279, 4
  %v1281 = vmax.f32 %v1279, %v1280
  %v1282 = vrot.slane %v1281, 2
  %v1283 = vmax.f32 %v1281, %v1282
  %v1284 = vrot.slane %v1283, 1
  %v1285 = vmax.f32 %v1283, %v1284
  %v1286 = vsel %vm277, %v1228, -inf
  %v1287 = vsel %vm277, %v1229, -inf
  %v1288 = vmax.f32 %v1286, %v1287
  %v1289 = vrot.slane %v1288, 4
  %v1290 = vmax.f32 %v1288, %v1289
  %v1291 = vrot.slane %v1290, 2
  %v1292 = vmax.f32 %v1290, %v1291
  %v1293 = vrot.slane %v1292, 1
  %v1294 = vmax.f32 %v1292, %v1293
  %v1295 = vsel %vm277, %v1230, -inf
  %v1296 = vsel %vm277, %v1231, -inf
  %v1297 = vmax.f32 %v1295, %v1296
  %v1298 = vrot.slane %v1297, 4
  %v1299 = vmax.f32 %v1297, %v1298
  %v1300 = vrot.slane %v1299, 2
  %v1301 = vmax.f32 %v1299, %v1300
  %v1302 = vrot.slane %v1301, 1
  %v1303 = vmax.f32 %v1301, %v1302
  %v1312 = vsel %vm648, %v1249, %v1240
  %v1313 = vsel %vm650, %v1258, %v1312
  %v1314 = vsel %vm652, %v1267, %v1313
  %v1315 = vsel %vm654, %v1276, %v1314
  %v1316 = vsel %vm656, %v1285, %v1315
  %v1317 = vsel %vm658, %v1294, %v1316
  %v1318 = vsel %vm660, %v1303, %v1317
  %v1320 = vsel %vm639, %v1318, 0.0
  %1321 = vmatpush.msra.mxu0 0.0
  %1322 = vmatpush.msra.mxu0 0.0
  %1323 = vmatpush.msra.mxu0 0.0
  %1324 = vmatpush.msra.mxu0 0.0
  %1325 = vmatpush.msra.mxu0 0.0
  %1326 = vmatpush.msra.mxu0 0.0
  %1327 = vmatpush.msra.mxu0 0.0
  %1328 = vmatpush.msra.mxu0 0.0
  %1329 = vmatpush.msra.mxu0 0.0
  %1330 = vmatpush.msra.mxu0 0.0
  %1331 = vmatpush.msra.mxu0 0.0
  %1332 = vmatpush.msra.mxu0 0.0
  %1333 = vmatpush.msra.mxu0 0.0
  %1334 = vmatpush.msra.mxu0 0.0
  %1335 = vmatpush.msra.mxu0 0.0
  %1336 = vmatpush.msra.mxu0 %v1320
  %1337 = vmatmul.f32.gmra.mxu0 %v329
  %v1338 = vpop.f32.mrf.mxu0
  %v1339 = vadd.f32 0.0, %v1338
  %1340 = vmatmul.f32.gmra.mxu0 %v332
  %v1341 = vpop.f32.mrf.mxu0
  %v1342 = vadd.f32 0.0, %v1341
  %1343 = vdwg.mxu0
  %v1344 = vsub.f32 %v1214, %v1339
  %v1345 = vsub.f32 %v1215, %v1342
  %v1346 = vmul.f32 %v1344, 1.442695
  %v1347 = vpow.pop %v1346
  %v1348 = vmul.f32 %v1345, 1.442695
  %v1349 = vpow.pop %v1348
  %v1351 = vsel %vm169, %v168, 0
  %1353 = vmatpush.msra.mxu0 0.0
  %1354 = vmatpush.msra.mxu0 0.0
  %1355 = vmatpush.msra.mxu0 0.0
  %1356 = vmatpush.msra.mxu0 0.0
  %1357 = vmatpush.msra.mxu0 0.0
  %1358 = vmatpush.msra.mxu0 0.0
  %1359 = vmatpush.msra.mxu0 0.0
  %1360 = vmatpush.msra.mxu0 0.0
  %1361 = vmatpush.msra.mxu0 0.0
  %1362 = vmatpush.msra.mxu0 0.0
  %1363 = vmatpush.msra.mxu0 0.0
  %1364 = vmatpush.msra.mxu0 0.0
  %1365 = vmatpush.msra.mxu0 0.0
  %1366 = vmatpush.msra.mxu0 0.0
  %1367 = vmatpush.msra.mxu0 %v1349
  %1368 = vmatpush.msra.mxu0 %v1347
  %1369 = vmatmul.f32.gmra.mxu0 %v1351
  %v1370 = vpop.f32.mrf.mxu0
  %v1371 = vadd.f32 0.0, %v1370
  %1372 = vdwg.mxu0
  %1373 = vmatpush.msra.mxu0 0.0
  %1374 = vmatpush.msra.mxu0 0.0
  %1375 = vmatpush.msra.mxu0 0.0
  %1376 = vmatpush.msra.mxu0 0.0
  %1377 = vmatpush.msra.mxu0 0.0
  %1378 = vmatpush.msra.mxu0 0.0
  %1379 = vmatpush.msra.mxu0 0.0
  %1380 = vmatpush.msra.mxu0 0.0
  %1381 = vmatpush.msra.mxu0 0.0
  %1382 = vmatpush.msra.mxu0 0.0
  %1383 = vmatpush.msra.mxu0 0.0
  %1384 = vmatpush.msra.mxu0 0.0
  %1385 = vmatpush.msra.mxu0 0.0
  %1386 = vmatpush.msra.mxu0 0.0
  %1387 = vmatpush.msra.mxu0 0.0
  %1388 = vmatpush.msra.mxu0 %v1371
  %1389 = vmatmul.f32.gmra.mxu0 %v329
  %v1390 = vpop.f32.mrf.mxu0
  %v1391 = vadd.f32 1e-16, %v1390
  %1392 = vmatmul.f32.gmra.mxu0 %v332
  %v1393 = vpop.f32.mrf.mxu0
  %v1394 = vadd.f32 1e-16, %v1393
  %1395 = vdwg.mxu0
  %v1396 = vrcp.pop %v1391
  %v1397 = vmul.f32 %v1391, %v1396
  %v1398 = vsub.f32 1.0, %v1397
  %v1399 = vmul.f32 %v1396, %v1398
  %v1400 = vadd.f32 %v1396, %v1399
  %vm1401 = vweird.f32 %v1391
  %vm1402 = vweird.f32 %v1396
  %vm1403 = vmor %vm1401, %vm1402
  %v1404 = vsel %vm1403, %v1396, %v1400
  %v1405 = vand.u32 2147483647, %v1391
  %vm1406 = vcmp.eq.f32.partialorder %v1405, 8.507059e+37
  %v1407 = vand.u32 %v1391, 2147483648
  %v1408 = vor.u32 1.1754944e-38, %v1407
  %v1409 = vsel %vm1406, %v1408, %v1404
  %v1410 = vmul.f32 %v1347, %v1409
  %v1411 = vrcp.pop %v1394
  %v1412 = vmul.f32 %v1394, %v1411
  %v1413 = vsub.f32 1.0, %v1412
  %v1414 = vmul.f32 %v1411, %v1413
  %v1415 = vadd.f32 %v1411, %v1414
  %vm1416 = vweird.f32 %v1394
  %vm1417 = vweird.f32 %v1411
  %vm1418 = vmor %vm1416, %vm1417
  %v1419 = vsel %vm1418, %v1411, %v1415
  %v1420 = vand.u32 2147483647, %v1394
  %vm1421 = vcmp.eq.f32.partialorder %v1420, 8.507059e+37
  %v1422 = vand.u32 %v1394, 2147483648
  %v1423 = vor.u32 1.1754944e-38, %v1422
  %v1424 = vsel %vm1421, %v1423, %v1419
  %v1425 = vmul.f32 %v1349, %v1424
  %v1426 = vld [vmem:[%s57] sm:$0xff]
  %v1427 = vld [vmem:[%s57 + $0x8] sm:$0xff]
  %v1428 = vld [vmem:[%s59] sm:$0xff]
  %v1429 = vld [vmem:[%s59 + $0x8] sm:$0xff]
  %v1430 = vld [vmem:[%s59 + $0x10] sm:$0xff]
  %v1431 = vld [vmem:[%s59 + $0x18] sm:$0xff]
  %v1432 = vld [vmem:[%s59 + $0x20] sm:$0xff]
  %v1433 = vld [vmem:[%s59 + $0x28] sm:$0xff]
  %v1434 = vld [vmem:[%s59 + $0x30] sm:$0xff]
  %v1435 = vld [vmem:[%s59 + $0x38] sm:$0xff]
  %v1436 = vld [vmem:[%s59 + $0x40] sm:$0xff]
  %v1437 = vld [vmem:[%s59 + $0x48] sm:$0xff]
  %v1438 = vld [vmem:[%s59 + $0x50] sm:$0xff]
  %v1439 = vld [vmem:[%s59 + $0x58] sm:$0xff]
  %v1440 = vld [vmem:[%s59 + $0x60] sm:$0xff]
  %v1441 = vld [vmem:[%s59 + $0x68] sm:$0xff]
  %v1442 = vld [vmem:[%s59 + $0x70] sm:$0xff]
  %v1443 = vld [vmem:[%s59 + $0x78] sm:$0xff]
  %1444 = vmatpush.msra.mxu0 %v1443
  %1445 = vmatpush.msra.mxu0 %v1442
  %1446 = vmatpush.msra.mxu0 %v1441
  %1447 = vmatpush.msra.mxu0 %v1440
  %1448 = vmatpush.msra.mxu0 %v1439
  %1449 = vmatpush.msra.mxu0 %v1438
  %1450 = vmatpush.msra.mxu0 %v1437
  %1451 = vmatpush.msra.mxu0 %v1436
  %1452 = vmatpush.msra.mxu0 %v1435
  %1453 = vmatpush.msra.mxu0 %v1434
  %1454 = vmatpush.msra.mxu0 %v1433
  %1455 = vmatpush.msra.mxu0 %v1432
  %1456 = vmatpush.msra.mxu0 %v1431
  %1457 = vmatpush.msra.mxu0 %v1430
  %1458 = vmatpush.msra.mxu0 %v1429
  %1459 = vmatpush.msra.mxu0 %v1428
  %1460 = vmatmul.f32.gmra.mxu0 %v1038
  %v1461 = vpop.f32.mrf.mxu0
  %v1462 = vadd.f32 0.0, %v1461
  %1463 = vmatmul.f32.gmra.mxu0 %v1039
  %v1464 = vpop.f32.mrf.mxu0
  %v1465 = vadd.f32 0.0, %v1464
  %1466 = vdwg.mxu0
  %1467 = vmatpush.msra.mxu0 0.0
  %1468 = vmatpush.msra.mxu0 0.0
  %1469 = vmatpush.msra.mxu0 0.0
  %1470 = vmatpush.msra.mxu0 0.0
  %1471 = vmatpush.msra.mxu0 0.0
  %1472 = vmatpush.msra.mxu0 0.0
  %1473 = vmatpush.msra.mxu0 0.0
  %1474 = vmatpush.msra.mxu0 0.0
  %1475 = vmatpush.msra.mxu0 0.0
  %1476 = vmatpush.msra.mxu0 0.0
  %1477 = vmatpush.msra.mxu0 0.0
  %1478 = vmatpush.msra.mxu0 0.0
  %1479 = vmatpush.msra.mxu0 0.0
  %1480 = vmatpush.msra.mxu0 0.0
  %1481 = vmatpush.msra.mxu0 %v1427
  %1482 = vmatpush.msra.mxu0 %v1426
  %1483 = vmatmul.f32.gmra.mxu0 %v1114
  %v1484 = vpop.f32.mrf.mxu0
  %v1485 = vadd.f32 %v1462, %v1484
  %1486 = vmatmul.f32.gmra.mxu0 %v1117
  %v1487 = vpop.f32.mrf.mxu0
  %v1488 = vadd.f32 %v1465, %v1487
  %1489 = vdwg.mxu0
  %v1490 = vld [vmem:[%s61] sm:$0x1]
  %v1492 = vperm.slane %v1490, 0
  %v1494 = vadd.f32 %v1485, %v1492
  %v1495 = vadd.f32 %v1488, %v1492
  %v1497 = vsel %vm169, %v1494, 0
  %v1500 = vsel %vm169, %v1495, 0
  %1502 = vmatpush.msra.mxu0 0.0
  %1503 = vmatpush.msra.mxu0 0.0
  %1504 = vmatpush.msra.mxu0 0.0
  %1505 = vmatpush.msra.mxu0 0.0
  %1506 = vmatpush.msra.mxu0 0.0
  %1507 = vmatpush.msra.mxu0 0.0
  %1508 = vmatpush.msra.mxu0 0.0
  %1509 = vmatpush.msra.mxu0 0.0
  %1510 = vmatpush.msra.mxu0 0.0
  %1511 = vmatpush.msra.mxu0 0.0
  %1512 = vmatpush.msra.mxu0 0.0
  %1513 = vmatpush.msra.mxu0 0.0
  %1514 = vmatpush.msra.mxu0 0.0
  %1515 = vmatpush.msra.mxu0 0.0
  %1516 = vmatpush.msra.mxu0 %v997
  %1517 = vmatpush.msra.mxu0 %v996
  %1518 = vmatmul.f32.gmra.mxu0 %v1497
  %v1519 = vpop.f32.mrf.mxu0
  %v1520 = vadd.f32 0.0, %v1519
  %1521 = vmatmul.f32.gmra.mxu0 %v1500
  %v1522 = vpop.f32.mrf.mxu0
  %v1523 = vadd.f32 0.0, %v1522
  %1524 = vdwg.mxu0
  %v1526 = vsel %vm277, %v1410, 0
  %v1529 = vsel %vm277, %v1425, 0
  %v1532 = vsel %vm284, %v998, 0
  %1534 = vmatpush.msra.mxu0 0.0
  %1535 = vmatpush.msra.mxu0 0.0
  %1536 = vmatpush.msra.mxu0 0.0
  %1537 = vmatpush.msra.mxu0 0.0
  %1538 = vmatpush.msra.mxu0 0.0
  %1539 = vmatpush.msra.mxu0 0.0
  %1540 = vmatpush.msra.mxu0 0.0
  %1541 = vmatpush.msra.mxu0 0.0
  %1542 = vmatpush.msra.mxu0 0.0
  %1543 = vmatpush.msra.mxu0 0.0
  %1544 = vmatpush.msra.mxu0 0.0
  %1545 = vmatpush.msra.mxu0 0.0
  %1546 = vmatpush.msra.mxu0 0.0
  %1547 = vmatpush.msra.mxu0 0.0
  %1548 = vmatpush.msra.mxu0 0.0
  %1549 = vmatpush.msra.mxu0 %v1532
  %1550 = vmatmul.f32.gmra.mxu0 %v1526
  %v1551 = vpop.f32.mrf.mxu0
  %v1552 = vadd.f32 0.0, %v1551
  %1553 = vmatmul.f32.gmra.mxu0 %v1529
  %v1554 = vpop.f32.mrf.mxu0
  %v1555 = vadd.f32 0.0, %v1554
  %1556 = vdwg.mxu0
  %v1557 = vmul.f32 %v1520, %v1552
  %v1558 = vmul.f32 %v1523, %v1555
  %v1559 = vadd.f32 %v1557, %v472
  %v1560 = vadd.f32 %v1558, %v477
  %v1561 = vadd.f32 %v1557, %v482
  %v1562 = vadd.f32 %v1558, %v487
  %v1563 = vadd.f32 %v1557, %v492
  %v1564 = vadd.f32 %v1558, %v497
  %v1565 = vadd.f32 %v1557, %v502
  %v1566 = vadd.f32 %v1558, %v507
  %v1567 = vadd.f32 %v1557, %v512
  %v1568 = vadd.f32 %v1558, %v517
  %v1569 = vadd.f32 %v1557, %v522
  %v1570 = vadd.f32 %v1558, %v527
  %v1571 = vadd.f32 %v1557, %v532
  %v1572 = vadd.f32 %v1558, %v537
  %v1573 = vadd.f32 %v1557, %v542
  %v1574 = vadd.f32 %v1558, %v547
  %vm1575 = vcmask 392192
  %v1576 = vsel %vm1575, %v1559, -inf
  %v1577 = vsel %vm1575, %v1560, -inf
  %v1578 = vmax.f32 %v1576, %v1577
  %v1579 = vrot.slane %v1578, 4
  %v1580 = vmax.f32 %v1578, %v1579
  %v1581 = vrot.slane %v1580, 2
  %v1582 = vmax.f32 %v1580, %v1581
  %v1583 = vrot.slane %v1582, 1
  %v1584 = vmax.f32 %v1582, %v1583
  %v1585 = vsel %vm1575, %v1561, -inf
  %v1586 = vsel %vm1575, %v1562, -inf
  %v1587 = vmax.f32 %v1585, %v1586
  %v1588 = vrot.slane %v1587, 4
  %v1589 = vmax.f32 %v1587, %v1588
  %v1590 = vrot.slane %v1589, 2
  %v1591 = vmax.f32 %v1589, %v1590
  %v1592 = vrot.slane %v1591, 1
  %v1593 = vmax.f32 %v1591, %v1592
  %v1594 = vsel %vm1575, %v1563, -inf
  %v1595 = vsel %vm1575, %v1564, -inf
  %v1596 = vmax.f32 %v1594, %v1595
  %v1597 = vrot.slane %v1596, 4
  %v1598 = vmax.f32 %v1596, %v1597
  %v1599 = vrot.slane %v1598, 2
  %v1600 = vmax.f32 %v1598, %v1599
  %v1601 = vrot.slane %v1600, 1
  %v1602 = vmax.f32 %v1600, %v1601
  %v1603 = vsel %vm1575, %v1565, -inf
  %v1604 = vsel %vm1575, %v1566, -inf
  %v1605 = vmax.f32 %v1603, %v1604
  %v1606 = vrot.slane %v1605, 4
  %v1607 = vmax.f32 %v1605, %v1606
  %v1608 = vrot.slane %v1607, 2
  %v1609 = vmax.f32 %v1607, %v1608
  %v1610 = vrot.slane %v1609, 1
  %v1611 = vmax.f32 %v1609, %v1610
  %v1612 = vsel %vm1575, %v1567, -inf
  %v1613 = vsel %vm1575, %v1568, -inf
  %v1614 = vmax.f32 %v1612, %v1613
  %v1615 = vrot.slane %v1614, 4
  %v1616 = vmax.f32 %v1614, %v1615
  %v1617 = vrot.slane %v1616, 2
  %v1618 = vmax.f32 %v1616, %v1617
  %v1619 = vrot.slane %v1618, 1
  %v1620 = vmax.f32 %v1618, %v1619
  %v1621 = vsel %vm1575, %v1569, -inf
  %v1622 = vsel %vm1575, %v1570, -inf
  %v1623 = vmax.f32 %v1621, %v1622
  %v1624 = vrot.slane %v1623, 4
  %v1625 = vmax.f32 %v1623, %v1624
  %v1626 = vrot.slane %v1625, 2
  %v1627 = vmax.f32 %v1625, %v1626
  %v1628 = vrot.slane %v1627, 1
  %v1629 = vmax.f32 %v1627, %v1628
  %v1630 = vsel %vm1575, %v1571, -inf
  %v1631 = vsel %vm1575, %v1572, -inf
  %v1632 = vmax.f32 %v1630, %v1631
  %v1633 = vrot.slane %v1632, 4
  %v1634 = vmax.f32 %v1632, %v1633
  %v1635 = vrot.slane %v1634, 2
  %v1636 = vmax.f32 %v1634, %v1635
  %v1637 = vrot.slane %v1636, 1
  %v1638 = vmax.f32 %v1636, %v1637
  %v1639 = vsel %vm1575, %v1573, -inf
  %v1640 = vsel %vm1575, %v1574, -inf
  %v1641 = vmax.f32 %v1639, %v1640
  %v1642 = vrot.slane %v1641, 4
  %v1643 = vmax.f32 %v1641, %v1642
  %v1644 = vrot.slane %v1643, 2
  %v1645 = vmax.f32 %v1643, %v1644
  %v1646 = vrot.slane %v1645, 1
  %v1647 = vmax.f32 %v1645, %v1646
  %v1656 = vsel %vm648, %v1593, %v1584
  %v1657 = vsel %vm650, %v1602, %v1656
  %v1658 = vsel %vm652, %v1611, %v1657
  %v1659 = vsel %vm654, %v1620, %v1658
  %v1660 = vsel %vm656, %v1629, %v1659
  %v1661 = vsel %vm658, %v1638, %v1660
  %v1662 = vsel %vm660, %v1647, %v1661
  %v1664 = vsel %vm639, %v1662, 0.0
  %v1666 = vsel %vm169, %v1078, 0
  %1668 = vmatpush.msra.mxu0 0.0
  %1669 = vmatpush.msra.mxu0 0.0
  %1670 = vmatpush.msra.mxu0 0.0
  %1671 = vmatpush.msra.mxu0 0.0
  %1672 = vmatpush.msra.mxu0 0.0
  %1673 = vmatpush.msra.mxu0 0.0
  %1674 = vmatpush.msra.mxu0 0.0
  %1675 = vmatpush.msra.mxu0 0.0
  %1676 = vmatpush.msra.mxu0 0.0
  %1677 = vmatpush.msra.mxu0 0.0
  %1678 = vmatpush.msra.mxu0 0.0
  %1679 = vmatpush.msra.mxu0 0.0
  %1680 = vmatpush.msra.mxu0 0.0
  %1681 = vmatpush.msra.mxu0 0.0
  %1682 = vmatpush.msra.mxu0 %v997
  %1683 = vmatpush.msra.mxu0 %v996
  %1684 = vmatmul.f32.gmra.mxu0 %v1666
  %v1685 = vpop.f32.mrf.mxu0
  %v1686 = vadd.f32 0.0, %v1685
  %1687 = vdwg.mxu0
  %v1688 = vadd.f32 %v1664, %v1686
  %v1689 = vld [vmem:[%s63] sm:$0x1]
  %v1690 = vld [vmem:[%s65] sm:$0x1]
  %v1691 = vsel %vm1575, %v1688, 0.0
  %v1692 = vrot.slane %v1691, 4
  %v1693 = vadd.f32 %v1691, %v1692
  %v1694 = vrot.slane %v1693, 2
  %v1695 = vadd.f32 %v1693, %v1694
  %v1696 = vrot.slane %v1695, 1
  %v1697 = vadd.f32 %v1695, %v1696
  %v1698 = vmul.f32 %v1697, %v679
  %v1699 = vsub.f32 %v1688, %v1698
  %v1700 = vmul.f32 %v1699, %v1699
  %v1701 = vsel %vm1575, %v1700, 0.0
  %v1702 = vrot.slane %v1701, 4
  %v1703 = vadd.f32 %v1701, %v1702
  %v1704 = vrot.slane %v1703, 2
  %v1705 = vadd.f32 %v1703, %v1704
  %v1706 = vrot.slane %v1705, 1
  %v1707 = vadd.f32 %v1705, %v1706
  %v1708 = vmul.f32 %v1707, %v679
  %v1709 = vadd.f32 %v1708, 1e-05
  %v1710 = vrsqrt.pop %v1709
  %v1711 = vmul.f32 %v1710, %v1709
  %v1712 = vmul.f32 %v1711, %v1710
  %v1713 = vmul.f32 0.5, %v1712
  %v1714 = vsub.f32 1.5, %v1713
  %v1715 = vmul.f32 %v1710, %v1714
  %vm1716 = vweird.f32 %v1709
  %vm1717 = vweird.f32 %v1710
  %vm1718 = vmor %vm1716, %vm1717
  %v1719 = vsel %vm1718, %v1710, %v1715
  %v1720 = vmul.f32 %v1699, %v1719
  %v1722 = vperm.slane %v1689, 0
  %v1724 = vmul.f32 %v1720, %v1722
  %v1726 = vperm.slane %v1690, 0
  %v1728 = vadd.f32 %v1724, %v1726
  %v1729 = vmax.f32 %v1728, 0.0
  %v1730 = vld [vmem:[%s67] sm:$0xff]
  %v1731 = vld [vmem:[%s67 + $0x8] sm:$0xff]
  %v1732 = vld [vmem:[%s67 + $0x10] sm:$0xff]
  %v1733 = vld [vmem:[%s67 + $0x18] sm:$0xff]
  %v1734 = vld [vmem:[%s67 + $0x20] sm:$0xff]
  %v1735 = vld [vmem:[%s67 + $0x28] sm:$0xff]
  %v1736 = vld [vmem:[%s69] sm:$0x1]
  %v1738 = vperm.slane %v1736, 0
  %v1741 = vsel %vm1575, %v1729, 0
  %1743 = vmatpush.msra.mxu0 0.0
  %1744 = vmatpush.msra.mxu0 0.0
  %1745 = vmatpush.msra.mxu0 0.0
  %1746 = vmatpush.msra.mxu0 0.0
  %1747 = vmatpush.msra.mxu0 0.0
  %1748 = vmatpush.msra.mxu0 0.0
  %1749 = vmatpush.msra.mxu0 0.0
  %1750 = vmatpush.msra.mxu0 0.0
  %1751 = vmatpush.msra.mxu0 0.0
  %1752 = vmatpush.msra.mxu0 0.0
  %1753 = vmatpush.msra.mxu0 %v1735
  %1754 = vmatpush.msra.mxu0 %v1734
  %1755 = vmatpush.msra.mxu0 %v1733
  %1756 = vmatpush.msra.mxu0 %v1732
  %1757 = vmatpush.msra.mxu0 %v1731
  %1758 = vmatpush.msra.mxu0 %v1730
  %1759 = vmatmul.f32.gmra.mxu0 %v1741
  %v1760 = vpop.f32.mrf.mxu0
  %v1761 = vadd.f32 %v1738, %v1760
  %1762 = vdwg.mxu0
  %v1763 = vmax.f32 %v1761, 0.0
  %v1764 = vld [vmem:[%s71] sm:$0xff]
  %v1765 = vld [vmem:[%s71 + $0x8] sm:$0xff]
  %v1766 = vld [vmem:[%s71 + $0x10] sm:$0xff]
  %v1767 = vld [vmem:[%s71 + $0x18] sm:$0xff]
  %v1768 = vld [vmem:[%s71 + $0x20] sm:$0xff]
  %v1769 = vld [vmem:[%s71 + $0x28] sm:$0xff]
  %v1770 = vld [vmem:[%s71 + $0x30] sm:$0xff]
  %v1771 = vld [vmem:[%s71 + $0x38] sm:$0xff]
  %v1772 = vld [vmem:[%s73] sm:$0x1]
  %v1774 = vperm.slane %v1772, 0
  %v1777 = vsel %vm439, %v1763, 0
  %1779 = vmatpush.msra.mxu0 0.0
  %1780 = vmatpush.msra.mxu0 0.0
  %1781 = vmatpush.msra.mxu0 0.0
  %1782 = vmatpush.msra.mxu0 0.0
  %1783 = vmatpush.msra.mxu0 0.0
  %1784 = vmatpush.msra.mxu0 0.0
  %1785 = vmatpush.msra.mxu0 0.0
  %1786 = vmatpush.msra.mxu0 0.0
  %1787 = vmatpush.msra.mxu0 %v1771
  %1788 = vmatpush.msra.mxu0 %v1770
  %1789 = vmatpush.msra.mxu0 %v1769
  %1790 = vmatpush.msra.mxu0 %v1768
  %1791 = vmatpush.msra.mxu0 %v1767
  %1792 = vmatpush.msra.mxu0 %v1766
  %1793 = vmatpush.msra.mxu0 %v1765
  %1794 = vmatpush.msra.mxu0 %v1764
  %1795 = vmatmul.f32.gmra.mxu0 %v1777
  %v1796 = vpop.f32.mrf.mxu0
  %v1797 = vadd.f32 %v1774, %v1796
  %1798 = vdwg.mxu0
  %v1799 = vxor.u32 %v1797, 2147483648
  %v1800 = vmul.f32 %v1799, 1.442695
  %v1801 = vpow.pop %v1800
  %v1802 = vadd.f32 %v1801, 1.0
  %v1803 = vrcp.pop %v1802
  %v1804 = vmul.f32 %v1802, %v1803
  %v1805 = vsub.f32 1.0, %v1804
  %v1806 = vmul.f32 %v1803, %v1805
  %v1807 = vadd.f32 %v1803, %v1806
  %vm1808 = vweird.f32 %v1802
  %vm1809 = vweird.f32 %v1803
  %vm1810 = vmor %vm1808, %vm1809
  %v1811 = vsel %vm1810, %v1803, %v1807
  %v1812 = vand.u32 2147483647, %v1802
  %vm1813 = vcmp.eq.f32.partialorder %v1812, 8.507059e+37
  %v1814 = vand.u32 %v1802, 2147483648
  %v1815 = vor.u32 1.1754944e-38, %v1814
  %v1816 = vsel %vm1813, %v1815, %v1811
  %v1817 = vmul.f32 1.0, %v1816
  %s1818 = scalar_lea.vmem %s49, 64
  %v1819 = vld [vmem:[%s1818] sm:$0xff]
  %v1820 = vld [vmem:[%s1818 + $0x8] sm:$0xff]
  %v1821 = vld [vmem:[%s1818 + $0x10] sm:$0xff]
  %v1822 = vld [vmem:[%s1818 + $0x18] sm:$0xff]
  %v1823 = vld [vmem:[%s1818 + $0x20] sm:$0xff]
  %v1824 = vld [vmem:[%s1818 + $0x28] sm:$0xff]
  %v1825 = vld [vmem:[%s1818 + $0x30] sm:$0xff]
  %v1826 = vld [vmem:[%s1818 + $0x38] sm:$0xff]
  %1827 = vmatpush.msra.mxu0 0.0
  %1828 = vmatpush.msra.mxu0 0.0
  %1829 = vmatpush.msra.mxu0 0.0
  %1830 = vmatpush.msra.mxu0 0.0
  %1831 = vmatpush.msra.mxu0 0.0
  %1832 = vmatpush.msra.mxu0 0.0
  %1833 = vmatpush.msra.mxu0 0.0
  %1834 = vmatpush.msra.mxu0 0.0
  %1835 = vmatpush.msra.mxu0 %v1826
  %1836 = vmatpush.msra.mxu0 %v1825
  %1837 = vmatpush.msra.mxu0 %v1824
  %1838 = vmatpush.msra.mxu0 %v1823
  %1839 = vmatpush.msra.mxu0 %v1822
  %1840 = vmatpush.msra.mxu0 %v1821
  %1841 = vmatpush.msra.mxu0 %v1820
  %1842 = vmatpush.msra.mxu0 %v1819
  %1843 = vmatmul.f32.gmra.mxu0 %v1008
  %v1844 = vpop.f32.mrf.mxu0
  %v1845 = vadd.f32 0.0, %v1844
  %1846 = vmatmul.f32.gmra.mxu0 %v1011
  %v1847 = vpop.f32.mrf.mxu0
  %v1848 = vadd.f32 0.0, %v1847
  %1849 = vdwg.mxu0
  %v1850 = vmul.f32 %v1845, 0.2
  %v1851 = vmul.f32 %v1848, 0.2
  %v1852 = vmax.f32 %v1845, %v1850
  %v1853 = vmax.f32 %v1848, %v1851
  %s1854 = scalar_lea.vmem %s45, 128
  %v1855 = vld [vmem:[%s1854] sm:$0xff]
  %v1856 = vld [vmem:[%s1854 + $0x8] sm:$0xff]
  %v1857 = vld [vmem:[%s1854 + $0x10] sm:$0xff]
  %v1858 = vld [vmem:[%s1854 + $0x18] sm:$0xff]
  %v1859 = vld [vmem:[%s1854 + $0x20] sm:$0xff]
  %v1860 = vld [vmem:[%s1854 + $0x28] sm:$0xff]
  %v1861 = vld [vmem:[%s1854 + $0x30] sm:$0xff]
  %v1862 = vld [vmem:[%s1854 + $0x38] sm:$0xff]
  %v1863 = vld [vmem:[%s1854 + $0x40] sm:$0xff]
  %v1864 = vld [vmem:[%s1854 + $0x48] sm:$0xff]
  %v1865 = vld [vmem:[%s1854 + $0x50] sm:$0xff]
  %v1866 = vld [vmem:[%s1854 + $0x58] sm:$0xff]
  %v1867 = vld [vmem:[%s1854 + $0x60] sm:$0xff]
  %v1868 = vld [vmem:[%s1854 + $0x68] sm:$0xff]
  %v1869 = vld [vmem:[%s1854 + $0x70] sm:$0xff]
  %v1870 = vld [vmem:[%s1854 + $0x78] sm:$0xff]
  %s1871 = scalar_lea.vmem %s47, 1
  %v1872 = vld [vmem:[%s1871] sm:$0x1]
  %v1874 = vperm.slane %v1872, 0
  %1876 = vmatpush.msra.mxu0 %v1870
  %1877 = vmatpush.msra.mxu0 %v1869
  %1878 = vmatpush.msra.mxu0 %v1868
  %1879 = vmatpush.msra.mxu0 %v1867
  %1880 = vmatpush.msra.mxu0 %v1866
  %1881 = vmatpush.msra.mxu0 %v1865
  %1882 = vmatpush.msra.mxu0 %v1864
  %1883 = vmatpush.msra.mxu0 %v1863
  %1884 = vmatpush.msra.mxu0 %v1862
  %1885 = vmatpush.msra.mxu0 %v1861
  %1886 = vmatpush.msra.mxu0 %v1860
  %1887 = vmatpush.msra.mxu0 %v1859
  %1888 = vmatpush.msra.mxu0 %v1858
  %1889 = vmatpush.msra.mxu0 %v1857
  %1890 = vmatpush.msra.mxu0 %v1856
  %1891 = vmatpush.msra.mxu0 %v1855
  %1892 = vmatmul.f32.gmra.mxu0 %v995
  %v1893 = vpop.f32.mrf.mxu0
  %v1894 = vadd.f32 %v1874, %v1893
  %1895 = vdwg.mxu0
  %1896 = vmatpush.msra.mxu0 0.0
  %1897 = vmatpush.msra.mxu0 0.0
  %1898 = vmatpush.msra.mxu0 0.0
  %1899 = vmatpush.msra.mxu0 0.0
  %1900 = vmatpush.msra.mxu0 0.0
  %1901 = vmatpush.msra.mxu0 0.0
  %1902 = vmatpush.msra.mxu0 0.0
  %1903 = vmatpush.msra.mxu0 0.0
  %1904 = vmatpush.msra.mxu0 0.0
  %1905 = vmatpush.msra.mxu0 0.0
  %1906 = vmatpush.msra.mxu0 0.0
  %1907 = vmatpush.msra.mxu0 0.0
  %1908 = vmatpush.msra.mxu0 0.0
  %1909 = vmatpush.msra.mxu0 0.0
  %1910 = vmatpush.msra.mxu0 0.0
  %1911 = vmatpush.msra.mxu0 %v1894
  %1912 = vmatmul.f32.gmra.mxu0 %v329
  %v1913 = vpop.f32.mrf.mxu0
  %v1914 = vadd.f32 0.0, %v1913
  %1915 = vmatmul.f32.gmra.mxu0 %v332
  %v1916 = vpop.f32.mrf.mxu0
  %v1917 = vadd.f32 0.0, %v1916
  %1918 = vmatmul.f32.gmra.mxu0 %v335
  %v1919 = vpop.f32.mrf.mxu0
  %v1920 = vadd.f32 0.0, %v1919
  %1921 = vmatmul.f32.gmra.mxu0 %v338
  %v1922 = vpop.f32.mrf.mxu0
  %v1923 = vadd.f32 0.0, %v1922
  %1924 = vdwg.mxu0
  %s1925 = scalar_lea.vmem %s51, 16
  %v1926 = vld [vmem:[%s1925] sm:$0xff]
  %v1927 = vld [vmem:[%s1925 + $0x8] sm:$0xff]
  %s1928 = scalar_lea.vmem %s53, 16
  %v1929 = vld [vmem:[%s1928] sm:$0xff]
  %v1930 = vld [vmem:[%s1928 + $0x8] sm:$0xff]
  %v1932 = vsel %vm169, %v1920, 0
  %v1935 = vsel %vm169, %v1923, 0
  %1937 = vmatpush.msra.mxu0 0.0
  %1938 = vmatpush.msra.mxu0 0.0
  %1939 = vmatpush.msra.mxu0 0.0
  %1940 = vmatpush.msra.mxu0 0.0
  %1941 = vmatpush.msra.mxu0 0.0
  %1942 = vmatpush.msra.mxu0 0.0
  %1943 = vmatpush.msra.mxu0 0.0
  %1944 = vmatpush.msra.mxu0 0.0
  %1945 = vmatpush.msra.mxu0 0.0
  %1946 = vmatpush.msra.mxu0 0.0
  %1947 = vmatpush.msra.mxu0 0.0
  %1948 = vmatpush.msra.mxu0 0.0
  %1949 = vmatpush.msra.mxu0 0.0
  %1950 = vmatpush.msra.mxu0 0.0
  %1951 = vmatpush.msra.mxu0 %v1930
  %1952 = vmatpush.msra.mxu0 %v1929
  %1953 = vmatmul.f32.gmra.mxu0 %v1932
  %v1954 = vpop.f32.mrf.mxu0
  %v1955 = vadd.f32 0.0, %v1954
  %1956 = vmatmul.f32.gmra.mxu0 %v1935
  %v1957 = vpop.f32.mrf.mxu0
  %v1958 = vadd.f32 0.0, %v1957
  %1959 = vdwg.mxu0
  %v1961 = vsel %vm169, %v1914, 0
  %v1964 = vsel %vm169, %v1917, 0
  %1966 = vmatpush.msra.mxu0 0.0
  %1967 = vmatpush.msra.mxu0 0.0
  %1968 = vmatpush.msra.mxu0 0.0
  %1969 = vmatpush.msra.mxu0 0.0
  %1970 = vmatpush.msra.mxu0 0.0
  %1971 = vmatpush.msra.mxu0 0.0
  %1972 = vmatpush.msra.mxu0 0.0
  %1973 = vmatpush.msra.mxu0 0.0
  %1974 = vmatpush.msra.mxu0 0.0
  %1975 = vmatpush.msra.mxu0 0.0
  %1976 = vmatpush.msra.mxu0 0.0
  %1977 = vmatpush.msra.mxu0 0.0
  %1978 = vmatpush.msra.mxu0 0.0
  %1979 = vmatpush.msra.mxu0 0.0
  %1980 = vmatpush.msra.mxu0 %v1927
  %1981 = vmatpush.msra.mxu0 %v1926
  %1982 = vmatmul.f32.gmra.mxu0 %v1961
  %v1983 = vpop.f32.mrf.mxu0
  %v1984 = vadd.f32 %v1955, %v1983
  %1985 = vmatmul.f32.gmra.mxu0 %v1964
  %v1986 = vpop.f32.mrf.mxu0
  %v1987 = vadd.f32 %v1958, %v1986
  %1988 = vdwg.mxu0
  %s1989 = scalar_lea.vmem %s55, 128
  %v1990 = vld [vmem:[%s1989] sm:$0xff]
  %v1991 = vld [vmem:[%s1989 + $0x8] sm:$0xff]
  %v1992 = vld [vmem:[%s1989 + $0x10] sm:$0xff]
  %v1993 = vld [vmem:[%s1989 + $0x18] sm:$0xff]
  %v1994 = vld [vmem:[%s1989 + $0x20] sm:$0xff]
  %v1995 = vld [vmem:[%s1989 + $0x28] sm:$0xff]
  %v1996 = vld [vmem:[%s1989 + $0x30] sm:$0xff]
  %v1997 = vld [vmem:[%s1989 + $0x38] sm:$0xff]
  %v1998 = vld [vmem:[%s1989 + $0x40] sm:$0xff]
  %v1999 = vld [vmem:[%s1989 + $0x48] sm:$0xff]
  %v2000 = vld [vmem:[%s1989 + $0x50] sm:$0xff]
  %v2001 = vld [vmem:[%s1989 + $0x58] sm:$0xff]
  %v2002 = vld [vmem:[%s1989 + $0x60] sm:$0xff]
  %v2003 = vld [vmem:[%s1989 + $0x68] sm:$0xff]
  %v2004 = vld [vmem:[%s1989 + $0x70] sm:$0xff]
  %v2005 = vld [vmem:[%s1989 + $0x78] sm:$0xff]
  %2006 = vmatpush.msra.mxu0 %v2005
  %2007 = vmatpush.msra.mxu0 %v2004
  %2008 = vmatpush.msra.mxu0 %v2003
  %2009 = vmatpush.msra.mxu0 %v2002
  %2010 = vmatpush.msra.mxu0 %v2001
  %2011 = vmatpush.msra.mxu0 %v2000
  %2012 = vmatpush.msra.mxu0 %v1999
  %2013 = vmatpush.msra.mxu0 %v1998
  %2014 = vmatpush.msra.mxu0 %v1997
  %2015 = vmatpush.msra.mxu0 %v1996
  %2016 = vmatpush.msra.mxu0 %v1995
  %2017 = vmatpush.msra.mxu0 %v1994
  %2018 = vmatpush.msra.mxu0 %v1993
  %2019 = vmatpush.msra.mxu0 %v1992
  %2020 = vmatpush.msra.mxu0 %v1991
  %2021 = vmatpush.msra.mxu0 %v1990
  %2022 = vmatmul.f32.gmra.mxu0 %v1852
  %v2023 = vpop.f32.mrf.mxu0
  %v2024 = vadd.f32 0.0, %v2023
  %2025 = vmatmul.f32.gmra.mxu0 %v1853
  %v2026 = vpop.f32.mrf.mxu0
  %v2027 = vadd.f32 0.0, %v2026
  %2028 = vdwg.mxu0
  %v2029 = vadd.f32 %v1984, %v2024
  %v2030 = vadd.f32 %v1987, %v2027
  %v2031 = vmul.f32 %v2029, 0.2
  %v2032 = vmul.f32 %v2030, 0.2
  %v2033 = vmax.f32 %v2029, %v2031
  %v2034 = vmax.f32 %v2030, %v2032
  %v2035 = vadd.f32 %v2033, %v472
  %v2036 = vadd.f32 %v2034, %v477
  %v2037 = vadd.f32 %v2033, %v482
  %v2038 = vadd.f32 %v2034, %v487
  %v2039 = vadd.f32 %v2033, %v492
  %v2040 = vadd.f32 %v2034, %v497
  %v2041 = vadd.f32 %v2033, %v502
  %v2042 = vadd.f32 %v2034, %v507
  %v2043 = vadd.f32 %v2033, %v512
  %v2044 = vadd.f32 %v2034, %v517
  %v2045 = vadd.f32 %v2033, %v522
  %v2046 = vadd.f32 %v2034, %v527
  %v2047 = vadd.f32 %v2033, %v532
  %v2048 = vadd.f32 %v2034, %v537
  %v2049 = vadd.f32 %v2033, %v542
  %v2050 = vadd.f32 %v2034, %v547
  %v2051 = vsel %vm277, %v2035, -inf
  %v2052 = vsel %vm277, %v2036, -inf
  %v2053 = vmax.f32 %v2051, %v2052
  %v2054 = vrot.slane %v2053, 4
  %v2055 = vmax.f32 %v2053, %v2054
  %v2056 = vrot.slane %v2055, 2
  %v2057 = vmax.f32 %v2055, %v2056
  %v2058 = vrot.slane %v2057, 1
  %v2059 = vmax.f32 %v2057, %v2058
  %v2060 = vsel %vm277, %v2037, -inf
  %v2061 = vsel %vm277, %v2038, -inf
  %v2062 = vmax.f32 %v2060, %v2061
  %v2063 = vrot.slane %v2062, 4
  %v2064 = vmax.f32 %v2062, %v2063
  %v2065 = vrot.slane %v2064, 2
  %v2066 = vmax.f32 %v2064, %v2065
  %v2067 = vrot.slane %v2066, 1
  %v2068 = vmax.f32 %v2066, %v2067
  %v2069 = vsel %vm277, %v2039, -inf
  %v2070 = vsel %vm277, %v2040, -inf
  %v2071 = vmax.f32 %v2069, %v2070
  %v2072 = vrot.slane %v2071, 4
  %v2073 = vmax.f32 %v2071, %v2072
  %v2074 = vrot.slane %v2073, 2
  %v2075 = vmax.f32 %v2073, %v2074
  %v2076 = vrot.slane %v2075, 1
  %v2077 = vmax.f32 %v2075, %v2076
  %v2078 = vsel %vm277, %v2041, -inf
  %v2079 = vsel %vm277, %v2042, -inf
  %v2080 = vmax.f32 %v2078, %v2079
  %v2081 = vrot.slane %v2080, 4
  %v2082 = vmax.f32 %v2080, %v2081
  %v2083 = vrot.slane %v2082, 2
  %v2084 = vmax.f32 %v2082, %v2083
  %v2085 = vrot.slane %v2084, 1
  %v2086 = vmax.f32 %v2084, %v2085
  %v2087 = vsel %vm277, %v2043, -inf
  %v2088 = vsel %vm277, %v2044, -inf
  %v2089 = vmax.f32 %v2087, %v2088
  %v2090 = vrot.slane %v2089, 4
  %v2091 = vmax.f32 %v2089, %v2090
  %v2092 = vrot.slane %v2091, 2
  %v2093 = vmax.f32 %v2091, %v2092
  %v2094 = vrot.slane %v2093, 1
  %v2095 = vmax.f32 %v2093, %v2094
  %v2096 = vsel %vm277, %v2045, -inf
  %v2097 = vsel %vm277, %v2046, -inf
  %v2098 = vmax.f32 %v2096, %v2097
  %v2099 = vrot.slane %v2098, 4
  %v2100 = vmax.f32 %v2098, %v2099
  %v2101 = vrot.slane %v2100, 2
  %v2102 = vmax.f32 %v2100, %v2101
  %v2103 = vrot.slane %v2102, 1
  %v2104 = vmax.f32 %v2102, %v2103
  %v2105 = vsel %vm277, %v2047, -inf
  %v2106 = vsel %vm277, %v2048, -inf
  %v2107 = vmax.f32 %v2105, %v2106
  %v2108 = vrot.slane %v2107, 4
  %v2109 = vmax.f32 %v2107, %v2108
  %v2110 = vrot.slane %v2109, 2
  %v2111 = vmax.f32 %v2109, %v2110
  %v2112 = vrot.slane %v2111, 1
  %v2113 = vmax.f32 %v2111, %v2112
  %v2114 = vsel %vm277, %v2049, -inf
  %v2115 = vsel %vm277, %v2050, -inf
  %v2116 = vmax.f32 %v2114, %v2115
  %v2117 = vrot.slane %v2116, 4
  %v2118 = vmax.f32 %v2116, %v2117
  %v2119 = vrot.slane %v2118, 2
  %v2120 = vmax.f32 %v2118, %v2119
  %v2121 = vrot.slane %v2120, 1
  %v2122 = vmax.f32 %v2120, %v2121
  %v2131 = vsel %vm648, %v2068, %v2059
  %v2132 = vsel %vm650, %v2077, %v2131
  %v2133 = vsel %vm652, %v2086, %v2132
  %v2134 = vsel %vm654, %v2095, %v2133
  %v2135 = vsel %vm656, %v2104, %v2134
  %v2136 = vsel %vm658, %v2113, %v2135
  %v2137 = vsel %vm660, %v2122, %v2136
  %v2139 = vsel %vm639, %v2137, 0.0
  %2140 = vmatpush.msra.mxu0 0.0
  %2141 = vmatpush.msra.mxu0 0.0
  %2142 = vmatpush.msra.mxu0 0.0
  %2143 = vmatpush.msra.mxu0 0.0
  %2144 = vmatpush.msra.mxu0 0.0
  %2145 = vmatpush.msra.mxu0 0.0
  %2146 = vmatpush.msra.mxu0 0.0
  %2147 = vmatpush.msra.mxu0 0.0
  %2148 = vmatpush.msra.mxu0 0.0
  %2149 = vmatpush.msra.mxu0 0.0
  %2150 = vmatpush.msra.mxu0 0.0
  %2151 = vmatpush.msra.mxu0 0.0
  %2152 = vmatpush.msra.mxu0 0.0
  %2153 = vmatpush.msra.mxu0 0.0
  %2154 = vmatpush.msra.mxu0 0.0
  %2155 = vmatpush.msra.mxu0 %v2139
  %2156 = vmatmul.f32.gmra.mxu0 %v329
  %v2157 = vpop.f32.mrf.mxu0
  %v2158 = vadd.f32 0.0, %v2157
  %2159 = vmatmul.f32.gmra.mxu0 %v332
  %v2160 = vpop.f32.mrf.mxu0
  %v2161 = vadd.f32 0.0, %v2160
  %2162 = vdwg.mxu0
  %v2163 = vsub.f32 %v2033, %v2158
  %v2164 = vsub.f32 %v2034, %v2161
  %v2165 = vmul.f32 %v2163, 1.442695
  %v2166 = vpow.pop %v2165
  %v2167 = vmul.f32 %v2164, 1.442695
  %v2168 = vpow.pop %v2167
  %2169 = vmatpush.msra.mxu0 0.0
  %2170 = vmatpush.msra.mxu0 0.0
  %2171 = vmatpush.msra.mxu0 0.0
  %2172 = vmatpush.msra.mxu0 0.0
  %2173 = vmatpush.msra.mxu0 0.0
  %2174 = vmatpush.msra.mxu0 0.0
  %2175 = vmatpush.msra.mxu0 0.0
  %2176 = vmatpush.msra.mxu0 0.0
  %2177 = vmatpush.msra.mxu0 0.0
  %2178 = vmatpush.msra.mxu0 0.0
  %2179 = vmatpush.msra.mxu0 0.0
  %2180 = vmatpush.msra.mxu0 0.0
  %2181 = vmatpush.msra.mxu0 0.0
  %2182 = vmatpush.msra.mxu0 0.0
  %2183 = vmatpush.msra.mxu0 %v2168
  %2184 = vmatpush.msra.mxu0 %v2166
  %2185 = vmatmul.f32.gmra.mxu0 %v1351
  %v2186 = vpop.f32.mrf.mxu0
  %v2187 = vadd.f32 0.0, %v2186
  %2188 = vdwg.mxu0
  %2189 = vmatpush.msra.mxu0 0.0
  %2190 = vmatpush.msra.mxu0 0.0
  %2191 = vmatpush.msra.mxu0 0.0
  %2192 = vmatpush.msra.mxu0 0.0
  %2193 = vmatpush.msra.mxu0 0.0
  %2194 = vmatpush.msra.mxu0 0.0
  %2195 = vmatpush.msra.mxu0 0.0
  %2196 = vmatpush.msra.mxu0 0.0
  %2197 = vmatpush.msra.mxu0 0.0
  %2198 = vmatpush.msra.mxu0 0.0
  %2199 = vmatpush.msra.mxu0 0.0
  %2200 = vmatpush.msra.mxu0 0.0
  %2201 = vmatpush.msra.mxu0 0.0
  %2202 = vmatpush.msra.mxu0 0.0
  %2203 = vmatpush.msra.mxu0 0.0
  %2204 = vmatpush.msra.mxu0 %v2187
  %2205 = vmatmul.f32.gmra.mxu0 %v329
  %v2206 = vpop.f32.mrf.mxu0
  %v2207 = vadd.f32 1e-16, %v2206
  %2208 = vmatmul.f32.gmra.mxu0 %v332
  %v2209 = vpop.f32.mrf.mxu0
  %v2210 = vadd.f32 1e-16, %v2209
  %2211 = vdwg.mxu0
  %v2212 = vrcp.pop %v2207
  %v2213 = vmul.f32 %v2207, %v2212
  %v2214 = vsub.f32 1.0, %v2213
  %v2215 = vmul.f32 %v2212, %v2214
  %v2216 = vadd.f32 %v2212, %v2215
  %vm2217 = vweird.f32 %v2207
  %vm2218 = vweird.f32 %v2212
  %vm2219 = vmor %vm2217, %vm2218
  %v2220 = vsel %vm2219, %v2212, %v2216
  %v2221 = vand.u32 2147483647, %v2207
  %vm2222 = vcmp.eq.f32.partialorder %v2221, 8.507059e+37
  %v2223 = vand.u32 %v2207, 2147483648
  %v2224 = vor.u32 1.1754944e-38, %v2223
  %v2225 = vsel %vm2222, %v2224, %v2220
  %v2226 = vmul.f32 %v2166, %v2225
  %v2227 = vrcp.pop %v2210
  %v2228 = vmul.f32 %v2210, %v2227
  %v2229 = vsub.f32 1.0, %v2228
  %v2230 = vmul.f32 %v2227, %v2229
  %v2231 = vadd.f32 %v2227, %v2230
  %vm2232 = vweird.f32 %v2210
  %vm2233 = vweird.f32 %v2227
  %vm2234 = vmor %vm2232, %vm2233
  %v2235 = vsel %vm2234, %v2227, %v2231
  %v2236 = vand.u32 2147483647, %v2210
  %vm2237 = vcmp.eq.f32.partialorder %v2236, 8.507059e+37
  %v2238 = vand.u32 %v2210, 2147483648
  %v2239 = vor.u32 1.1754944e-38, %v2238
  %v2240 = vsel %vm2237, %v2239, %v2235
  %v2241 = vmul.f32 %v2168, %v2240
  %s2242 = scalar_lea.vmem %s57, 16
  %v2243 = vld [vmem:[%s2242] sm:$0xff]
  %v2244 = vld [vmem:[%s2242 + $0x8] sm:$0xff]
  %s2245 = scalar_lea.vmem %s59, 128
  %v2246 = vld [vmem:[%s2245] sm:$0xff]
  %v2247 = vld [vmem:[%s2245 + $0x8] sm:$0xff]
  %v2248 = vld [vmem:[%s2245 + $0x10] sm:$0xff]
  %v2249 = vld [vmem:[%s2245 + $0x18] sm:$0xff]
  %v2250 = vld [vmem:[%s2245 + $0x20] sm:$0xff]
  %v2251 = vld [vmem:[%s2245 + $0x28] sm:$0xff]
  %v2252 = vld [vmem:[%s2245 + $0x30] sm:$0xff]
  %v2253 = vld [vmem:[%s2245 + $0x38] sm:$0xff]
  %v2254 = vld [vmem:[%s2245 + $0x40] sm:$0xff]
  %v2255 = vld [vmem:[%s2245 + $0x48] sm:$0xff]
  %v2256 = vld [vmem:[%s2245 + $0x50] sm:$0xff]
  %v2257 = vld [vmem:[%s2245 + $0x58] sm:$0xff]
  %v2258 = vld [vmem:[%s2245 + $0x60] sm:$0xff]
  %v2259 = vld [vmem:[%s2245 + $0x68] sm:$0xff]
  %v2260 = vld [vmem:[%s2245 + $0x70] sm:$0xff]
  %v2261 = vld [vmem:[%s2245 + $0x78] sm:$0xff]
  %2262 = vmatpush.msra.mxu0 %v2261
  %2263 = vmatpush.msra.mxu0 %v2260
  %2264 = vmatpush.msra.mxu0 %v2259
  %2265 = vmatpush.msra.mxu0 %v2258
  %2266 = vmatpush.msra.mxu0 %v2257
  %2267 = vmatpush.msra.mxu0 %v2256
  %2268 = vmatpush.msra.mxu0 %v2255
  %2269 = vmatpush.msra.mxu0 %v2254
  %2270 = vmatpush.msra.mxu0 %v2253
  %2271 = vmatpush.msra.mxu0 %v2252
  %2272 = vmatpush.msra.mxu0 %v2251
  %2273 = vmatpush.msra.mxu0 %v2250
  %2274 = vmatpush.msra.mxu0 %v2249
  %2275 = vmatpush.msra.mxu0 %v2248
  %2276 = vmatpush.msra.mxu0 %v2247
  %2277 = vmatpush.msra.mxu0 %v2246
  %2278 = vmatmul.f32.gmra.mxu0 %v1852
  %v2279 = vpop.f32.mrf.mxu0
  %v2280 = vadd.f32 0.0, %v2279
  %2281 = vmatmul.f32.gmra.mxu0 %v1853
  %v2282 = vpop.f32.mrf.mxu0
  %v2283 = vadd.f32 0.0, %v2282
  %2284 = vdwg.mxu0
  %2285 = vmatpush.msra.mxu0 0.0
  %2286 = vmatpush.msra.mxu0 0.0
  %2287 = vmatpush.msra.mxu0 0.0
  %2288 = vmatpush.msra.mxu0 0.0
  %2289 = vmatpush.msra.mxu0 0.0
  %2290 = vmatpush.msra.mxu0 0.0
  %2291 = vmatpush.msra.mxu0 0.0
  %2292 = vmatpush.msra.mxu0 0.0
  %2293 = vmatpush.msra.mxu0 0.0
  %2294 = vmatpush.msra.mxu0 0.0
  %2295 = vmatpush.msra.mxu0 0.0
  %2296 = vmatpush.msra.mxu0 0.0
  %2297 = vmatpush.msra.mxu0 0.0
  %2298 = vmatpush.msra.mxu0 0.0
  %2299 = vmatpush.msra.mxu0 %v2244
  %2300 = vmatpush.msra.mxu0 %v2243
  %2301 = vmatmul.f32.gmra.mxu0 %v1932
  %v2302 = vpop.f32.mrf.mxu0
  %v2303 = vadd.f32 %v2280, %v2302
  %2304 = vmatmul.f32.gmra.mxu0 %v1935
  %v2305 = vpop.f32.mrf.mxu0
  %v2306 = vadd.f32 %v2283, %v2305
  %2307 = vdwg.mxu0
  %s2308 = scalar_lea.vmem %s61, 1
  %v2309 = vld [vmem:[%s2308] sm:$0x1]
  %v2311 = vperm.slane %v2309, 0
  %v2313 = vadd.f32 %v2303, %v2311
  %v2314 = vadd.f32 %v2306, %v2311
  %v2316 = vsel %vm169, %v2313, 0
  %v2319 = vsel %vm169, %v2314, 0
  %2321 = vmatpush.msra.mxu0 0.0
  %2322 = vmatpush.msra.mxu0 0.0
  %2323 = vmatpush.msra.mxu0 0.0
  %2324 = vmatpush.msra.mxu0 0.0
  %2325 = vmatpush.msra.mxu0 0.0
  %2326 = vmatpush.msra.mxu0 0.0
  %2327 = vmatpush.msra.mxu0 0.0
  %2328 = vmatpush.msra.mxu0 0.0
  %2329 = vmatpush.msra.mxu0 0.0
  %2330 = vmatpush.msra.mxu0 0.0
  %2331 = vmatpush.msra.mxu0 0.0
  %2332 = vmatpush.msra.mxu0 0.0
  %2333 = vmatpush.msra.mxu0 0.0
  %2334 = vmatpush.msra.mxu0 0.0
  %2335 = vmatpush.msra.mxu0 %v997
  %2336 = vmatpush.msra.mxu0 %v996
  %2337 = vmatmul.f32.gmra.mxu0 %v2316
  %v2338 = vpop.f32.mrf.mxu0
  %v2339 = vadd.f32 0.0, %v2338
  %2340 = vmatmul.f32.gmra.mxu0 %v2319
  %v2341 = vpop.f32.mrf.mxu0
  %v2342 = vadd.f32 0.0, %v2341
  %2343 = vdwg.mxu0
  %v2345 = vsel %vm277, %v2226, 0
  %v2348 = vsel %vm277, %v2241, 0
  %2350 = vmatpush.msra.mxu0 0.0
  %2351 = vmatpush.msra.mxu0 0.0
  %2352 = vmatpush.msra.mxu0 0.0
  %2353 = vmatpush.msra.mxu0 0.0
  %2354 = vmatpush.msra.mxu0 0.0
  %2355 = vmatpush.msra.mxu0 0.0
  %2356 = vmatpush.msra.mxu0 0.0
  %2357 = vmatpush.msra.mxu0 0.0
  %2358 = vmatpush.msra.mxu0 0.0
  %2359 = vmatpush.msra.mxu0 0.0
  %2360 = vmatpush.msra.mxu0 0.0
  %2361 = vmatpush.msra.mxu0 0.0
  %2362 = vmatpush.msra.mxu0 0.0
  %2363 = vmatpush.msra.mxu0 0.0
  %2364 = vmatpush.msra.mxu0 0.0
  %2365 = vmatpush.msra.mxu0 %v1532
  %2366 = vmatmul.f32.gmra.mxu0 %v2345
  %v2367 = vpop.f32.mrf.mxu0
  %v2368 = vadd.f32 0.0, %v2367
  %2369 = vmatmul.f32.gmra.mxu0 %v2348
  %v2370 = vpop.f32.mrf.mxu0
  %v2371 = vadd.f32 0.0, %v2370
  %2372 = vdwg.mxu0
  %v2373 = vmul.f32 %v2339, %v2368
  %v2374 = vmul.f32 %v2342, %v2371
  %v2375 = vadd.f32 %v2373, %v472
  %v2376 = vadd.f32 %v2374, %v477
  %v2377 = vadd.f32 %v2373, %v482
  %v2378 = vadd.f32 %v2374, %v487
  %v2379 = vadd.f32 %v2373, %v492
  %v2380 = vadd.f32 %v2374, %v497
  %v2381 = vadd.f32 %v2373, %v502
  %v2382 = vadd.f32 %v2374, %v507
  %v2383 = vadd.f32 %v2373, %v512
  %v2384 = vadd.f32 %v2374, %v517
  %v2385 = vadd.f32 %v2373, %v522
  %v2386 = vadd.f32 %v2374, %v527
  %v2387 = vadd.f32 %v2373, %v532
  %v2388 = vadd.f32 %v2374, %v537
  %v2389 = vadd.f32 %v2373, %v542
  %v2390 = vadd.f32 %v2374, %v547
  %v2391 = vsel %vm1575, %v2375, -inf
  %v2392 = vsel %vm1575, %v2376, -inf
  %v2393 = vmax.f32 %v2391, %v2392
  %v2394 = vrot.slane %v2393, 4
  %v2395 = vmax.f32 %v2393, %v2394
  %v2396 = vrot.slane %v2395, 2
  %v2397 = vmax.f32 %v2395, %v2396
  %v2398 = vrot.slane %v2397, 1
  %v2399 = vmax.f32 %v2397, %v2398
  %v2400 = vsel %vm1575, %v2377, -inf
  %v2401 = vsel %vm1575, %v2378, -inf
  %v2402 = vmax.f32 %v2400, %v2401
  %v2403 = vrot.slane %v2402, 4
  %v2404 = vmax.f32 %v2402, %v2403
  %v2405 = vrot.slane %v2404, 2
  %v2406 = vmax.f32 %v2404, %v2405
  %v2407 = vrot.slane %v2406, 1
  %v2408 = vmax.f32 %v2406, %v2407
  %v2409 = vsel %vm1575, %v2379, -inf
  %v2410 = vsel %vm1575, %v2380, -inf
  %v2411 = vmax.f32 %v2409, %v2410
  %v2412 = vrot.slane %v2411, 4
  %v2413 = vmax.f32 %v2411, %v2412
  %v2414 = vrot.slane %v2413, 2
  %v2415 = vmax.f32 %v2413, %v2414
  %v2416 = vrot.slane %v2415, 1
  %v2417 = vmax.f32 %v2415, %v2416
  %v2418 = vsel %vm1575, %v2381, -inf
  %v2419 = vsel %vm1575, %v2382, -inf
  %v2420 = vmax.f32 %v2418, %v2419
  %v2421 = vrot.slane %v2420, 4
  %v2422 = vmax.f32 %v2420, %v2421
  %v2423 = vrot.slane %v2422, 2
  %v2424 = vmax.f32 %v2422, %v2423
  %v2425 = vrot.slane %v2424, 1
  %v2426 = vmax.f32 %v2424, %v2425
  %v2427 = vsel %vm1575, %v2383, -inf
  %v2428 = vsel %vm1575, %v2384, -inf
  %v2429 = vmax.f32 %v2427, %v2428
  %v2430 = vrot.slane %v2429, 4
  %v2431 = vmax.f32 %v2429, %v2430
  %v2432 = vrot.slane %v2431, 2
  %v2433 = vmax.f32 %v2431, %v2432
  %v2434 = vrot.slane %v2433, 1
  %v2435 = vmax.f32 %v2433, %v2434
  %v2436 = vsel %vm1575, %v2385, -inf
  %v2437 = vsel %vm1575, %v2386, -inf
  %v2438 = vmax.f32 %v2436, %v2437
  %v2439 = vrot.slane %v2438, 4
  %v2440 = vmax.f32 %v2438, %v2439
  %v2441 = vrot.slane %v2440, 2
  %v2442 = vmax.f32 %v2440, %v2441
  %v2443 = vrot.slane %v2442, 1
  %v2444 = vmax.f32 %v2442, %v2443
  %v2445 = vsel %vm1575, %v2387, -inf
  %v2446 = vsel %vm1575, %v2388, -inf
  %v2447 = vmax.f32 %v2445, %v2446
  %v2448 = vrot.slane %v2447, 4
  %v2449 = vmax.f32 %v2447, %v2448
  %v2450 = vrot.slane %v2449, 2
  %v2451 = vmax.f32 %v2449, %v2450
  %v2452 = vrot.slane %v2451, 1
  %v2453 = vmax.f32 %v2451, %v2452
  %v2454 = vsel %vm1575, %v2389, -inf
  %v2455 = vsel %vm1575, %v2390, -inf
  %v2456 = vmax.f32 %v2454, %v2455
  %v2457 = vrot.slane %v2456, 4
  %v2458 = vmax.f32 %v2456, %v2457
  %v2459 = vrot.slane %v2458, 2
  %v2460 = vmax.f32 %v2458, %v2459
  %v2461 = vrot.slane %v2460, 1
  %v2462 = vmax.f32 %v2460, %v2461
  %v2471 = vsel %vm648, %v2408, %v2399
  %v2472 = vsel %vm650, %v2417, %v2471
  %v2473 = vsel %vm652, %v2426, %v2472
  %v2474 = vsel %vm654, %v2435, %v2473
  %v2475 = vsel %vm656, %v2444, %v2474
  %v2476 = vsel %vm658, %v2453, %v2475
  %v2477 = vsel %vm660, %v2462, %v2476
  %v2479 = vsel %vm639, %v2477, 0.0
  %v2481 = vsel %vm169, %v1894, 0
  %2483 = vmatpush.msra.mxu0 0.0
  %2484 = vmatpush.msra.mxu0 0.0
  %2485 = vmatpush.msra.mxu0 0.0
  %2486 = vmatpush.msra.mxu0 0.0
  %2487 = vmatpush.msra.mxu0 0.0
  %2488 = vmatpush.msra.mxu0 0.0
  %2489 = vmatpush.msra.mxu0 0.0
  %2490 = vmatpush.msra.mxu0 0.0
  %2491 = vmatpush.msra.mxu0 0.0
  %2492 = vmatpush.msra.mxu0 0.0
  %2493 = vmatpush.msra.mxu0 0.0
  %2494 = vmatpush.msra.mxu0 0.0
  %2495 = vmatpush.msra.mxu0 0.0
  %2496 = vmatpush.msra.mxu0 0.0
  %2497 = vmatpush.msra.mxu0 %v997
  %2498 = vmatpush.msra.mxu0 %v996
  %2499 = vmatmul.f32.gmra.mxu0 %v2481
  %v2500 = vpop.f32.mrf.mxu0
  %v2501 = vadd.f32 0.0, %v2500
  %2502 = vdwg.mxu0
  %v2503 = vadd.f32 %v2479, %v2501
  %s2504 = scalar_lea.vmem %s63, 1
  %v2505 = vld [vmem:[%s2504] sm:$0x1]
  %s2506 = scalar_lea.vmem %s65, 1
  %v2507 = vld [vmem:[%s2506] sm:$0x1]
  %v2508 = vsel %vm1575, %v2503, 0.0
  %v2509 = vrot.slane %v2508, 4
  %v2510 = vadd.f32 %v2508, %v2509
  %v2511 = vrot.slane %v2510, 2
  %v2512 = vadd.f32 %v2510, %v2511
  %v2513 = vrot.slane %v2512, 1
  %v2514 = vadd.f32 %v2512, %v2513
  %v2515 = vmul.f32 %v2514, %v679
  %v2516 = vsub.f32 %v2503, %v2515
  %v2517 = vmul.f32 %v2516, %v2516
  %v2518 = vsel %vm1575, %v2517, 0.0
  %v2519 = vrot.slane %v2518, 4
  %v2520 = vadd.f32 %v2518, %v2519
  %v2521 = vrot.slane %v2520, 2
  %v2522 = vadd.f32 %v2520, %v2521
  %v2523 = vrot.slane %v2522, 1
  %v2524 = vadd.f32 %v2522, %v2523
  %v2525 = vmul.f32 %v2524, %v679
  %v2526 = vadd.f32 %v2525, 1e-05
  %v2527 = vrsqrt.pop %v2526
  %v2528 = vmul.f32 %v2527, %v2526
  %v2529 = vmul.f32 %v2528, %v2527
  %v2530 = vmul.f32 0.5, %v2529
  %v2531 = vsub.f32 1.5, %v2530
  %v2532 = vmul.f32 %v2527, %v2531
  %vm2533 = vweird.f32 %v2526
  %vm2534 = vweird.f32 %v2527
  %vm2535 = vmor %vm2533, %vm2534
  %v2536 = vsel %vm2535, %v2527, %v2532
  %v2537 = vmul.f32 %v2516, %v2536
  %v2539 = vperm.slane %v2505, 0
  %v2541 = vmul.f32 %v2537, %v2539
  %v2543 = vperm.slane %v2507, 0
  %v2545 = vadd.f32 %v2541, %v2543
  %v2546 = vmax.f32 %v2545, 0.0
  %v2548 = vsel %vm1575, %v2546, 0
  %2550 = vmatpush.msra.mxu0 0.0
  %2551 = vmatpush.msra.mxu0 0.0
  %2552 = vmatpush.msra.mxu0 0.0
  %2553 = vmatpush.msra.mxu0 0.0
  %2554 = vmatpush.msra.mxu0 0.0
  %2555 = vmatpush.msra.mxu0 0.0
  %2556 = vmatpush.msra.mxu0 0.0
  %2557 = vmatpush.msra.mxu0 0.0
  %2558 = vmatpush.msra.mxu0 0.0
  %2559 = vmatpush.msra.mxu0 0.0
  %2560 = vmatpush.msra.mxu0 %v1735
  %2561 = vmatpush.msra.mxu0 %v1734
  %2562 = vmatpush.msra.mxu0 %v1733
  %2563 = vmatpush.msra.mxu0 %v1732
  %2564 = vmatpush.msra.mxu0 %v1731
  %2565 = vmatpush.msra.mxu0 %v1730
  %2566 = vmatmul.f32.gmra.mxu0 %v2548
  %v2567 = vpop.f32.mrf.mxu0
  %v2568 = vadd.f32 %v1738, %v2567
  %2569 = vdwg.mxu0
  %v2570 = vmax.f32 %v2568, 0.0
  %v2572 = vsel %vm439, %v2570, 0
  %2574 = vmatpush.msra.mxu0 0.0
  %2575 = vmatpush.msra.mxu0 0.0
  %2576 = vmatpush.msra.mxu0 0.0
  %2577 = vmatpush.msra.mxu0 0.0
  %2578 = vmatpush.msra.mxu0 0.0
  %2579 = vmatpush.msra.mxu0 0.0
  %2580 = vmatpush.msra.mxu0 0.0
  %2581 = vmatpush.msra.mxu0 0.0
  %2582 = vmatpush.msra.mxu0 %v1771
  %2583 = vmatpush.msra.mxu0 %v1770
  %2584 = vmatpush.msra.mxu0 %v1769
  %2585 = vmatpush.msra.mxu0 %v1768
  %2586 = vmatpush.msra.mxu0 %v1767
  %2587 = vmatpush.msra.mxu0 %v1766
  %2588 = vmatpush.msra.mxu0 %v1765
  %2589 = vmatpush.msra.mxu0 %v1764
  %2590 = vmatmul.f32.gmra.mxu0 %v2572
  %v2591 = vpop.f32.mrf.mxu0
  %v2592 = vadd.f32 %v1774, %v2591
  %2593 = vdwg.mxu0
  %v2594 = vxor.u32 %v2592, 2147483648
  %v2595 = vmul.f32 %v2594, 1.442695
  %v2596 = vpow.pop %v2595
  %v2597 = vadd.f32 %v2596, 1.0
  %v2598 = vrcp.pop %v2597
  %v2599 = vmul.f32 %v2597, %v2598
  %v2600 = vsub.f32 1.0, %v2599
  %v2601 = vmul.f32 %v2598, %v2600
  %v2602 = vadd.f32 %v2598, %v2601
  %vm2603 = vweird.f32 %v2597
  %vm2604 = vweird.f32 %v2598
  %vm2605 = vmor %vm2603, %vm2604
  %v2606 = vsel %vm2605, %v2598, %v2602
  %v2607 = vand.u32 2147483647, %v2597
  %vm2608 = vcmp.eq.f32.partialorder %v2607, 8.507059e+37
  %v2609 = vand.u32 %v2597, 2147483648
  %v2610 = vor.u32 1.1754944e-38, %v2609
  %v2611 = vsel %vm2608, %v2610, %v2606
  %v2612 = vmul.f32 1.0, %v2611
  %vm2613 = vcmp.eq.s32.totalorder %v174, %v163
  %v2614 = vsel %vm2613, 1, 0
  %v2615 = vcvt.s32.f32 %v2614
  %v2616 = vadd.s32 %v163, 4
  %vm2617 = vcmp.eq.s32.totalorder %v174, %v2616
  %v2618 = vsel %vm2617, 1, 0
  %v2619 = vcvt.s32.f32 %v2618
  %vm2620 = vcmask 31744
  %v2622 = vsel %vm2620, %v2612, 0
  %vm2624 = vcmask 1043456
  %v2626 = vsel %vm2624, %v2619, 0
  %2628 = vmatpush.msra.mxu0 0.0
  %2629 = vmatpush.msra.mxu0 0.0
  %2630 = vmatpush.msra.mxu0 0.0
  %2631 = vmatpush.msra.mxu0 0.0
  %2632 = vmatpush.msra.mxu0 0.0
  %2633 = vmatpush.msra.mxu0 0.0
  %2634 = vmatpush.msra.mxu0 0.0
  %2635 = vmatpush.msra.mxu0 0.0
  %2636 = vmatpush.msra.mxu0 0.0
  %2637 = vmatpush.msra.mxu0 0.0
  %2638 = vmatpush.msra.mxu0 0.0
  %2639 = vmatpush.msra.mxu0 0.0
  %2640 = vmatpush.msra.mxu0 0.0
  %2641 = vmatpush.msra.mxu0 0.0
  %2642 = vmatpush.msra.mxu0 0.0
  %2643 = vmatpush.msra.mxu0 %v2626
  %2644 = vmatmul.f32.gmra.mxu0 %v2622
  %v2645 = vpop.f32.mrf.mxu0
  %v2646 = vadd.f32 0.0, %v2645
  %2647 = vdwg.mxu0
  %v2649 = vsel %vm2620, %v1817, 0
  %v2652 = vsel %vm2624, %v2615, 0
  %2654 = vmatpush.msra.mxu0 0.0
  %2655 = vmatpush.msra.mxu0 0.0
  %2656 = vmatpush.msra.mxu0 0.0
  %2657 = vmatpush.msra.mxu0 0.0
  %2658 = vmatpush.msra.mxu0 0.0
  %2659 = vmatpush.msra.mxu0 0.0
  %2660 = vmatpush.msra.mxu0 0.0
  %2661 = vmatpush.msra.mxu0 0.0
  %2662 = vmatpush.msra.mxu0 0.0
  %2663 = vmatpush.msra.mxu0 0.0
  %2664 = vmatpush.msra.mxu0 0.0
  %2665 = vmatpush.msra.mxu0 0.0
  %2666 = vmatpush.msra.mxu0 0.0
  %2667 = vmatpush.msra.mxu0 0.0
  %2668 = vmatpush.msra.mxu0 0.0
  %2669 = vmatpush.msra.mxu0 %v2652
  %2670 = vmatmul.f32.gmra.mxu0 %v2649
  %v2671 = vpop.f32.mrf.mxu0
  %v2672 = vadd.f32 %v2646, %v2671
  %2673 = vdwg.mxu0
  %v2674 = vadd.s32 %v163, 8
  %v2675 = vadd.s32 %v163, 16
  %v2676 = vadd.s32 %v163, 24
  %v2677 = vadd.s32 %v163, 32
  %v2678 = vadd.s32 %v163, 40
  %v2679 = vadd.s32 %v2674, 8
  %v2680 = vadd.s32 %v2675, 8
  %v2681 = vadd.s32 %v2676, 8
  %v2682 = vadd.s32 %v2677, 8
  %v2683 = vadd.s32 %v2678, 8
  %vm2684 = vcmp.eq.s32.totalorder %v174, %v2674
  %vm2685 = vcmp.eq.s32.totalorder %v174, %v2679
  %vm2686 = vcmp.eq.s32.totalorder %v174, %v2680
  %vm2687 = vcmp.eq.s32.totalorder %v174, %v2681
  %vm2688 = vcmp.eq.s32.totalorder %v174, %v2682
  %vm2689 = vcmp.eq.s32.totalorder %v174, %v2683
  %v2690 = vsel %vm2684, 1, 0
  %v2691 = vsel %vm2685, 1, 0
  %v2692 = vsel %vm2686, 1, 0
  %v2693 = vsel %vm2687, 1, 0
  %v2694 = vsel %vm2688, 1, 0
  %v2695 = vsel %vm2689, 1, 0
  %v2696 = vcvt.s32.f32 %v2690
  %v2697 = vcvt.s32.f32 %v2691
  %v2698 = vcvt.s32.f32 %v2692
  %v2699 = vcvt.s32.f32 %v2693
  %v2700 = vcvt.s32.f32 %v2694
  %v2701 = vcvt.s32.f32 %v2695
  %2702 = vmatpush.msra.mxu0 0.0
  %2703 = vmatpush.msra.mxu0 0.0
  %2704 = vmatpush.msra.mxu0 0.0
  %2705 = vmatpush.msra.mxu0 0.0
  %2706 = vmatpush.msra.mxu0 0.0
  %2707 = vmatpush.msra.mxu0 0.0
  %2708 = vmatpush.msra.mxu0 0.0
  %2709 = vmatpush.msra.mxu0 0.0
  %2710 = vmatpush.msra.mxu0 0.0
  %2711 = vmatpush.msra.mxu0 0.0
  %2712 = vmatpush.msra.mxu0 %v2701
  %2713 = vmatpush.msra.mxu0 %v2700
  %2714 = vmatpush.msra.mxu0 %v2699
  %2715 = vmatpush.msra.mxu0 %v2698
  %2716 = vmatpush.msra.mxu0 %v2697
  %2717 = vmatpush.msra.mxu0 %v2696
  %2718 = vmatmul.f32.gmra.mxu0 %v1741
  %v2719 = vpop.f32.mrf.mxu0
  %v2720 = vadd.f32 0.0, %v2719
  %2721 = vdwg.mxu0
  %v2722 = vadd.f32 %v2672, %v2720
  %v2723 = vadd.s32 %v163, 56
  %v2724 = vadd.s32 %v2674, 56
  %v2725 = vadd.s32 %v2675, 56
  %v2726 = vadd.s32 %v2676, 56
  %v2727 = vadd.s32 %v2677, 56
  %v2728 = vadd.s32 %v2678, 56
  %vm2729 = vcmp.eq.s32.totalorder %v174, %v2723
  %vm2730 = vcmp.eq.s32.totalorder %v174, %v2724
  %vm2731 = vcmp.eq.s32.totalorder %v174, %v2725
  %vm2732 = vcmp.eq.s32.totalorder %v174, %v2726
  %vm2733 = vcmp.eq.s32.totalorder %v174, %v2727
  %vm2734 = vcmp.eq.s32.totalorder %v174, %v2728
  %v2735 = vsel %vm2729, 1, 0
  %v2736 = vsel %vm2730, 1, 0
  %v2737 = vsel %vm2731, 1, 0
  %v2738 = vsel %vm2732, 1, 0
  %v2739 = vsel %vm2733, 1, 0
  %v2740 = vsel %vm2734, 1, 0
  %v2741 = vcvt.s32.f32 %v2735
  %v2742 = vcvt.s32.f32 %v2736
  %v2743 = vcvt.s32.f32 %v2737
  %v2744 = vcvt.s32.f32 %v2738
  %v2745 = vcvt.s32.f32 %v2739
  %v2746 = vcvt.s32.f32 %v2740
  %2747 = vmatpush.msra.mxu0 0.0
  %2748 = vmatpush.msra.mxu0 0.0
  %2749 = vmatpush.msra.mxu0 0.0
  %2750 = vmatpush.msra.mxu0 0.0
  %2751 = vmatpush.msra.mxu0 0.0
  %2752 = vmatpush.msra.mxu0 0.0
  %2753 = vmatpush.msra.mxu0 0.0
  %2754 = vmatpush.msra.mxu0 0.0
  %2755 = vmatpush.msra.mxu0 0.0
  %2756 = vmatpush.msra.mxu0 0.0
  %2757 = vmatpush.msra.mxu0 %v2746
  %2758 = vmatpush.msra.mxu0 %v2745
  %2759 = vmatpush.msra.mxu0 %v2744
  %2760 = vmatpush.msra.mxu0 %v2743
  %2761 = vmatpush.msra.mxu0 %v2742
  %2762 = vmatpush.msra.mxu0 %v2741
  %2763 = vmatmul.f32.gmra.mxu0 %v2548
  %v2764 = vpop.f32.mrf.mxu0
  %v2765 = vadd.f32 0.0, %v2764
  %2766 = vdwg.mxu0
  %v2767 = vadd.f32 %v2722, %v2765
  %2768 = vst [vmem:[%s79] sm:$0xff] %v2767
  // Predicated region
  $region158: #{traffic_representation_net.1} parent=0 // pred_check
    _
  $region159: #{traffic_representation_net.1} parent=0 // pred_check_branch
    %2770 = sbr.rel (0) target = $region161
  $region160: #{traffic_representation_net.1} parent=0 // pred_region
    _
  $region161: #{traffic_representation_net.1} parent=0 // pred_fallthru
    _
  // Predicated region
  $region162: #{traffic_representation_net.1} parent=0 // pred_check
    _
  $region163: #{traffic_representation_net.1} parent=0 // pred_check_branch
    %2772 = sbr.rel (0) target = $region165
  $region164: #{traffic_representation_net.1} parent=0 // pred_region
    _
  $region165: #{traffic_representation_net.1} parent=0 // pred_fallthru
    _

</llo_original>
